<compile_context>
chip_gen: v5e
topology: v5e:2x2
jax: 0.10.0
libtpu: 0.0.40
codegen_flags: <defaults>
</compile_context>

<pallas_src>
import functools

import jax
import jax.numpy as jnp
from jax import lax
from jax.experimental import pallas as pl
from jax.experimental.pallas import tpu as pltpu


CP = 8       # channel padding (sublane granule); in/out planes must be <= CP
GUARD = 128  # lane guard on each side of the in-kernel shift buffer


# ------------------------------ Pallas kernel ------------------------------ #

def _down_old_kernel(x_ref,
                     w1a_ref, b1a_ref, w1b_ref, b1b_ref, w1d_ref, b1d_ref,
                     w2a_ref, b2a_ref, w2b_ref, b2b_ref, w2d_ref, b2d_ref,
                     m16_ref, m8_ref, sel_ref,
                     o_ref,
                     sbuf_ref, pat16_ref, pat8_ref, cat_ref,
                     *, B, H, W):
    """Fused Down_old forward.

    Activations are (CP, P) f32 with P = pixels (b, h, w) row-major on lanes.
    Weights are BN-folded, transposed:  3x3 -> (CP, 9*CP), 1x1 -> (CP, CP).
    Biases are the BN shifts, shape (CP, 1).  m*_ref are (9, P) tap-validity
    masks; sel_ref is the (P1, P2) even-pixel selection matrix for stride 2.
    """
    P1 = B * H * W
    H2, W2 = H // 2, W // 2
    P2 = B * H2 * W2

    # Shift buffer must hold finite values before masked reads (stale VMEM
    # bits could be NaN); zero it once.
    sbuf_ref[...] = jnp.zeros((CP, P1 + 2 * GUARD), jnp.float32)

    def conv3x3(x_val, w_ref, m_ref, pat_ref, w_img, p_pix):
        """3x3 conv (pad=1, stride=1), BN scale folded into w; NO bias/ReLU."""
        sbuf_ref[:, GUARD:GUARD + p_pix] = x_val
        for t in range(9):
            dy, dx = t // 3, t % 3
            off = (dy - 1) * w_img + (dx - 1)
            start = GUARD + off
            xs = sbuf_ref[:, start:start + p_pix]          # tap-shifted view
            pat_ref[CP * t:CP * (t + 1), :] = xs * m_ref[t:t + 1, :]
        return jnp.dot(w_ref[...], pat_ref[...],
                       preferred_element_type=jnp.float32)

    x = x_ref[...]                                         # (CP, P1)

    # ---------------- block 1: BasicBlock(in->out, stride 1) ----------------
    h1 = jnp.maximum(
        conv3x3(x, w1a_ref, m16_ref, pat16_ref, W, P1) + b1a_ref[...], 0.0)
    main1 = conv3x3(h1, w1b_ref, m16_ref, pat16_ref, W, P1) + b1b_ref[...]
    idn1 = jnp.dot(w1d_ref[...], x,
                   preferred_element_type=jnp.float32) + b1d_ref[...]
    out1 = jnp.maximum(main1 + idn1, 0.0)                  # (CP, P1)

    # ---------------- block 2: BasicBlock(out->out, stride 2) ---------------
    # Both stride-2 paths are computed at full resolution (bias deferred) and
    # subsampled together with a single 0/1 selection matmul; the per-channel
    # BN shifts commute with the selection (each column has exactly one 1).
    h2_full = conv3x3(out1, w2a_ref, m16_ref, pat16_ref, W, P1)   # (CP, P1)
    idn_full = jnp.dot(w2d_ref[...], out1,
                       preferred_element_type=jnp.float32)        # (CP, P1)
    cat_ref[:CP, :] = h2_full
    cat_ref[CP:, :] = idn_full
    sub = jnp.dot(cat_ref[...], sel_ref[...],
                  preferred_element_type=jnp.float32)             # (2*CP, P2)
    h2 = jnp.maximum(sub[:CP, :] + b2a_ref[...], 0.0)
    idn2 = sub[CP:, :] + b2d_ref[...]
    # conv2 (3x3, stride 1) at the downsampled resolution.
    main2 = conv3x3(h2, w2b_ref, m8_ref, pat8_ref, W2, P2) + b2b_ref[...]
    o_ref[...] = jnp.maximum(main2 + idn2, 0.0)            # (CP, P2)


# --------------------------- wrapper-side folding --------------------------- #

def _fold_w3x3(w_hwio, scale):
    """(3,3,Cin,Cout) HWIO weight + BN scale -> (CP, 9*CP) folded, padded."""
    kh, kw, cin, cout = w_hwio.shape
    w = jnp.zeros((kh, kw, CP, CP), jnp.float32).at[:, :, :cin, :cout].set(w_hwio)
    w = jnp.transpose(w, (3, 0, 1, 2)).reshape(CP, kh * kw * CP)
    s = jnp.zeros((CP,), jnp.float32).at[:cout].set(scale.reshape(-1))
    return w * s[:, None]


def _fold_w1x1(w_io, scale):
    """(Cin,Cout) 1x1 weight + BN scale -> (CP, CP) folded, padded."""
    cin, cout = w_io.shape
    w = jnp.zeros((CP, CP), jnp.float32).at[:cout, :cin].set(w_io.T)
    s = jnp.zeros((CP,), jnp.float32).at[:cout].set(scale.reshape(-1))
    return w * s[:, None]


def _pad_bias(shift):
    c = shift.reshape(-1).shape[0]
    return jnp.zeros((CP, 1), jnp.float32).at[:c, 0].set(shift.reshape(-1))


def _tap_masks(B, H, W):
    """(9, B*H*W) validity mask per 3x3 tap (zero where the tap hits padding)."""
    hh, ww = jnp.arange(H), jnp.arange(W)
    rows = []
    for dy in range(3):
        for dx in range(3):
            mh = ((hh + dy - 1 >= 0) & (hh + dy - 1 < H)).astype(jnp.float32)
            mw = ((ww + dx - 1 >= 0) & (ww + dx - 1 < W)).astype(jnp.float32)
            rows.append(jnp.tile((mh[:, None] * mw[None, :]).reshape(-1), B))
    return jnp.stack(rows, axis=0)


def _subsample_matrix(B, H, W):
    """(B*H*W, B*(H//2)*(W//2)) 0/1 matrix selecting even (h, w) pixels."""
    Ho, Wo = H // 2, W // 2
    Pi, Po = B * H * W, B * Ho * Wo
    b = jnp.arange(B).reshape(B, 1, 1)
    ho = jnp.arange(Ho).reshape(1, Ho, 1)
    wo = jnp.arange(Wo).reshape(1, 1, Wo)
    src = (b * (H * W) + (2 * ho) * W + 2 * wo).reshape(Po)
    return jnp.zeros((Pi, Po), jnp.float32).at[src, jnp.arange(Po)].set(1.0)


def down_old_forward(x_nchw, params_conv, params_down):
    B, cin, H, W = x_nchw.shape
    H2, W2 = H // 2, W // 2
    P1, P2 = B * H * W, B * H2 * W2

    # layout plumbing: NCHW -> channel-padded, transposed (CP, P) slab
    x_cf = jnp.transpose(x_nchw, (1, 0, 2, 3)).reshape(cin, P1)
    x_t = jnp.zeros((CP, P1), jnp.float32).at[:cin, :].set(x_cf)

    pc, pd = params_conv, params_down
    w1a, b1a = _fold_w3x3(pc["w1"], pc["s1"]), _pad_bias(pc["b1"])
    w1b, b1b = _fold_w3x3(pc["w2"], pc["s2"]), _pad_bias(pc["b2"])
    w1d, b1d = _fold_w1x1(pc["wd"], pc["sd"]), _pad_bias(pc["bd"])
    w2a, b2a = _fold_w3x3(pd["w1"], pd["s1"]), _pad_bias(pd["b1"])
    w2b, b2b = _fold_w3x3(pd["w2"], pd["s2"]), _pad_bias(pd["b2"])
    w2d, b2d = _fold_w1x1(pd["wd"], pd["sd"]), _pad_bias(pd["bd"])

    m16 = _tap_masks(B, H, W)
    m8 = _tap_masks(B, H2, W2)
    sel = _subsample_matrix(B, H, W)

    out_t = pl.pallas_call(
        functools.partial(_down_old_kernel, B=B, H=H, W=W),
        out_shape=jax.ShapeDtypeStruct((CP, P2), jnp.float32),
        scratch_shapes=[
            pltpu.VMEM((CP, P1 + 2 * GUARD), jnp.float32),  # shift buffer
            pltpu.VMEM((9 * CP, P1), jnp.float32),          # patch slab 16x16
            pltpu.VMEM((9 * CP, P2), jnp.float32),          # patch slab 8x8
            pltpu.VMEM((2 * CP, P1), jnp.float32),          # fused subsample src
        ],
    )(x_t, w1a, b1a, w1b, b1b, w1d, b1d,
      w2a, b2a, w2b, b2b, w2d, b2d, m16, m8, sel)

    cout = pc["w1"].shape[-1]
    out = out_t[:cout].reshape(cout, B, H2, W2)
    return jnp.transpose(out, (1, 0, 2, 3))                 # -> NCHW


# ------------------------- parameter initialization ------------------------ #

def _init_bn_fold(key, c, eps=1e-5):
    k1, k2, k3, k4 = jax.random.split(key, 4)
    gamma = 1.0 + 0.1 * jax.random.normal(k1, (c,), jnp.float32)
    beta = 0.1 * jax.random.normal(k2, (c,), jnp.float32)
    rmean = 0.1 * jax.random.normal(k3, (c,), jnp.float32)
    rvar = 1.0 + 0.2 * jax.random.uniform(k4, (c,), jnp.float32)
    scale = gamma * lax.rsqrt(rvar + eps)
    shift = beta - rmean * scale
    return scale.reshape(1, c), shift.reshape(1, c)


def init_basic_block(key, cin, cout):
    ks = jax.random.split(key, 6)
    w1 = 0.1 * jax.random.normal(ks[0], (3, 3, cin, cout), jnp.float32)   # HWIO
    w2 = 0.1 * jax.random.normal(ks[1], (3, 3, cout, cout), jnp.float32)  # HWIO
    wd = 0.1 * jax.random.normal(ks[2], (cin, cout), jnp.float32)         # 1x1
    s1, b1 = _init_bn_fold(ks[3], cout)
    s2, b2 = _init_bn_fold(ks[4], cout)
    sd, bd = _init_bn_fold(ks[5], cout)
    return dict(w1=w1, s1=s1, b1=b1, w2=w2, s2=s2, b2=b2, wd=wd, sd=sd, bd=bd)


# --------------------------- pure-JAX reference ----------------------------- #

def _ref_block(x, prm, stride):
    def bn(y, s, b):
        return y * s.reshape(1, 1, 1, -1) + b.reshape(1, 1, 1, -1)

    def conv3(x_, w, st):
        return lax.conv_general_dilated(x_, w, (st, st), ((1, 1), (1, 1)),
                                        dimension_numbers=("NHWC", "HWIO", "NHWC"))

    def conv1(x_, w, st):
        return lax.conv_general_dilated(x_, w.reshape(1, 1, *w.shape), (st, st),
                                        "VALID",
                                        dimension_numbers=("NHWC", "HWIO", "NHWC"))

    h = jax.nn.relu(bn(conv3(x, prm["w1"], stride), prm["s1"], prm["b1"]))
    h = bn(conv3(h, prm["w2"], 1), prm["s2"], prm["b2"])
    idn = bn(conv1(x, prm["wd"], stride), prm["sd"], prm["bd"])
    return jax.nn.relu(h + idn)


def ref_forward(x_nchw, params_conv, params_down):
    x = jnp.transpose(x_nchw, (0, 2, 3, 1))
    out = _ref_block(x, params_conv, 1)
    out = _ref_block(out, params_down, 2)
    return jnp.transpose(out, (0, 3, 1, 2))


# --------------------------------- main ------------------------------------ #

if __name__ == "__main__":
    in_planes, out_planes, num_blocks, stride = 4, 8, 2, 2
    B, H, W = 2, 16, 16

    key = jax.random.PRNGKey(0)
    kx, kA, kB = jax.random.split(key, 3)
    x = jax.random.normal(kx, (B, in_planes, H, W), jnp.float32)  # NCHW

    params_conv = init_basic_block(kA, in_planes, out_planes)   # self.conv
    params_down = init_basic_block(kB, out_planes, out_planes)  # self.down

    fwd = jax.jit(down_old_forward)
    y = jax.block_until_ready(fwd(x, params_conv, params_down))

    assert y.shape == (B, out_planes, H // 2, W // 2), y.shape

    y_ref = jax.block_until_ready(ref_forward(x, params_conv, params_down))
    max_err = float(jnp.max(jnp.abs(y - y_ref)))
    if max_err < 1e-3:
        print("KERNEL_OK")
    else:
        print(f"MISMATCH max_err={max_err}")
</pallas_src>

<mosaic_0001>
module attributes {stable_mosaic.version = 11 : i64} {
  func.func @_down_old_kernel(%arg0: memref<8x512xf32, #tpu.memory_space<vmem>>, %arg1: memref<8x72xf32, #tpu.memory_space<vmem>>, %arg2: memref<8x1xf32, #tpu.memory_space<vmem>>, %arg3: memref<8x72xf32, #tpu.memory_space<vmem>>, %arg4: memref<8x1xf32, #tpu.memory_space<vmem>>, %arg5: memref<8x8xf32, #tpu.memory_space<vmem>>, %arg6: memref<8x1xf32, #tpu.memory_space<vmem>>, %arg7: memref<8x72xf32, #tpu.memory_space<vmem>>, %arg8: memref<8x1xf32, #tpu.memory_space<vmem>>, %arg9: memref<8x72xf32, #tpu.memory_space<vmem>>, %arg10: memref<8x1xf32, #tpu.memory_space<vmem>>, %arg11: memref<8x8xf32, #tpu.memory_space<vmem>>, %arg12: memref<8x1xf32, #tpu.memory_space<vmem>>, %arg13: memref<9x512xf32, #tpu.memory_space<vmem>>, %arg14: memref<9x128xf32, #tpu.memory_space<vmem>>, %arg15: memref<512x128xf32, #tpu.memory_space<vmem>>, %arg16: memref<8x128xf32, #tpu.memory_space<vmem>>, %arg17: memref<8x768xf32, #tpu.memory_space<vmem>>, %arg18: memref<72x512xf32, #tpu.memory_space<vmem>>, %arg19: memref<72x128xf32, #tpu.memory_space<vmem>>, %arg20: memref<16x512xf32, #tpu.memory_space<vmem>>) attributes {dimension_semantics = [], scalar_prefetch = 0 : i64, scratch_operands = 4 : i64, tpu.core_type = #tpu.core_type<tc>} {
    %cst = arith.constant 0.000000e+00 : f32
    %0 = vector.broadcast %cst : f32 to vector<8x768xf32>
    %c0 = arith.constant 0 : index
    %c0_0 = arith.constant 0 : index
    %1 = vector.load %arg17[%c0, %c0_0] : memref<8x768xf32, #tpu.memory_space<vmem>>, vector<8x768xf32>
    tpu.vector_store %arg17[%c0, %c0_0], %0 {strides = array<i32>} : memref<8x768xf32, #tpu.memory_space<vmem>>, vector<8x768xf32>,
    %c0_1 = arith.constant 0 : index
    %c0_2 = arith.constant 0 : index
    %2 = vector.load %arg0[%c0_1, %c0_2] : memref<8x512xf32, #tpu.memory_space<vmem>>, vector<8x512xf32>
    %c0_3 = arith.constant 0 : index
    %c128 = arith.constant 128 : index
    %3 = vector.load %arg17[%c0_3, %c128] : memref<8x768xf32, #tpu.memory_space<vmem>>, vector<8x512xf32>
    tpu.vector_store %arg17[%c0_3, %c128], %2 {strides = array<i32>} : memref<8x768xf32, #tpu.memory_space<vmem>>, vector<8x512xf32>,
    %c0_4 = arith.constant 0 : index
    %c111 = arith.constant 111 : index
    %4 = vector.load %arg17[%c0_4, %c111] : memref<8x768xf32, #tpu.memory_space<vmem>>, vector<8x512xf32>
    %c0_5 = arith.constant 0 : index
    %c0_6 = arith.constant 0 : index
    %5 = vector.load %arg13[%c0_5, %c0_6] : memref<9x512xf32, #tpu.memory_space<vmem>>, vector<1x512xf32>
    %6 = vector.broadcast %5 : vector<1x512xf32> to vector<8x512xf32>
    %7 = arith.mulf %4, %6 : vector<8x512xf32>
    %c0_7 = arith.constant 0 : index
    %c0_8 = arith.constant 0 : index
    %8 = vector.load %arg18[%c0_7, %c0_8] : memref<72x512xf32, #tpu.memory_space<vmem>>, vector<8x512xf32>
    tpu.vector_store %arg18[%c0_7, %c0_8], %7 {strides = array<i32>} : memref<72x512xf32, #tpu.memory_space<vmem>>, vector<8x512xf32>,
    %c0_9 = arith.constant 0 : index
    %c112 = arith.constant 112 : index
    %9 = vector.load %arg17[%c0_9, %c112] : memref<8x768xf32, #tpu.memory_space<vmem>>, vector<8x512xf32>
    %c1 = arith.constant 1 : index
    %c0_10 = arith.constant 0 : index
    %10 = vector.load %arg13[%c1, %c0_10] : memref<9x512xf32, #tpu.memory_space<vmem>>, vector<1x512xf32>
    %11 = vector.broadcast %10 : vector<1x512xf32> to vector<8x512xf32>
    %12 = arith.mulf %9, %11 : vector<8x512xf32>
    %c8 = arith.constant 8 : index
    %c0_11 = arith.constant 0 : index
    %13 = vector.load %arg18[%c8, %c0_11] : memref<72x512xf32, #tpu.memory_space<vmem>>, vector<8x512xf32>
    tpu.vector_store %arg18[%c8, %c0_11], %12 {strides = array<i32>} : memref<72x512xf32, #tpu.memory_space<vmem>>, vector<8x512xf32>,
    %c0_12 = arith.constant 0 : index
    %c113 = arith.constant 113 : index
    %14 = vector.load %arg17[%c0_12, %c113] : memref<8x768xf32, #tpu.memory_space<vmem>>, vector<8x512xf32>
    %c2 = arith.constant 2 : index
    %c0_13 = arith.constant 0 : index
    %15 = vector.load %arg13[%c2, %c0_13] : memref<9x512xf32, #tpu.memory_space<vmem>>, vector<1x512xf32>
    %16 = vector.broadcast %15 : vector<1x512xf32> to vector<8x512xf32>
    %17 = arith.mulf %14, %16 : vector<8x512xf32>
    %c16 = arith.constant 16 : index
    %c0_14 = arith.constant 0 : index
    %18 = vector.load %arg18[%c16, %c0_14] : memref<72x512xf32, #tpu.memory_space<vmem>>, vector<8x512xf32>
    tpu.vector_store %arg18[%c16, %c0_14], %17 {strides = array<i32>} : memref<72x512xf32, #tpu.memory_space<vmem>>, vector<8x512xf32>,
    %c0_15 = arith.constant 0 : index
    %c127 = arith.constant 127 : index
    %19 = vector.load %arg17[%c0_15, %c127] : memref<8x768xf32, #tpu.memory_space<vmem>>, vector<8x512xf32>
    %c3 = arith.constant 3 : index
    %c0_16 = arith.constant 0 : index
    %20 = vector.load %arg13[%c3, %c0_16] : memref<9x512xf32, #tpu.memory_space<vmem>>, vector<1x512xf32>
    %21 = vector.broadcast %20 : vector<1x512xf32> to vector<8x512xf32>
    %22 = arith.mulf %19, %21 : vector<8x512xf32>
    %c24 = arith.constant 24 : index
    %c0_17 = arith.constant 0 : index
    %23 = vector.load %arg18[%c24, %c0_17] : memref<72x512xf32, #tpu.memory_space<vmem>>, vector<8x512xf32>
    tpu.vector_store %arg18[%c24, %c0_17], %22 {strides = array<i32>} : memref<72x512xf32, #tpu.memory_space<vmem>>, vector<8x512xf32>,
    %c0_18 = arith.constant 0 : index
    %c128_19 = arith.constant 128 : index
    %24 = vector.load %arg17[%c0_18, %c128_19] : memref<8x768xf32, #tpu.memory_space<vmem>>, vector<8x512xf32>
    %c4 = arith.constant 4 : index
    %c0_20 = arith.constant 0 : index
    %25 = vector.load %arg13[%c4, %c0_20] : memref<9x512xf32, #tpu.memory_space<vmem>>, vector<1x512xf32>
    %26 = vector.broadcast %25 : vector<1x512xf32> to vector<8x512xf32>
    %27 = arith.mulf %24, %26 : vector<8x512xf32>
    %c32 = arith.constant 32 : index
    %c0_21 = arith.constant 0 : index
    %28 = vector.load %arg18[%c32, %c0_21] : memref<72x512xf32, #tpu.memory_space<vmem>>, vector<8x512xf32>
    tpu.vector_store %arg18[%c32, %c0_21], %27 {strides = array<i32>} : memref<72x512xf32, #tpu.memory_space<vmem>>, vector<8x512xf32>,
    %c0_22 = arith.constant 0 : index
    %c129 = arith.constant 129 : index
    %29 = vector.load %arg17[%c0_22, %c129] : memref<8x768xf32, #tpu.memory_space<vmem>>, vector<8x512xf32>
    %c5 = arith.constant 5 : index
    %c0_23 = arith.constant 0 : index
    %30 = vector.load %arg13[%c5, %c0_23] : memref<9x512xf32, #tpu.memory_space<vmem>>, vector<1x512xf32>
    %31 = vector.broadcast %30 : vector<1x512xf32> to vector<8x512xf32>
    %32 = arith.mulf %29, %31 : vector<8x512xf32>
    %c40 = arith.constant 40 : index
    %c0_24 = arith.constant 0 : index
    %33 = vector.load %arg18[%c40, %c0_24] : memref<72x512xf32, #tpu.memory_space<vmem>>, vector<8x512xf32>
    tpu.vector_store %arg18[%c40, %c0_24], %32 {strides = array<i32>} : memref<72x512xf32, #tpu.memory_space<vmem>>, vector<8x512xf32>,
    %c0_25 = arith.constant 0 : index
    %c143 = arith.constant 143 : index
    %34 = vector.load %arg17[%c0_25, %c143] : memref<8x768xf32, #tpu.memory_space<vmem>>, vector<8x512xf32>
    %c6 = arith.constant 6 : index
    %c0_26 = arith.constant 0 : index
    %35 = vector.load %arg13[%c6, %c0_26] : memref<9x512xf32, #tpu.memory_space<vmem>>, vector<1x512xf32>
    %36 = vector.broadcast %35 : vector<1x512xf32> to vector<8x512xf32>
    %37 = arith.mulf %34, %36 : vector<8x512xf32>
    %c48 = arith.constant 48 : index
    %c0_27 = arith.constant 0 : index
    %38 = vector.load %arg18[%c48, %c0_27] : memref<72x512xf32, #tpu.memory_space<vmem>>, vector<8x512xf32>
    tpu.vector_store %arg18[%c48, %c0_27], %37 {strides = array<i32>} : memref<72x512xf32, #tpu.memory_space<vmem>>, vector<8x512xf32>,
    %c0_28 = arith.constant 0 : index
    %c144 = arith.constant 144 : index
    %39 = vector.load %arg17[%c0_28, %c144] : memref<8x768xf32, #tpu.memory_space<vmem>>, vector<8x512xf32>
    %c7 = arith.constant 7 : index
    %c0_29 = arith.constant 0 : index
    %40 = vector.load %arg13[%c7, %c0_29] : memref<9x512xf32, #tpu.memory_space<vmem>>, vector<1x512xf32>
    %41 = vector.broadcast %40 : vector<1x512xf32> to vector<8x512xf32>
    %42 = arith.mulf %39, %41 : vector<8x512xf32>
    %c56 = arith.constant 56 : index
    %c0_30 = arith.constant 0 : index
    %43 = vector.load %arg18[%c56, %c0_30] : memref<72x512xf32, #tpu.memory_space<vmem>>, vector<8x512xf32>
    tpu.vector_store %arg18[%c56, %c0_30], %42 {strides = array<i32>} : memref<72x512xf32, #tpu.memory_space<vmem>>, vector<8x512xf32>,
    %c0_31 = arith.constant 0 : index
    %c145 = arith.constant 145 : index
    %44 = vector.load %arg17[%c0_31, %c145] : memref<8x768xf32, #tpu.memory_space<vmem>>, vector<8x512xf32>
    %c8_32 = arith.constant 8 : index
    %c0_33 = arith.constant 0 : index
    %45 = vector.load %arg13[%c8_32, %c0_33] : memref<9x512xf32, #tpu.memory_space<vmem>>, vector<1x512xf32>
    %46 = vector.broadcast %45 : vector<1x512xf32> to vector<8x512xf32>
    %47 = arith.mulf %44, %46 : vector<8x512xf32>
    %c64 = arith.constant 64 : index
    %c0_34 = arith.constant 0 : index
    %48 = vector.load %arg18[%c64, %c0_34] : memref<72x512xf32, #tpu.memory_space<vmem>>, vector<8x512xf32>
    tpu.vector_store %arg18[%c64, %c0_34], %47 {strides = array<i32>} : memref<72x512xf32, #tpu.memory_space<vmem>>, vector<8x512xf32>,
    %c0_35 = arith.constant 0 : index
    %c0_36 = arith.constant 0 : index
    %49 = vector.load %arg1[%c0_35, %c0_36] : memref<8x72xf32, #tpu.memory_space<vmem>>, vector<8x72xf32>
    %c0_37 = arith.constant 0 : index
    %c0_38 = arith.constant 0 : index
    %50 = vector.load %arg18[%c0_37, %c0_38] : memref<72x512xf32, #tpu.memory_space<vmem>>, vector<72x512xf32>
    %cst_39 = arith.constant dense<0.000000e+00> : vector<8x512xf32>
    %51 = tpu.matmul %49, %50, %cst_39 {dimension_numbers = #tpu.dot_dimension_numbers<[1], [0], [0], [1], [0, 0, 1, 1], [], []>} : vector<8x72xf32>, vector<72x512xf32>, vector<8x512xf32> -> vector<8x512xf32>
    %c0_40 = arith.constant 0 : index
    %c0_41 = arith.constant 0 : index
    %52 = vector.load %arg2[%c0_40, %c0_41] : memref<8x1xf32, #tpu.memory_space<vmem>>, vector<8x1xf32>
    %53 = vector.broadcast %52 : vector<8x1xf32> to vector<8x512xf32>
    %54 = arith.addf %51, %53 : vector<8x512xf32>
    %cst_42 = arith.constant 0.000000e+00 : f32
    %55 = vector.broadcast %cst_42 : f32 to vector<8x512xf32>
    %56 = arith.maximumf %54, %55 : vector<8x512xf32>
    %c0_43 = arith.constant 0 : index
    %c128_44 = arith.constant 128 : index
    %57 = vector.load %arg17[%c0_43, %c128_44] : memref<8x768xf32, #tpu.memory_space<vmem>>, vector<8x512xf32>
    tpu.vector_store %arg17[%c0_43, %c128_44], %56 {strides = array<i32>} : memref<8x768xf32, #tpu.memory_space<vmem>>, vector<8x512xf32>,
    %c0_45 = arith.constant 0 : index
    %c111_46 = arith.constant 111 : index
    %58 = vector.load %arg17[%c0_45, %c111_46] : memref<8x768xf32, #tpu.memory_space<vmem>>, vector<8x512xf32>
    %c0_47 = arith.constant 0 : index
    %c0_48 = arith.constant 0 : index
    %59 = vector.load %arg13[%c0_47, %c0_48] : memref<9x512xf32, #tpu.memory_space<vmem>>, vector<1x512xf32>
    %60 = vector.broadcast %59 : vector<1x512xf32> to vector<8x512xf32>
    %61 = arith.mulf %58, %60 : vector<8x512xf32>
    %c0_49 = arith.constant 0 : index
    %c0_50 = arith.constant 0 : index
    %62 = vector.load %arg18[%c0_49, %c0_50] : memref<72x512xf32, #tpu.memory_space<vmem>>, vector<8x512xf32>
    tpu.vector_store %arg18[%c0_49, %c0_50], %61 {strides = array<i32>} : memref<72x512xf32, #tpu.memory_space<vmem>>, vector<8x512xf32>,
    %c0_51 = arith.constant 0 : index
    %c112_52 = arith.constant 112 : index
    %63 = vector.load %arg17[%c0_51, %c112_52] : memref<8x768xf32, #tpu.memory_space<vmem>>, vector<8x512xf32>
    %c1_53 = arith.constant 1 : index
    %c0_54 = arith.constant 0 : index
    %64 = vector.load %arg13[%c1_53, %c0_54] : memref<9x512xf32, #tpu.memory_space<vmem>>, vector<1x512xf32>
    %65 = vector.broadcast %64 : vector<1x512xf32> to vector<8x512xf32>
    %66 = arith.mulf %63, %65 : vector<8x512xf32>
    %c8_55 = arith.constant 8 : index
    %c0_56 = arith.constant 0 : index
    %67 = vector.load %arg18[%c8_55, %c0_56] : memref<72x512xf32, #tpu.memory_space<vmem>>, vector<8x512xf32>
    tpu.vector_store %arg18[%c8_55, %c0_56], %66 {strides = array<i32>} : memref<72x512xf32, #tpu.memory_space<vmem>>, vector<8x512xf32>,
    %c0_57 = arith.constant 0 : index
    %c113_58 = arith.constant 113 : index
    %68 = vector.load %arg17[%c0_57, %c113_58] : memref<8x768xf32, #tpu.memory_space<vmem>>, vector<8x512xf32>
    %c2_59 = arith.constant 2 : index
    %c0_60 = arith.constant 0 : index
    %69 = vector.load %arg13[%c2_59, %c0_60] : memref<9x512xf32, #tpu.memory_space<vmem>>, vector<1x512xf32>
    %70 = vector.broadcast %69 : vector<1x512xf32> to vector<8x512xf32>
    %71 = arith.mulf %68, %70 : vector<8x512xf32>
    %c16_61 = arith.constant 16 : index
    %c0_62 = arith.constant 0 : index
    %72 = vector.load %arg18[%c16_61, %c0_62] : memref<72x512xf32, #tpu.memory_space<vmem>>, vector<8x512xf32>
    tpu.vector_store %arg18[%c16_61, %c0_62], %71 {strides = array<i32>} : memref<72x512xf32, #tpu.memory_space<vmem>>, vector<8x512xf32>,
    %c0_63 = arith.constant 0 : index
    %c127_64 = arith.constant 127 : index
    %73 = vector.load %arg17[%c0_63, %c127_64] : memref<8x768xf32, #tpu.memory_space<vmem>>, vector<8x512xf32>
    %c3_65 = arith.constant 3 : index
    %c0_66 = arith.constant 0 : index
    %74 = vector.load %arg13[%c3_65, %c0_66] : memref<9x512xf32, #tpu.memory_space<vmem>>, vector<1x512xf32>
    %75 = vector.broadcast %74 : vector<1x512xf32> to vector<8x512xf32>
    %76 = arith.mulf %73, %75 : vector<8x512xf32>
    %c24_67 = arith.constant 24 : index
    %c0_68 = arith.constant 0 : index
    %77 = vector.load %arg18[%c24_67, %c0_68] : memref<72x512xf32, #tpu.memory_space<vmem>>, vector<8x512xf32>
    tpu.vector_store %arg18[%c24_67, %c0_68], %76 {strides = array<i32>} : memref<72x512xf32, #tpu.memory_space<vmem>>, vector<8x512xf32>,
    %c0_69 = arith.constant 0 : index
    %c128_70 = arith.constant 128 : index
    %78 = vector.load %arg17[%c0_69, %c128_70] : memref<8x768xf32, #tpu.memory_space<vmem>>, vector<8x512xf32>
    %c4_71 = arith.constant 4 : index
    %c0_72 = arith.constant 0 : index
    %79 = vector.load %arg13[%c4_71, %c0_72] : memref<9x512xf32, #tpu.memory_space<vmem>>, vector<1x512xf32>
    %80 = vector.broadcast %79 : vector<1x512xf32> to vector<8x512xf32>
    %81 = arith.mulf %78, %80 : vector<8x512xf32>
    %c32_73 = arith.constant 32 : index
    %c0_74 = arith.constant 0 : index
    %82 = vector.load %arg18[%c32_73, %c0_74] : memref<72x512xf32, #tpu.memory_space<vmem>>, vector<8x512xf32>
    tpu.vector_store %arg18[%c32_73, %c0_74], %81 {strides = array<i32>} : memref<72x512xf32, #tpu.memory_space<vmem>>, vector<8x512xf32>,
    %c0_75 = arith.constant 0 : index
    %c129_76 = arith.constant 129 : index
    %83 = vector.load %arg17[%c0_75, %c129_76] : memref<8x768xf32, #tpu.memory_space<vmem>>, vector<8x512xf32>
    %c5_77 = arith.constant 5 : index
    %c0_78 = arith.constant 0 : index
    %84 = vector.load %arg13[%c5_77, %c0_78] : memref<9x512xf32, #tpu.memory_space<vmem>>, vector<1x512xf32>
    %85 = vector.broadcast %84 : vector<1x512xf32> to vector<8x512xf32>
    %86 = arith.mulf %83, %85 : vector<8x512xf32>
    %c40_79 = arith.constant 40 : index
    %c0_80 = arith.constant 0 : index
    %87 = vector.load %arg18[%c40_79, %c0_80] : memref<72x512xf32, #tpu.memory_space<vmem>>, vector<8x512xf32>
    tpu.vector_store %arg18[%c40_79, %c0_80], %86 {strides = array<i32>} : memref<72x512xf32, #tpu.memory_space<vmem>>, vector<8x512xf32>,
    %c0_81 = arith.constant 0 : index
    %c143_82 = arith.constant 143 : index
    %88 = vector.load %arg17[%c0_81, %c143_82] : memref<8x768xf32, #tpu.memory_space<vmem>>, vector<8x512xf32>
    %c6_83 = arith.constant 6 : index
    %c0_84 = arith.constant 0 : index
    %89 = vector.load %arg13[%c6_83, %c0_84] : memref<9x512xf32, #tpu.memory_space<vmem>>, vector<1x512xf32>
    %90 = vector.broadcast %89 : vector<1x512xf32> to vector<8x512xf32>
    %91 = arith.mulf %88, %90 : vector<8x512xf32>
    %c48_85 = arith.constant 48 : index
    %c0_86 = arith.constant 0 : index
    %92 = vector.load %arg18[%c48_85, %c0_86] : memref<72x512xf32, #tpu.memory_space<vmem>>, vector<8x512xf32>
    tpu.vector_store %arg18[%c48_85, %c0_86], %91 {strides = array<i32>} : memref<72x512xf32, #tpu.memory_space<vmem>>, vector<8x512xf32>,
    %c0_87 = arith.constant 0 : index
    %c144_88 = arith.constant 144 : index
    %93 = vector.load %arg17[%c0_87, %c144_88] : memref<8x768xf32, #tpu.memory_space<vmem>>, vector<8x512xf32>
    %c7_89 = arith.constant 7 : index
    %c0_90 = arith.constant 0 : index
    %94 = vector.load %arg13[%c7_89, %c0_90] : memref<9x512xf32, #tpu.memory_space<vmem>>, vector<1x512xf32>
    %95 = vector.broadcast %94 : vector<1x512xf32> to vector<8x512xf32>
    %96 = arith.mulf %93, %95 : vector<8x512xf32>
    %c56_91 = arith.constant 56 : index
    %c0_92 = arith.constant 0 : index
    %97 = vector.load %arg18[%c56_91, %c0_92] : memref<72x512xf32, #tpu.memory_space<vmem>>, vector<8x512xf32>
    tpu.vector_store %arg18[%c56_91, %c0_92], %96 {strides = array<i32>} : memref<72x512xf32, #tpu.memory_space<vmem>>, vector<8x512xf32>,
    %c0_93 = arith.constant 0 : index
    %c145_94 = arith.constant 145 : index
    %98 = vector.load %arg17[%c0_93, %c145_94] : memref<8x768xf32, #tpu.memory_space<vmem>>, vector<8x512xf32>
    %c8_95 = arith.constant 8 : index
    %c0_96 = arith.constant 0 : index
    %99 = vector.load %arg13[%c8_95, %c0_96] : memref<9x512xf32, #tpu.memory_space<vmem>>, vector<1x512xf32>
    %100 = vector.broadcast %99 : vector<1x512xf32> to vector<8x512xf32>
    %101 = arith.mulf %98, %100 : vector<8x512xf32>
    %c64_97 = arith.constant 64 : index
    %c0_98 = arith.constant 0 : index
    %102 = vector.load %arg18[%c64_97, %c0_98] : memref<72x512xf32, #tpu.memory_space<vmem>>, vector<8x512xf32>
    tpu.vector_store %arg18[%c64_97, %c0_98], %101 {strides = array<i32>} : memref<72x512xf32, #tpu.memory_space<vmem>>, vector<8x512xf32>,
    %c0_99 = arith.constant 0 : index
    %c0_100 = arith.constant 0 : index
    %103 = vector.load %arg3[%c0_99, %c0_100] : memref<8x72xf32, #tpu.memory_space<vmem>>, vector<8x72xf32>
    %c0_101 = arith.constant 0 : index
    %c0_102 = arith.constant 0 : index
    %104 = vector.load %arg18[%c0_101, %c0_102] : memref<72x512xf32, #tpu.memory_space<vmem>>, vector<72x512xf32>
    %cst_103 = arith.constant dense<0.000000e+00> : vector<8x512xf32>
    %105 = tpu.matmul %103, %104, %cst_103 {dimension_numbers = #tpu.dot_dimension_numbers<[1], [0], [0], [1], [0, 0, 1, 1], [], []>} : vector<8x72xf32>, vector<72x512xf32>, vector<8x512xf32> -> vector<8x512xf32>
    %c0_104 = arith.constant 0 : index
    %c0_105 = arith.constant 0 : index
    %106 = vector.load %arg4[%c0_104, %c0_105] : memref<8x1xf32, #tpu.memory_space<vmem>>, vector<8x1xf32>
    %107 = vector.broadcast %106 : vector<8x1xf32> to vector<8x512xf32>
    %108 = arith.addf %105, %107 : vector<8x512xf32>
    %c0_106 = arith.constant 0 : index
    %c0_107 = arith.constant 0 : index
    %109 = vector.load %arg5[%c0_106, %c0_107] : memref<8x8xf32, #tpu.memory_space<vmem>>, vector<8x8xf32>
    %cst_108 = arith.constant dense<0.000000e+00> : vector<8x512xf32>
    %110 = tpu.matmul %109, %2, %cst_108 {dimension_numbers = #tpu.dot_dimension_numbers<[1], [0], [0], [1], [0, 0, 1, 1], [], []>} : vector<8x8xf32>, vector<8x512xf32>, vector<8x512xf32> -> vector<8x512xf32>
    %c0_109 = arith.constant 0 : index
    %c0_110 = arith.constant 0 : index
    %111 = vector.load %arg6[%c0_109, %c0_110] : memref<8x1xf32, #tpu.memory_space<vmem>>, vector<8x1xf32>
    %112 = vector.broadcast %111 : vector<8x1xf32> to vector<8x512xf32>
    %113 = arith.addf %110, %112 : vector<8x512xf32>
    %114 = arith.addf %108, %113 : vector<8x512xf32>
    %cst_111 = arith.constant 0.000000e+00 : f32
    %115 = vector.broadcast %cst_111 : f32 to vector<8x512xf32>
    %116 = arith.maximumf %114, %115 : vector<8x512xf32>
    %c0_112 = arith.constant 0 : index
    %c128_113 = arith.constant 128 : index
    %117 = vector.load %arg17[%c0_112, %c128_113] : memref<8x768xf32, #tpu.memory_space<vmem>>, vector<8x512xf32>
    tpu.vector_store %arg17[%c0_112, %c128_113], %116 {strides = array<i32>} : memref<8x768xf32, #tpu.memory_space<vmem>>, vector<8x512xf32>,
    %c0_114 = arith.constant 0 : index
    %c111_115 = arith.constant 111 : index
    %118 = vector.load %arg17[%c0_114, %c111_115] : memref<8x768xf32, #tpu.memory_space<vmem>>, vector<8x512xf32>
    %c0_116 = arith.constant 0 : index
    %c0_117 = arith.constant 0 : index
    %119 = vector.load %arg13[%c0_116, %c0_117] : memref<9x512xf32, #tpu.memory_space<vmem>>, vector<1x512xf32>
    %120 = vector.broadcast %119 : vector<1x512xf32> to vector<8x512xf32>
    %121 = arith.mulf %118, %120 : vector<8x512xf32>
    %c0_118 = arith.constant 0 : index
    %c0_119 = arith.constant 0 : index
    %122 = vector.load %arg18[%c0_118, %c0_119] : memref<72x512xf32, #tpu.memory_space<vmem>>, vector<8x512xf32>
    tpu.vector_store %arg18[%c0_118, %c0_119], %121 {strides = array<i32>} : memref<72x512xf32, #tpu.memory_space<vmem>>, vector<8x512xf32>,
    %c0_120 = arith.constant 0 : index
    %c112_121 = arith.constant 112 : index
    %123 = vector.load %arg17[%c0_120, %c112_121] : memref<8x768xf32, #tpu.memory_space<vmem>>, vector<8x512xf32>
    %c1_122 = arith.constant 1 : index
    %c0_123 = arith.constant 0 : index
    %124 = vector.load %arg13[%c1_122, %c0_123] : memref<9x512xf32, #tpu.memory_space<vmem>>, vector<1x512xf32>
    %125 = vector.broadcast %124 : vector<1x512xf32> to vector<8x512xf32>
    %126 = arith.mulf %123, %125 : vector<8x512xf32>
    %c8_124 = arith.constant 8 : index
    %c0_125 = arith.constant 0 : index
    %127 = vector.load %arg18[%c8_124, %c0_125] : memref<72x512xf32, #tpu.memory_space<vmem>>, vector<8x512xf32>
    tpu.vector_store %arg18[%c8_124, %c0_125], %126 {strides = array<i32>} : memref<72x512xf32, #tpu.memory_space<vmem>>, vector<8x512xf32>,
    %c0_126 = arith.constant 0 : index
    %c113_127 = arith.constant 113 : index
    %128 = vector.load %arg17[%c0_126, %c113_127] : memref<8x768xf32, #tpu.memory_space<vmem>>, vector<8x512xf32>
    %c2_128 = arith.constant 2 : index
    %c0_129 = arith.constant 0 : index
    %129 = vector.load %arg13[%c2_128, %c0_129] : memref<9x512xf32, #tpu.memory_space<vmem>>, vector<1x512xf32>
    %130 = vector.broadcast %129 : vector<1x512xf32> to vector<8x512xf32>
    %131 = arith.mulf %128, %130 : vector<8x512xf32>
    %c16_130 = arith.constant 16 : index
    %c0_131 = arith.constant 0 : index
    %132 = vector.load %arg18[%c16_130, %c0_131] : memref<72x512xf32, #tpu.memory_space<vmem>>, vector<8x512xf32>
    tpu.vector_store %arg18[%c16_130, %c0_131], %131 {strides = array<i32>} : memref<72x512xf32, #tpu.memory_space<vmem>>, vector<8x512xf32>,
    %c0_132 = arith.constant 0 : index
    %c127_133 = arith.constant 127 : index
    %133 = vector.load %arg17[%c0_132, %c127_133] : memref<8x768xf32, #tpu.memory_space<vmem>>, vector<8x512xf32>
    %c3_134 = arith.constant 3 : index
    %c0_135 = arith.constant 0 : index
    %134 = vector.load %arg13[%c3_134, %c0_135] : memref<9x512xf32, #tpu.memory_space<vmem>>, vector<1x512xf32>
    %135 = vector.broadcast %134 : vector<1x512xf32> to vector<8x512xf32>
    %136 = arith.mulf %133, %135 : vector<8x512xf32>
    %c24_136 = arith.constant 24 : index
    %c0_137 = arith.constant 0 : index
    %137 = vector.load %arg18[%c24_136, %c0_137] : memref<72x512xf32, #tpu.memory_space<vmem>>, vector<8x512xf32>
    tpu.vector_store %arg18[%c24_136, %c0_137], %136 {strides = array<i32>} : memref<72x512xf32, #tpu.memory_space<vmem>>, vector<8x512xf32>,
    %c0_138 = arith.constant 0 : index
    %c128_139 = arith.constant 128 : index
    %138 = vector.load %arg17[%c0_138, %c128_139] : memref<8x768xf32, #tpu.memory_space<vmem>>, vector<8x512xf32>
    %c4_140 = arith.constant 4 : index
    %c0_141 = arith.constant 0 : index
    %139 = vector.load %arg13[%c4_140, %c0_141] : memref<9x512xf32, #tpu.memory_space<vmem>>, vector<1x512xf32>
    %140 = vector.broadcast %139 : vector<1x512xf32> to vector<8x512xf32>
    %141 = arith.mulf %138, %140 : vector<8x512xf32>
    %c32_142 = arith.constant 32 : index
    %c0_143 = arith.constant 0 : index
    %142 = vector.load %arg18[%c32_142, %c0_143] : memref<72x512xf32, #tpu.memory_space<vmem>>, vector<8x512xf32>
    tpu.vector_store %arg18[%c32_142, %c0_143], %141 {strides = array<i32>} : memref<72x512xf32, #tpu.memory_space<vmem>>, vector<8x512xf32>,
    %c0_144 = arith.constant 0 : index
    %c129_145 = arith.constant 129 : index
    %143 = vector.load %arg17[%c0_144, %c129_145] : memref<8x768xf32, #tpu.memory_space<vmem>>, vector<8x512xf32>
    %c5_146 = arith.constant 5 : index
    %c0_147 = arith.constant 0 : index
    %144 = vector.load %arg13[%c5_146, %c0_147] : memref<9x512xf32, #tpu.memory_space<vmem>>, vector<1x512xf32>
    %145 = vector.broadcast %144 : vector<1x512xf32> to vector<8x512xf32>
    %146 = arith.mulf %143, %145 : vector<8x512xf32>
    %c40_148 = arith.constant 40 : index
    %c0_149 = arith.constant 0 : index
    %147 = vector.load %arg18[%c40_148, %c0_149] : memref<72x512xf32, #tpu.memory_space<vmem>>, vector<8x512xf32>
    tpu.vector_store %arg18[%c40_148, %c0_149], %146 {strides = array<i32>} : memref<72x512xf32, #tpu.memory_space<vmem>>, vector<8x512xf32>,
    %c0_150 = arith.constant 0 : index
    %c143_151 = arith.constant 143 : index
    %148 = vector.load %arg17[%c0_150, %c143_151] : memref<8x768xf32, #tpu.memory_space<vmem>>, vector<8x512xf32>
    %c6_152 = arith.constant 6 : index
    %c0_153 = arith.constant 0 : index
    %149 = vector.load %arg13[%c6_152, %c0_153] : memref<9x512xf32, #tpu.memory_space<vmem>>, vector<1x512xf32>
    %150 = vector.broadcast %149 : vector<1x512xf32> to vector<8x512xf32>
    %151 = arith.mulf %148, %150 : vector<8x512xf32>
    %c48_154 = arith.constant 48 : index
    %c0_155 = arith.constant 0 : index
    %152 = vector.load %arg18[%c48_154, %c0_155] : memref<72x512xf32, #tpu.memory_space<vmem>>, vector<8x512xf32>
    tpu.vector_store %arg18[%c48_154, %c0_155], %151 {strides = array<i32>} : memref<72x512xf32, #tpu.memory_space<vmem>>, vector<8x512xf32>,
    %c0_156 = arith.constant 0 : index
    %c144_157 = arith.constant 144 : index
    %153 = vector.load %arg17[%c0_156, %c144_157] : memref<8x768xf32, #tpu.memory_space<vmem>>, vector<8x512xf32>
    %c7_158 = arith.constant 7 : index
    %c0_159 = arith.constant 0 : index
    %154 = vector.load %arg13[%c7_158, %c0_159] : memref<9x512xf32, #tpu.memory_space<vmem>>, vector<1x512xf32>
    %155 = vector.broadcast %154 : vector<1x512xf32> to vector<8x512xf32>
    %156 = arith.mulf %153, %155 : vector<8x512xf32>
    %c56_160 = arith.constant 56 : index
    %c0_161 = arith.constant 0 : index
    %157 = vector.load %arg18[%c56_160, %c0_161] : memref<72x512xf32, #tpu.memory_space<vmem>>, vector<8x512xf32>
    tpu.vector_store %arg18[%c56_160, %c0_161], %156 {strides = array<i32>} : memref<72x512xf32, #tpu.memory_space<vmem>>, vector<8x512xf32>,
    %c0_162 = arith.constant 0 : index
    %c145_163 = arith.constant 145 : index
    %158 = vector.load %arg17[%c0_162, %c145_163] : memref<8x768xf32, #tpu.memory_space<vmem>>, vector<8x512xf32>
    %c8_164 = arith.constant 8 : index
    %c0_165 = arith.constant 0 : index
    %159 = vector.load %arg13[%c8_164, %c0_165] : memref<9x512xf32, #tpu.memory_space<vmem>>, vector<1x512xf32>
    %160 = vector.broadcast %159 : vector<1x512xf32> to vector<8x512xf32>
    %161 = arith.mulf %158, %160 : vector<8x512xf32>
    %c64_166 = arith.constant 64 : index
    %c0_167 = arith.constant 0 : index
    %162 = vector.load %arg18[%c64_166, %c0_167] : memref<72x512xf32, #tpu.memory_space<vmem>>, vector<8x512xf32>
    tpu.vector_store %arg18[%c64_166, %c0_167], %161 {strides = array<i32>} : memref<72x512xf32, #tpu.memory_space<vmem>>, vector<8x512xf32>,
    %c0_168 = arith.constant 0 : index
    %c0_169 = arith.constant 0 : index
    %163 = vector.load %arg7[%c0_168, %c0_169] : memref<8x72xf32, #tpu.memory_space<vmem>>, vector<8x72xf32>
    %c0_170 = arith.constant 0 : index
    %c0_171 = arith.constant 0 : index
    %164 = vector.load %arg18[%c0_170, %c0_171] : memref<72x512xf32, #tpu.memory_space<vmem>>, vector<72x512xf32>
    %cst_172 = arith.constant dense<0.000000e+00> : vector<8x512xf32>
    %165 = tpu.matmul %163, %164, %cst_172 {dimension_numbers = #tpu.dot_dimension_numbers<[1], [0], [0], [1], [0, 0, 1, 1], [], []>} : vector<8x72xf32>, vector<72x512xf32>, vector<8x512xf32> -> vector<8x512xf32>
    %c0_173 = arith.constant 0 : index
    %c0_174 = arith.constant 0 : index
    %166 = vector.load %arg11[%c0_173, %c0_174] : memref<8x8xf32, #tpu.memory_space<vmem>>, vector<8x8xf32>
    %cst_175 = arith.constant dense<0.000000e+00> : vector<8x512xf32>
    %167 = tpu.matmul %166, %116, %cst_175 {dimension_numbers = #tpu.dot_dimension_numbers<[1], [0], [0], [1], [0, 0, 1, 1], [], []>} : vector<8x8xf32>, vector<8x512xf32>, vector<8x512xf32> -> vector<8x512xf32>
    %c0_176 = arith.constant 0 : index
    %c0_177 = arith.constant 0 : index
    %168 = vector.load %arg20[%c0_176, %c0_177] : memref<16x512xf32, #tpu.memory_space<vmem>>, vector<8x512xf32>
    tpu.vector_store %arg20[%c0_176, %c0_177], %165 {strides = array<i32>} : memref<16x512xf32, #tpu.memory_space<vmem>>, vector<8x512xf32>,
    %c8_178 = arith.constant 8 : index
    %c0_179 = arith.constant 0 : index
    %169 = vector.load %arg20[%c8_178, %c0_179] : memref<16x512xf32, #tpu.memory_space<vmem>>, vector<8x512xf32>
    tpu.vector_store %arg20[%c8_178, %c0_179], %167 {strides = array<i32>} : memref<16x512xf32, #tpu.memory_space<vmem>>, vector<8x512xf32>,
    %c0_180 = arith.constant 0 : index
    %c0_181 = arith.constant 0 : index
    %170 = vector.load %arg20[%c0_180, %c0_181] : memref<16x512xf32, #tpu.memory_space<vmem>>, vector<16x512xf32>
    %c0_182 = arith.constant 0 : index
    %c0_183 = arith.constant 0 : index
    %171 = vector.load %arg15[%c0_182, %c0_183] : memref<512x128xf32, #tpu.memory_space<vmem>>, vector<512x128xf32>
    %cst_184 = arith.constant dense<0.000000e+00> : vector<16x128xf32>
    %172 = tpu.matmul %170, %171, %cst_184 {dimension_numbers = #tpu.dot_dimension_numbers<[1], [0], [0], [1], [0, 0, 1, 1], [], []>} : vector<16x512xf32>, vector<512x128xf32>, vector<16x128xf32> -> vector<16x128xf32>
    %173 = vector.extract_strided_slice %172 {offsets = [0, 0], sizes = [8, 128], strides = [1, 1]} : vector<16x128xf32> to vector<8x128xf32>
    %c0_185 = arith.constant 0 : index
    %c0_186 = arith.constant 0 : index
    %174 = vector.load %arg8[%c0_185, %c0_186] : memref<8x1xf32, #tpu.memory_space<vmem>>, vector<8x1xf32>
    %175 = vector.broadcast %174 : vector<8x1xf32> to vector<8x128xf32>
    %176 = arith.addf %173, %175 : vector<8x128xf32>
    %cst_187 = arith.constant 0.000000e+00 : f32
    %177 = vector.broadcast %cst_187 : f32 to vector<8x128xf32>
    %178 = arith.maximumf %176, %177 : vector<8x128xf32>
    %179 = vector.extract_strided_slice %172 {offsets = [8, 0], sizes = [8, 128], strides = [1, 1]} : vector<16x128xf32> to vector<8x128xf32>
    %c0_188 = arith.constant 0 : index
    %c0_189 = arith.constant 0 : index
    %180 = vector.load %arg12[%c0_188, %c0_189] : memref<8x1xf32, #tpu.memory_space<vmem>>, vector<8x1xf32>
    %181 = vector.broadcast %180 : vector<8x1xf32> to vector<8x128xf32>
    %182 = arith.addf %179, %181 : vector<8x128xf32>
    %c0_190 = arith.constant 0 : index
    %c128_191 = arith.constant 128 : index
    %183 = vector.load %arg17[%c0_190, %c128_191] : memref<8x768xf32, #tpu.memory_space<vmem>>, vector<8x128xf32>
    tpu.vector_store %arg17[%c0_190, %c128_191], %178 {strides = array<i32>} : memref<8x768xf32, #tpu.memory_space<vmem>>, vector<8x128xf32>,
    %c0_192 = arith.constant 0 : index
    %c119 = arith.constant 119 : index
    %184 = vector.load %arg17[%c0_192, %c119] : memref<8x768xf32, #tpu.memory_space<vmem>>, vector<8x128xf32>
    %c0_193 = arith.constant 0 : index
    %c0_194 = arith.constant 0 : index
    %185 = vector.load %arg14[%c0_193, %c0_194] : memref<9x128xf32, #tpu.memory_space<vmem>>, vector<1x128xf32>
    %186 = vector.broadcast %185 : vector<1x128xf32> to vector<8x128xf32>
    %187 = arith.mulf %184, %186 : vector<8x128xf32>
    %c0_195 = arith.constant 0 : index
    %c0_196 = arith.constant 0 : index
    %188 = vector.load %arg19[%c0_195, %c0_196] : memref<72x128xf32, #tpu.memory_space<vmem>>, vector<8x128xf32>
    tpu.vector_store %arg19[%c0_195, %c0_196], %187 {strides = array<i32>} : memref<72x128xf32, #tpu.memory_space<vmem>>, vector<8x128xf32>,
    %c0_197 = arith.constant 0 : index
    %c120 = arith.constant 120 : index
    %189 = vector.load %arg17[%c0_197, %c120] : memref<8x768xf32, #tpu.memory_space<vmem>>, vector<8x128xf32>
    %c1_198 = arith.constant 1 : index
    %c0_199 = arith.constant 0 : index
    %190 = vector.load %arg14[%c1_198, %c0_199] : memref<9x128xf32, #tpu.memory_space<vmem>>, vector<1x128xf32>
    %191 = vector.broadcast %190 : vector<1x128xf32> to vector<8x128xf32>
    %192 = arith.mulf %189, %191 : vector<8x128xf32>
    %c8_200 = arith.constant 8 : index
    %c0_201 = arith.constant 0 : index
    %193 = vector.load %arg19[%c8_200, %c0_201] : memref<72x128xf32, #tpu.memory_space<vmem>>, vector<8x128xf32>
    tpu.vector_store %arg19[%c8_200, %c0_201], %192 {strides = array<i32>} : memref<72x128xf32, #tpu.memory_space<vmem>>, vector<8x128xf32>,
    %c0_202 = arith.constant 0 : index
    %c121 = arith.constant 121 : index
    %194 = vector.load %arg17[%c0_202, %c121] : memref<8x768xf32, #tpu.memory_space<vmem>>, vector<8x128xf32>
    %c2_203 = arith.constant 2 : index
    %c0_204 = arith.constant 0 : index
    %195 = vector.load %arg14[%c2_203, %c0_204] : memref<9x128xf32, #tpu.memory_space<vmem>>, vector<1x128xf32>
    %196 = vector.broadcast %195 : vector<1x128xf32> to vector<8x128xf32>
    %197 = arith.mulf %194, %196 : vector<8x128xf32>
    %c16_205 = arith.constant 16 : index
    %c0_206 = arith.constant 0 : index
    %198 = vector.load %arg19[%c16_205, %c0_206] : memref<72x128xf32, #tpu.memory_space<vmem>>, vector<8x128xf32>
    tpu.vector_store %arg19[%c16_205, %c0_206], %197 {strides = array<i32>} : memref<72x128xf32, #tpu.memory_space<vmem>>, vector<8x128xf32>,
    %c0_207 = arith.constant 0 : index
    %c127_208 = arith.constant 127 : index
    %199 = vector.load %arg17[%c0_207, %c127_208] : memref<8x768xf32, #tpu.memory_space<vmem>>, vector<8x128xf32>
    %c3_209 = arith.constant 3 : index
    %c0_210 = arith.constant 0 : index
    %200 = vector.load %arg14[%c3_209, %c0_210] : memref<9x128xf32, #tpu.memory_space<vmem>>, vector<1x128xf32>
    %201 = vector.broadcast %200 : vector<1x128xf32> to vector<8x128xf32>
    %202 = arith.mulf %199, %201 : vector<8x128xf32>
    %c24_211 = arith.constant 24 : index
    %c0_212 = arith.constant 0 : index
    %203 = vector.load %arg19[%c24_211, %c0_212] : memref<72x128xf32, #tpu.memory_space<vmem>>, vector<8x128xf32>
    tpu.vector_store %arg19[%c24_211, %c0_212], %202 {strides = array<i32>} : memref<72x128xf32, #tpu.memory_space<vmem>>, vector<8x128xf32>,
    %c0_213 = arith.constant 0 : index
    %c128_214 = arith.constant 128 : index
    %204 = vector.load %arg17[%c0_213, %c128_214] : memref<8x768xf32, #tpu.memory_space<vmem>>, vector<8x128xf32>
    %c4_215 = arith.constant 4 : index
    %c0_216 = arith.constant 0 : index
    %205 = vector.load %arg14[%c4_215, %c0_216] : memref<9x128xf32, #tpu.memory_space<vmem>>, vector<1x128xf32>
    %206 = vector.broadcast %205 : vector<1x128xf32> to vector<8x128xf32>
    %207 = arith.mulf %204, %206 : vector<8x128xf32>
    %c32_217 = arith.constant 32 : index
    %c0_218 = arith.constant 0 : index
    %208 = vector.load %arg19[%c32_217, %c0_218] : memref<72x128xf32, #tpu.memory_space<vmem>>, vector<8x128xf32>
    tpu.vector_store %arg19[%c32_217, %c0_218], %207 {strides = array<i32>} : memref<72x128xf32, #tpu.memory_space<vmem>>, vector<8x128xf32>,
    %c0_219 = arith.constant 0 : index
    %c129_220 = arith.constant 129 : index
    %209 = vector.load %arg17[%c0_219, %c129_220] : memref<8x768xf32, #tpu.memory_space<vmem>>, vector<8x128xf32>
    %c5_221 = arith.constant 5 : index
    %c0_222 = arith.constant 0 : index
    %210 = vector.load %arg14[%c5_221, %c0_222] : memref<9x128xf32, #tpu.memory_space<vmem>>, vector<1x128xf32>
    %211 = vector.broadcast %210 : vector<1x128xf32> to vector<8x128xf32>
    %212 = arith.mulf %209, %211 : vector<8x128xf32>
    %c40_223 = arith.constant 40 : index
    %c0_224 = arith.constant 0 : index
    %213 = vector.load %arg19[%c40_223, %c0_224] : memref<72x128xf32, #tpu.memory_space<vmem>>, vector<8x128xf32>
    tpu.vector_store %arg19[%c40_223, %c0_224], %212 {strides = array<i32>} : memref<72x128xf32, #tpu.memory_space<vmem>>, vector<8x128xf32>,
    %c0_225 = arith.constant 0 : index
    %c135 = arith.constant 135 : index
    %214 = vector.load %arg17[%c0_225, %c135] : memref<8x768xf32, #tpu.memory_space<vmem>>, vector<8x128xf32>
    %c6_226 = arith.constant 6 : index
    %c0_227 = arith.constant 0 : index
    %215 = vector.load %arg14[%c6_226, %c0_227] : memref<9x128xf32, #tpu.memory_space<vmem>>, vector<1x128xf32>
    %216 = vector.broadcast %215 : vector<1x128xf32> to vector<8x128xf32>
    %217 = arith.mulf %214, %216 : vector<8x128xf32>
    %c48_228 = arith.constant 48 : index
    %c0_229 = arith.constant 0 : index
    %218 = vector.load %arg19[%c48_228, %c0_229] : memref<72x128xf32, #tpu.memory_space<vmem>>, vector<8x128xf32>
    tpu.vector_store %arg19[%c48_228, %c0_229], %217 {strides = array<i32>} : memref<72x128xf32, #tpu.memory_space<vmem>>, vector<8x128xf32>,
    %c0_230 = arith.constant 0 : index
    %c136 = arith.constant 136 : index
    %219 = vector.load %arg17[%c0_230, %c136] : memref<8x768xf32, #tpu.memory_space<vmem>>, vector<8x128xf32>
    %c7_231 = arith.constant 7 : index
    %c0_232 = arith.constant 0 : index
    %220 = vector.load %arg14[%c7_231, %c0_232] : memref<9x128xf32, #tpu.memory_space<vmem>>, vector<1x128xf32>
    %221 = vector.broadcast %220 : vector<1x128xf32> to vector<8x128xf32>
    %222 = arith.mulf %219, %221 : vector<8x128xf32>
    %c56_233 = arith.constant 56 : index
    %c0_234 = arith.constant 0 : index
    %223 = vector.load %arg19[%c56_233, %c0_234] : memref<72x128xf32, #tpu.memory_space<vmem>>, vector<8x128xf32>
    tpu.vector_store %arg19[%c56_233, %c0_234], %222 {strides = array<i32>} : memref<72x128xf32, #tpu.memory_space<vmem>>, vector<8x128xf32>,
    %c0_235 = arith.constant 0 : index
    %c137 = arith.constant 137 : index
    %224 = vector.load %arg17[%c0_235, %c137] : memref<8x768xf32, #tpu.memory_space<vmem>>, vector<8x128xf32>
    %c8_236 = arith.constant 8 : index
    %c0_237 = arith.constant 0 : index
    %225 = vector.load %arg14[%c8_236, %c0_237] : memref<9x128xf32, #tpu.memory_space<vmem>>, vector<1x128xf32>
    %226 = vector.broadcast %225 : vector<1x128xf32> to vector<8x128xf32>
    %227 = arith.mulf %224, %226 : vector<8x128xf32>
    %c64_238 = arith.constant 64 : index
    %c0_239 = arith.constant 0 : index
    %228 = vector.load %arg19[%c64_238, %c0_239] : memref<72x128xf32, #tpu.memory_space<vmem>>, vector<8x128xf32>
    tpu.vector_store %arg19[%c64_238, %c0_239], %227 {strides = array<i32>} : memref<72x128xf32, #tpu.memory_space<vmem>>, vector<8x128xf32>,
    %c0_240 = arith.constant 0 : index
    %c0_241 = arith.constant 0 : index
    %229 = vector.load %arg9[%c0_240, %c0_241] : memref<8x72xf32, #tpu.memory_space<vmem>>, vector<8x72xf32>
    %c0_242 = arith.constant 0 : index
    %c0_243 = arith.constant 0 : index
    %230 = vector.load %arg19[%c0_242, %c0_243] : memref<72x128xf32, #tpu.memory_space<vmem>>, vector<72x128xf32>
    %cst_244 = arith.constant dense<0.000000e+00> : vector<8x128xf32>
    %231 = tpu.matmul %229, %230, %cst_244 {dimension_numbers = #tpu.dot_dimension_numbers<[1], [0], [0], [1], [0, 0, 1, 1], [], []>} : vector<8x72xf32>, vector<72x128xf32>, vector<8x128xf32> -> vector<8x128xf32>
    %c0_245 = arith.constant 0 : index
    %c0_246 = arith.constant 0 : index
    %232 = vector.load %arg10[%c0_245, %c0_246] : memref<8x1xf32, #tpu.memory_space<vmem>>, vector<8x1xf32>
    %233 = vector.broadcast %232 : vector<8x1xf32> to vector<8x128xf32>
    %234 = arith.addf %231, %233 : vector<8x128xf32>
    %235 = arith.addf %234, %182 : vector<8x128xf32>
    %cst_247 = arith.constant 0.000000e+00 : f32
    %236 = vector.broadcast %cst_247 : f32 to vector<8x128xf32>
    %237 = arith.maximumf %235, %236 : vector<8x128xf32>
    %c0_248 = arith.constant 0 : index
    %c0_249 = arith.constant 0 : index
    %238 = vector.load %arg16[%c0_248, %c0_249] : memref<8x128xf32, #tpu.memory_space<vmem>>, vector<8x128xf32>
    tpu.vector_store %arg16[%c0_248, %c0_249], %237 {strides = array<i32>} : memref<8x128xf32, #tpu.memory_space<vmem>>, vector<8x128xf32>,
    return
  }
}

</mosaic_0001>

<llo_original>
// kernel: tile.110
$region0: #{tile.110}
  #allocation0 [shape = 's32[1]{0}', space=sflag, size = 0x4, scoped, tag = 'scoped memory for tile.110']
  %s0 = inlined_call_operand.vmem [shape: f32[64], index: 0, kind: input, shape index: {}]
  %s1 = inlined_call_operand.vmem [shape: f32[2,64], index: 1, kind: output, shape index: {}]
  // Predicated region
  $region2: #{tile.110} parent=0 // pred_check
    _
  $region3: #{tile.110} parent=0 // pred_check_branch
    %3 = sbr.rel (0) target = $region5
  $region4: #{tile.110} parent=0 // pred_region
    _
  $region5: #{tile.110} parent=0 // pred_fallthru
    _
  %v4 = vld [vmem:[%s0] ss:$0 sm:$0xff]
  %5 = vst [vmem:[%s1] sm:$0x3] %v4

// kernel: tile.135
$region0: #{tile.135}
  %s0 = inlined_call_operand.vmem [shape: f32[2,64], index: 0, kind: input, shape index: {}]
  %s1 = inlined_call_operand.vmem [shape: f32[1,128], index: 1, kind: output, shape index: {}]
  $region1: #{tile.135} parent=0
    #allocation0 [shape = 'u8[4096]{0}', space=vmem, size = 0x1000, scoped, tag = 'scoped mem for output reshape']
    #allocation1 [shape = 'u8[4096]{0}', space=vmem, size = 0x1000, scoped, tag = 'scoped mem for input reshape']
    %s3 = ssub.s32 4, 1
    %v4 = vld [vmem:[%s0] sm:%s3]
    %5 = vst [vmem:[#allocation1] sm:%s3] %v4
    %v6 = vld [vmem:[#allocation1] sm:$0x1]
    %vm7 = vcmask 523264
    %8 = vst.msk [vmem:[#allocation0] sm:$0x1] %vm7, %v6
    %s9 = scalar_lea.vmem [#allocation1], 1
    %v10 = vld [vmem:[%s9] sm:$0x1]
    %11 = vrot.lane.b32.xlu0 %v10, 64
    %v12 = vpop.permute.xlu0 %11
    %vm13 = vcmask 1048064
    %14 = vst.msk [vmem:[#allocation0] sm:$0x1] %vm13, %v12
    %s16 = ssub.s32 2, 1
    %v17 = vld [vmem:[#allocation0] sm:%s16]
    %s19 = ssub.s32 2, 1
    %20 = vst [vmem:[%s1] sm:%s19] %v17

// kernel: down_old_forward.1
$region0: #{down_old_forward.1}
  #allocation0 [shape = 'u32[]', space=smem, size = 0x4, offset = 0x4, fixed_abs, tag = 'smem constant byte address 0x4 - core index']
  #allocation1 [shape = 'u32[72,128]{1,0:T(1,128)}', space=vmem, size = 0x9000, scoped, tag = 'internal scratch']
  #allocation2 [shape = 'f32[8,768]{1,0:T(8,128)}', space=vmem, size = 0x6000, scoped, tag = 'scratch operand']
  #allocation3 [shape = 'f32[72,512]{1,0:T(8,128)}', space=vmem, size = 0x24000, scoped, tag = 'scratch operand']
  #allocation4 [shape = 'f32[72,128]{1,0:T(8,128)}', space=vmem, size = 0x9000, scoped, tag = 'scratch operand']
  #allocation5 [shape = 'f32[16,512]{1,0:T(8,128)}', space=vmem, size = 0x8000, scoped, tag = 'scratch operand']
  %s0 = inlined_call_operand.vmem [shape: f32[8,512], index: 0, kind: input, shape index: {}]
  %s1 = inlined_call_operand.vmem [shape: f32[8,72], index: 1, kind: input, shape index: {}]
  %s2 = inlined_call_operand.vmem [shape: f32[8,1], index: 2, kind: input, shape index: {}]
  %s3 = inlined_call_operand.vmem [shape: f32[8,72], index: 3, kind: input, shape index: {}]
  %s4 = inlined_call_operand.vmem [shape: f32[8,1], index: 4, kind: input, shape index: {}]
  %s5 = inlined_call_operand.vmem [shape: f32[8,8], index: 5, kind: input, shape index: {}]
  %s6 = inlined_call_operand.vmem [shape: f32[8,1], index: 6, kind: input, shape index: {}]
  %s7 = inlined_call_operand.vmem [shape: f32[8,72], index: 7, kind: input, shape index: {}]
  %s8 = inlined_call_operand.vmem [shape: f32[8,1], index: 8, kind: input, shape index: {}]
  %s9 = inlined_call_operand.vmem [shape: f32[8,72], index: 9, kind: input, shape index: {}]
  %s10 = inlined_call_operand.vmem [shape: f32[8,1], index: 10, kind: input, shape index: {}]
  %s11 = inlined_call_operand.vmem [shape: f32[8,8], index: 11, kind: input, shape index: {}]
  %s12 = inlined_call_operand.vmem [shape: f32[8,1], index: 12, kind: input, shape index: {}]
  %s13 = inlined_call_operand.vmem [shape: f32[9,512], index: 13, kind: input, shape index: {}]
  %s14 = inlined_call_operand.vmem [shape: f32[9,128], index: 14, kind: input, shape index: {}]
  %s15 = inlined_call_operand.vmem [shape: f32[512,128], index: 15, kind: input, shape index: {}]
  %s16 = inlined_call_operand.vmem [shape: f32[8,128], index: 16, kind: output, shape index: {}]
  %s17 = sld [smem:[#allocation0]]
  $region74: #{down_old_forward.1} parent=0
    _
  %s19 = ssub.s32 1, %s17
  %s20 = scalar_select 0, %s19, %s17
  // Predicated region
  $region2: #{down_old_forward.1} parent=0 // pred_check
    _
  $region3: #{down_old_forward.1} parent=0 // pred_check_branch
    %22 = sbr.rel (0) target = $region5
  $region4: #{down_old_forward.1} parent=0 // pred_region
    _
  $region5: #{down_old_forward.1} parent=0 // pred_fallthru
    _
  // Predicated region
  $region6: #{down_old_forward.1} parent=0 // pred_check
    _
  $region7: #{down_old_forward.1} parent=0 // pred_check_branch
    %24 = sbr.rel (0) target = $region9
  $region8: #{down_old_forward.1} parent=0 // pred_region
    _
  $region9: #{down_old_forward.1} parent=0 // pred_fallthru
    _
  // Predicated region
  $region10: #{down_old_forward.1} parent=0 // pred_check
    _
  $region11: #{down_old_forward.1} parent=0 // pred_check_branch
    %26 = sbr.rel (0) target = $region13
  $region12: #{down_old_forward.1} parent=0 // pred_region
    _
  $region13: #{down_old_forward.1} parent=0 // pred_fallthru
    _
  // Predicated region
  $region14: #{down_old_forward.1} parent=0 // pred_check
    _
  $region15: #{down_old_forward.1} parent=0 // pred_check_branch
    %28 = sbr.rel (0) target = $region17
  $region16: #{down_old_forward.1} parent=0 // pred_region
    _
  $region17: #{down_old_forward.1} parent=0 // pred_fallthru
    _
  // Predicated region
  $region18: #{down_old_forward.1} parent=0 // pred_check
    _
  $region19: #{down_old_forward.1} parent=0 // pred_check_branch
    %30 = sbr.rel (0) target = $region21
  $region20: #{down_old_forward.1} parent=0 // pred_region
    _
  $region21: #{down_old_forward.1} parent=0 // pred_fallthru
    _
  // Predicated region
  $region22: #{down_old_forward.1} parent=0 // pred_check
    _
  $region23: #{down_old_forward.1} parent=0 // pred_check_branch
    %32 = sbr.rel (0) target = $region25
  $region24: #{down_old_forward.1} parent=0 // pred_region
    _
  $region25: #{down_old_forward.1} parent=0 // pred_fallthru
    _
  // Predicated region
  $region26: #{down_old_forward.1} parent=0 // pred_check
    _
  $region27: #{down_old_forward.1} parent=0 // pred_check_branch
    %34 = sbr.rel (0) target = $region29
  $region28: #{down_old_forward.1} parent=0 // pred_region
    _
  $region29: #{down_old_forward.1} parent=0 // pred_fallthru
    _
  // Predicated region
  $region30: #{down_old_forward.1} parent=0 // pred_check
    _
  $region31: #{down_old_forward.1} parent=0 // pred_check_branch
    %36 = sbr.rel (0) target = $region33
  $region32: #{down_old_forward.1} parent=0 // pred_region
    _
  $region33: #{down_old_forward.1} parent=0 // pred_fallthru
    _
  // Predicated region
  $region34: #{down_old_forward.1} parent=0 // pred_check
    _
  $region35: #{down_old_forward.1} parent=0 // pred_check_branch
    %38 = sbr.rel (0) target = $region37
  $region36: #{down_old_forward.1} parent=0 // pred_region
    _
  $region37: #{down_old_forward.1} parent=0 // pred_fallthru
    _
  // Predicated region
  $region38: #{down_old_forward.1} parent=0 // pred_check
    _
  $region39: #{down_old_forward.1} parent=0 // pred_check_branch
    %40 = sbr.rel (0) target = $region41
  $region40: #{down_old_forward.1} parent=0 // pred_region
    _
  $region41: #{down_old_forward.1} parent=0 // pred_fallthru
    _
  // Predicated region
  $region42: #{down_old_forward.1} parent=0 // pred_check
    _
  $region43: #{down_old_forward.1} parent=0 // pred_check_branch
    %42 = sbr.rel (0) target = $region45
  $region44: #{down_old_forward.1} parent=0 // pred_region
    _
  $region45: #{down_old_forward.1} parent=0 // pred_fallthru
    _
  // Predicated region
  $region46: #{down_old_forward.1} parent=0 // pred_check
    _
  $region47: #{down_old_forward.1} parent=0 // pred_check_branch
    %44 = sbr.rel (0) target = $region49
  $region48: #{down_old_forward.1} parent=0 // pred_region
    _
  $region49: #{down_old_forward.1} parent=0 // pred_fallthru
    _
  // Predicated region
  $region50: #{down_old_forward.1} parent=0 // pred_check
    _
  $region51: #{down_old_forward.1} parent=0 // pred_check_branch
    %46 = sbr.rel (0) target = $region53
  $region52: #{down_old_forward.1} parent=0 // pred_region
    _
  $region53: #{down_old_forward.1} parent=0 // pred_fallthru
    _
  // Predicated region
  $region54: #{down_old_forward.1} parent=0 // pred_check
    _
  $region55: #{down_old_forward.1} parent=0 // pred_check_branch
    %48 = sbr.rel (0) target = $region57
  $region56: #{down_old_forward.1} parent=0 // pred_region
    _
  $region57: #{down_old_forward.1} parent=0 // pred_fallthru
    _
  // Predicated region
  $region58: #{down_old_forward.1} parent=0 // pred_check
    _
  $region59: #{down_old_forward.1} parent=0 // pred_check_branch
    %50 = sbr.rel (0) target = $region61
  $region60: #{down_old_forward.1} parent=0 // pred_region
    _
  $region61: #{down_old_forward.1} parent=0 // pred_fallthru
    _
  // Predicated region
  $region62: #{down_old_forward.1} parent=0 // pred_check
    _
  $region63: #{down_old_forward.1} parent=0 // pred_check_branch
    %52 = sbr.rel (0) target = $region65
  $region64: #{down_old_forward.1} parent=0 // pred_region
    _
  $region65: #{down_old_forward.1} parent=0 // pred_fallthru
    _
  %53 = vst [vmem:[#allocation2] sm:$0xff] 0.0
  %54 = vst [vmem:[#allocation2 + $0x8] sm:$0xff] 0.0
  %55 = vst [vmem:[#allocation2 + $0x10] sm:$0xff] 0.0
  %56 = vst [vmem:[#allocation2 + $0x18] sm:$0xff] 0.0
  %57 = vst [vmem:[#allocation2 + $0x20] sm:$0xff] 0.0
  %58 = vst [vmem:[#allocation2 + $0x28] sm:$0xff] 0.0
  %v59 = vld [vmem:[%s0] sm:$0xff]
  %v60 = vld [vmem:[%s0 + $0x8] sm:$0xff]
  %v61 = vld [vmem:[%s0 + $0x10] sm:$0xff]
  %v62 = vld [vmem:[%s0 + $0x18] sm:$0xff]
  %63 = vst [vmem:[#allocation2 + $0x8] sm:$0xff] %v59
  %64 = vst [vmem:[#allocation2 + $0x10] sm:$0xff] %v60
  %65 = vst [vmem:[#allocation2 + $0x18] sm:$0xff] %v61
  %66 = vst [vmem:[#allocation2 + $0x20] sm:$0xff] %v62
  %v67 = vld [vmem:[#allocation2] sm:$0xff]
  %v68 = vld [vmem:[#allocation2 + $0x8] sm:$0xff]
  %v69 = vld [vmem:[#allocation2 + $0x10] sm:$0xff]
  %v70 = vld [vmem:[#allocation2 + $0x18] sm:$0xff]
  %v71 = vld [vmem:[#allocation2 + $0x20] sm:$0xff]
  %v72 = vld [vmem:[%s13] ss:$8 sm:$0xf]
  %v74 = vperm.slane %v72, 0
  %v75 = vperm.slane %v72, 1
  %v76 = vperm.slane %v72, 2
  %v77 = vperm.slane %v72, 3
  %78 = vrot.lane.b32.xlu0 %v74, 111
  %v79 = vpop.permute.xlu0 %78
  %80 = vrot.lane.b32.xlu0 %v75, 111
  %v81 = vpop.permute.xlu0 %80
  %82 = vrot.lane.b32.xlu0 %v76, 111
  %v83 = vpop.permute.xlu0 %82
  %84 = vrot.lane.b32.xlu0 %v77, 111
  %v85 = vpop.permute.xlu0 %84
  %vm86 = vcmask 908288
  %v87 = vsel %vm86, %v79, %v81
  %v88 = vsel %vm86, %v81, %v83
  %v89 = vsel %vm86, %v83, %v85
  %v95 = vmul.f32 %v67, %v79
  %v96 = vmul.f32 %v68, %v87
  %v97 = vmul.f32 %v69, %v88
  %v98 = vmul.f32 %v70, %v89
  %v99 = vmul.f32 %v71, %v85
  %105 = vrot.lane.b32.xlu0 %v95, 17
  %v106 = vpop.permute.xlu0 %105
  %107 = vrot.lane.b32.xlu0 %v96, 17
  %v108 = vpop.permute.xlu0 %107
  %109 = vrot.lane.b32.xlu0 %v97, 17
  %v110 = vpop.permute.xlu0 %109
  %111 = vrot.lane.b32.xlu0 %v98, 17
  %v112 = vpop.permute.xlu0 %111
  %113 = vrot.lane.b32.xlu0 %v99, 17
  %v114 = vpop.permute.xlu0 %113
  %vm115 = vcmask 138240
  %v116 = vsel %vm115, %v106, %v108
  %v117 = vsel %vm115, %v108, %v110
  %v118 = vsel %vm115, %v110, %v112
  %v119 = vsel %vm115, %v112, %v114
  %124 = vst [vmem:[#allocation3] sm:$0xff] %v116
  %125 = vst [vmem:[#allocation3 + $0x8] sm:$0xff] %v117
  %126 = vst [vmem:[#allocation3 + $0x10] sm:$0xff] %v118
  %127 = vst [vmem:[#allocation3 + $0x18] sm:$0xff] %v119
  %v128 = vld [vmem:[#allocation2] sm:$0xff]
  %v129 = vld [vmem:[#allocation2 + $0x8] sm:$0xff]
  %v130 = vld [vmem:[#allocation2 + $0x10] sm:$0xff]
  %v131 = vld [vmem:[#allocation2 + $0x18] sm:$0xff]
  %v132 = vld [vmem:[#allocation2 + $0x20] sm:$0xff]
  %s133 = scalar_lea.vmem %s13, 1
  %v134 = vld [vmem:[%s133] ss:$8 sm:$0xf]
  %v136 = vperm.slane %v134, 0
  %v137 = vperm.slane %v134, 1
  %v138 = vperm.slane %v134, 2
  %v139 = vperm.slane %v134, 3
  %140 = vrot.lane.b32.xlu0 %v136, 112
  %v141 = vpop.permute.xlu0 %140
  %142 = vrot.lane.b32.xlu0 %v137, 112
  %v143 = vpop.permute.xlu0 %142
  %144 = vrot.lane.b32.xlu0 %v138, 112
  %v145 = vpop.permute.xlu0 %144
  %146 = vrot.lane.b32.xlu0 %v139, 112
  %v147 = vpop.permute.xlu0 %146
  %vm148 = vcmask 916480
  %v149 = vsel %vm148, %v141, %v143
  %v150 = vsel %vm148, %v143, %v145
  %v151 = vsel %vm148, %v145, %v147
  %v157 = vmul.f32 %v128, %v141
  %v158 = vmul.f32 %v129, %v149
  %v159 = vmul.f32 %v130, %v150
  %v160 = vmul.f32 %v131, %v151
  %v161 = vmul.f32 %v132, %v147
  %167 = vrot.lane.b32.xlu0 %v157, 16
  %v168 = vpop.permute.xlu0 %167
  %169 = vrot.lane.b32.xlu0 %v158, 16
  %v170 = vpop.permute.xlu0 %169
  %171 = vrot.lane.b32.xlu0 %v159, 16
  %v172 = vpop.permute.xlu0 %171
  %173 = vrot.lane.b32.xlu0 %v160, 16
  %v174 = vpop.permute.xlu0 %173
  %175 = vrot.lane.b32.xlu0 %v161, 16
  %v176 = vpop.permute.xlu0 %175
  %vm177 = vcmask 130048
  %v178 = vsel %vm177, %v168, %v170
  %v179 = vsel %vm177, %v170, %v172
  %v180 = vsel %vm177, %v172, %v174
  %v181 = vsel %vm177, %v174, %v176
  %186 = vst [vmem:[#allocation3 + $0x20] sm:$0xff] %v178
  %187 = vst [vmem:[#allocation3 + $0x28] sm:$0xff] %v179
  %188 = vst [vmem:[#allocation3 + $0x30] sm:$0xff] %v180
  %189 = vst [vmem:[#allocation3 + $0x38] sm:$0xff] %v181
  %v190 = vld [vmem:[#allocation2] sm:$0xff]
  %v191 = vld [vmem:[#allocation2 + $0x8] sm:$0xff]
  %v192 = vld [vmem:[#allocation2 + $0x10] sm:$0xff]
  %v193 = vld [vmem:[#allocation2 + $0x18] sm:$0xff]
  %v194 = vld [vmem:[#allocation2 + $0x20] sm:$0xff]
  %s195 = scalar_lea.vmem %s13, 2
  %v196 = vld [vmem:[%s195] ss:$8 sm:$0xf]
  %v198 = vperm.slane %v196, 0
  %v199 = vperm.slane %v196, 1
  %v200 = vperm.slane %v196, 2
  %v201 = vperm.slane %v196, 3
  %202 = vrot.lane.b32.xlu0 %v198, 113
  %v203 = vpop.permute.xlu0 %202
  %204 = vrot.lane.b32.xlu0 %v199, 113
  %v205 = vpop.permute.xlu0 %204
  %206 = vrot.lane.b32.xlu0 %v200, 113
  %v207 = vpop.permute.xlu0 %206
  %208 = vrot.lane.b32.xlu0 %v201, 113
  %v209 = vpop.permute.xlu0 %208
  %vm210 = vcmask 924672
  %v211 = vsel %vm210, %v203, %v205
  %v212 = vsel %vm210, %v205, %v207
  %v213 = vsel %vm210, %v207, %v209
  %v219 = vmul.f32 %v190, %v203
  %v220 = vmul.f32 %v191, %v211
  %v221 = vmul.f32 %v192, %v212
  %v222 = vmul.f32 %v193, %v213
  %v223 = vmul.f32 %v194, %v209
  %229 = vrot.lane.b32.xlu0 %v219, 15
  %v230 = vpop.permute.xlu0 %229
  %231 = vrot.lane.b32.xlu0 %v220, 15
  %v232 = vpop.permute.xlu0 %231
  %233 = vrot.lane.b32.xlu0 %v221, 15
  %v234 = vpop.permute.xlu0 %233
  %235 = vrot.lane.b32.xlu0 %v222, 15
  %v236 = vpop.permute.xlu0 %235
  %237 = vrot.lane.b32.xlu0 %v223, 15
  %v238 = vpop.permute.xlu0 %237
  %vm239 = vcmask 121856
  %v240 = vsel %vm239, %v230, %v232
  %v241 = vsel %vm239, %v232, %v234
  %v242 = vsel %vm239, %v234, %v236
  %v243 = vsel %vm239, %v236, %v238
  %248 = vst [vmem:[#allocation3 + $0x40] sm:$0xff] %v240
  %249 = vst [vmem:[#allocation3 + $0x48] sm:$0xff] %v241
  %250 = vst [vmem:[#allocation3 + $0x50] sm:$0xff] %v242
  %251 = vst [vmem:[#allocation3 + $0x58] sm:$0xff] %v243
  %v252 = vld [vmem:[#allocation2] sm:$0xff]
  %v253 = vld [vmem:[#allocation2 + $0x8] sm:$0xff]
  %v254 = vld [vmem:[#allocation2 + $0x10] sm:$0xff]
  %v255 = vld [vmem:[#allocation2 + $0x18] sm:$0xff]
  %v256 = vld [vmem:[#allocation2 + $0x20] sm:$0xff]
  %s257 = scalar_lea.vmem %s13, 3
  %v258 = vld [vmem:[%s257] ss:$8 sm:$0xf]
  %v260 = vperm.slane %v258, 0
  %v261 = vperm.slane %v258, 1
  %v262 = vperm.slane %v258, 2
  %v263 = vperm.slane %v258, 3
  %264 = vrot.lane.b32.xlu0 %v260, 127
  %v265 = vpop.permute.xlu0 %264
  %266 = vrot.lane.b32.xlu0 %v261, 127
  %v267 = vpop.permute.xlu0 %266
  %268 = vrot.lane.b32.xlu0 %v262, 127
  %v269 = vpop.permute.xlu0 %268
  %270 = vrot.lane.b32.xlu0 %v263, 127
  %v271 = vpop.permute.xlu0 %270
  %vm272 = vcmask 1039360
  %v273 = vsel %vm272, %v265, %v267
  %v274 = vsel %vm272, %v267, %v269
  %v275 = vsel %vm272, %v269, %v271
  %v281 = vmul.f32 %v252, %v265
  %v282 = vmul.f32 %v253, %v273
  %v283 = vmul.f32 %v254, %v274
  %v284 = vmul.f32 %v255, %v275
  %v285 = vmul.f32 %v256, %v271
  %291 = vrot.lane.b32.xlu0 %v281, 1
  %v292 = vpop.permute.xlu0 %291
  %293 = vrot.lane.b32.xlu0 %v282, 1
  %v294 = vpop.permute.xlu0 %293
  %295 = vrot.lane.b32.xlu0 %v283, 1
  %v296 = vpop.permute.xlu0 %295
  %297 = vrot.lane.b32.xlu0 %v284, 1
  %v298 = vpop.permute.xlu0 %297
  %299 = vrot.lane.b32.xlu0 %v285, 1
  %v300 = vpop.permute.xlu0 %299
  %vm301 = vcmask 7168
  %v302 = vsel %vm301, %v292, %v294
  %v303 = vsel %vm301, %v294, %v296
  %v304 = vsel %vm301, %v296, %v298
  %v305 = vsel %vm301, %v298, %v300
  %310 = vst [vmem:[#allocation3 + $0x60] sm:$0xff] %v302
  %311 = vst [vmem:[#allocation3 + $0x68] sm:$0xff] %v303
  %312 = vst [vmem:[#allocation3 + $0x70] sm:$0xff] %v304
  %313 = vst [vmem:[#allocation3 + $0x78] sm:$0xff] %v305
  %v314 = vld [vmem:[#allocation2 + $0x8] sm:$0xff]
  %v315 = vld [vmem:[#allocation2 + $0x10] sm:$0xff]
  %v316 = vld [vmem:[#allocation2 + $0x18] sm:$0xff]
  %v317 = vld [vmem:[#allocation2 + $0x20] sm:$0xff]
  %s318 = scalar_lea.vmem %s13, 4
  %v319 = vld [vmem:[%s318] ss:$8 sm:$0xf]
  %v321 = vperm.slane %v319, 0
  %v322 = vperm.slane %v319, 1
  %v323 = vperm.slane %v319, 2
  %v324 = vperm.slane %v319, 3
  %v329 = vmul.f32 %v314, %v321
  %v330 = vmul.f32 %v315, %v322
  %v331 = vmul.f32 %v316, %v323
  %v332 = vmul.f32 %v317, %v324
  %333 = vst [vmem:[#allocation3 + $0x80] sm:$0xff] %v329
  %334 = vst [vmem:[#allocation3 + $0x88] sm:$0xff] %v330
  %335 = vst [vmem:[#allocation3 + $0x90] sm:$0xff] %v331
  %336 = vst [vmem:[#allocation3 + $0x98] sm:$0xff] %v332
  %v337 = vld [vmem:[#allocation2 + $0x8] sm:$0xff]
  %v338 = vld [vmem:[#allocation2 + $0x10] sm:$0xff]
  %v339 = vld [vmem:[#allocation2 + $0x18] sm:$0xff]
  %v340 = vld [vmem:[#allocation2 + $0x20] sm:$0xff]
  %v341 = vld [vmem:[#allocation2 + $0x28] sm:$0xff]
  %s342 = scalar_lea.vmem %s13, 5
  %v343 = vld [vmem:[%s342] ss:$8 sm:$0xf]
  %v345 = vperm.slane %v343, 0
  %v346 = vperm.slane %v343, 1
  %v347 = vperm.slane %v343, 2
  %v348 = vperm.slane %v343, 3
  %349 = vrot.lane.b32.xlu0 %v345, 1
  %v350 = vpop.permute.xlu0 %349
  %351 = vrot.lane.b32.xlu0 %v346, 1
  %v352 = vpop.permute.xlu0 %351
  %353 = vrot.lane.b32.xlu0 %v347, 1
  %v354 = vpop.permute.xlu0 %353
  %355 = vrot.lane.b32.xlu0 %v348, 1
  %v356 = vpop.permute.xlu0 %355
  %v357 = vsel %vm301, %v350, %v352
  %v358 = vsel %vm301, %v352, %v354
  %v359 = vsel %vm301, %v354, %v356
  %v365 = vmul.f32 %v337, %v350
  %v366 = vmul.f32 %v338, %v357
  %v367 = vmul.f32 %v339, %v358
  %v368 = vmul.f32 %v340, %v359
  %v369 = vmul.f32 %v341, %v356
  %375 = vrot.lane.b32.xlu0 %v365, 127
  %v376 = vpop.permute.xlu0 %375
  %377 = vrot.lane.b32.xlu0 %v366, 127
  %v378 = vpop.permute.xlu0 %377
  %379 = vrot.lane.b32.xlu0 %v367, 127
  %v380 = vpop.permute.xlu0 %379
  %381 = vrot.lane.b32.xlu0 %v368, 127
  %v382 = vpop.permute.xlu0 %381
  %383 = vrot.lane.b32.xlu0 %v369, 127
  %v384 = vpop.permute.xlu0 %383
  %v385 = vsel %vm272, %v376, %v378
  %v386 = vsel %vm272, %v378, %v380
  %v387 = vsel %vm272, %v380, %v382
  %v388 = vsel %vm272, %v382, %v384
  %393 = vst [vmem:[#allocation3 + $0xa0] sm:$0xff] %v385
  %394 = vst [vmem:[#allocation3 + $0xa8] sm:$0xff] %v386
  %395 = vst [vmem:[#allocation3 + $0xb0] sm:$0xff] %v387
  %396 = vst [vmem:[#allocation3 + $0xb8] sm:$0xff] %v388
  %v397 = vld [vmem:[#allocation2 + $0x8] sm:$0xff]
  %v398 = vld [vmem:[#allocation2 + $0x10] sm:$0xff]
  %v399 = vld [vmem:[#allocation2 + $0x18] sm:$0xff]
  %v400 = vld [vmem:[#allocation2 + $0x20] sm:$0xff]
  %v401 = vld [vmem:[#allocation2 + $0x28] sm:$0xff]
  %s402 = scalar_lea.vmem %s13, 6
  %v403 = vld [vmem:[%s402] ss:$8 sm:$0xf]
  %v405 = vperm.slane %v403, 0
  %v406 = vperm.slane %v403, 1
  %v407 = vperm.slane %v403, 2
  %v408 = vperm.slane %v403, 3
  %409 = vrot.lane.b32.xlu0 %v405, 15
  %v410 = vpop.permute.xlu0 %409
  %411 = vrot.lane.b32.xlu0 %v406, 15
  %v412 = vpop.permute.xlu0 %411
  %413 = vrot.lane.b32.xlu0 %v407, 15
  %v414 = vpop.permute.xlu0 %413
  %415 = vrot.lane.b32.xlu0 %v408, 15
  %v416 = vpop.permute.xlu0 %415
  %v417 = vsel %vm239, %v410, %v412
  %v418 = vsel %vm239, %v412, %v414
  %v419 = vsel %vm239, %v414, %v416
  %v425 = vmul.f32 %v397, %v410
  %v426 = vmul.f32 %v398, %v417
  %v427 = vmul.f32 %v399, %v418
  %v428 = vmul.f32 %v400, %v419
  %v429 = vmul.f32 %v401, %v416
  %435 = vrot.lane.b32.xlu0 %v425, 113
  %v436 = vpop.permute.xlu0 %435
  %437 = vrot.lane.b32.xlu0 %v426, 113
  %v438 = vpop.permute.xlu0 %437
  %439 = vrot.lane.b32.xlu0 %v427, 113
  %v440 = vpop.permute.xlu0 %439
  %441 = vrot.lane.b32.xlu0 %v428, 113
  %v442 = vpop.permute.xlu0 %441
  %443 = vrot.lane.b32.xlu0 %v429, 113
  %v444 = vpop.permute.xlu0 %443
  %v445 = vsel %vm210, %v436, %v438
  %v446 = vsel %vm210, %v438, %v440
  %v447 = vsel %vm210, %v440, %v442
  %v448 = vsel %vm210, %v442, %v444
  %453 = vst [vmem:[#allocation3 + $0xc0] sm:$0xff] %v445
  %454 = vst [vmem:[#allocation3 + $0xc8] sm:$0xff] %v446
  %455 = vst [vmem:[#allocation3 + $0xd0] sm:$0xff] %v447
  %456 = vst [vmem:[#allocation3 + $0xd8] sm:$0xff] %v448
  %v457 = vld [vmem:[#allocation2 + $0x8] sm:$0xff]
  %v458 = vld [vmem:[#allocation2 + $0x10] sm:$0xff]
  %v459 = vld [vmem:[#allocation2 + $0x18] sm:$0xff]
  %v460 = vld [vmem:[#allocation2 + $0x20] sm:$0xff]
  %v461 = vld [vmem:[#allocation2 + $0x28] sm:$0xff]
  %s462 = scalar_lea.vmem %s13, 7
  %v463 = vld [vmem:[%s462] ss:$8 sm:$0xf]
  %v465 = vperm.slane %v463, 0
  %v466 = vperm.slane %v463, 1
  %v467 = vperm.slane %v463, 2
  %v468 = vperm.slane %v463, 3
  %469 = vrot.lane.b32.xlu0 %v465, 16
  %v470 = vpop.permute.xlu0 %469
  %471 = vrot.lane.b32.xlu0 %v466, 16
  %v472 = vpop.permute.xlu0 %471
  %473 = vrot.lane.b32.xlu0 %v467, 16
  %v474 = vpop.permute.xlu0 %473
  %475 = vrot.lane.b32.xlu0 %v468, 16
  %v476 = vpop.permute.xlu0 %475
  %v477 = vsel %vm177, %v470, %v472
  %v478 = vsel %vm177, %v472, %v474
  %v479 = vsel %vm177, %v474, %v476
  %v485 = vmul.f32 %v457, %v470
  %v486 = vmul.f32 %v458, %v477
  %v487 = vmul.f32 %v459, %v478
  %v488 = vmul.f32 %v460, %v479
  %v489 = vmul.f32 %v461, %v476
  %495 = vrot.lane.b32.xlu0 %v485, 112
  %v496 = vpop.permute.xlu0 %495
  %497 = vrot.lane.b32.xlu0 %v486, 112
  %v498 = vpop.permute.xlu0 %497
  %499 = vrot.lane.b32.xlu0 %v487, 112
  %v500 = vpop.permute.xlu0 %499
  %501 = vrot.lane.b32.xlu0 %v488, 112
  %v502 = vpop.permute.xlu0 %501
  %503 = vrot.lane.b32.xlu0 %v489, 112
  %v504 = vpop.permute.xlu0 %503
  %v505 = vsel %vm148, %v496, %v498
  %v506 = vsel %vm148, %v498, %v500
  %v507 = vsel %vm148, %v500, %v502
  %v508 = vsel %vm148, %v502, %v504
  %513 = vst [vmem:[#allocation3 + $0xe0] sm:$0xff] %v505
  %514 = vst [vmem:[#allocation3 + $0xe8] sm:$0xff] %v506
  %515 = vst [vmem:[#allocation3 + $0xf0] sm:$0xff] %v507
  %516 = vst [vmem:[#allocation3 + $0xf8] sm:$0xff] %v508
  %v517 = vld [vmem:[#allocation2 + $0x8] sm:$0xff]
  %v518 = vld [vmem:[#allocation2 + $0x10] sm:$0xff]
  %v519 = vld [vmem:[#allocation2 + $0x18] sm:$0xff]
  %v520 = vld [vmem:[#allocation2 + $0x20] sm:$0xff]
  %v521 = vld [vmem:[#allocation2 + $0x28] sm:$0xff]
  %s522 = scalar_lea.vmem %s13, 32
  %v523 = vld [vmem:[%s522] ss:$8 sm:$0xf]
  %v525 = vperm.slane %v523, 0
  %v526 = vperm.slane %v523, 1
  %v527 = vperm.slane %v523, 2
  %v528 = vperm.slane %v523, 3
  %529 = vrot.lane.b32.xlu0 %v525, 17
  %v530 = vpop.permute.xlu0 %529
  %531 = vrot.lane.b32.xlu0 %v526, 17
  %v532 = vpop.permute.xlu0 %531
  %533 = vrot.lane.b32.xlu0 %v527, 17
  %v534 = vpop.permute.xlu0 %533
  %535 = vrot.lane.b32.xlu0 %v528, 17
  %v536 = vpop.permute.xlu0 %535
  %v537 = vsel %vm115, %v530, %v532
  %v538 = vsel %vm115, %v532, %v534
  %v539 = vsel %vm115, %v534, %v536
  %v545 = vmul.f32 %v517, %v530
  %v546 = vmul.f32 %v518, %v537
  %v547 = vmul.f32 %v519, %v538
  %v548 = vmul.f32 %v520, %v539
  %v549 = vmul.f32 %v521, %v536
  %555 = vrot.lane.b32.xlu0 %v545, 111
  %v556 = vpop.permute.xlu0 %555
  %557 = vrot.lane.b32.xlu0 %v546, 111
  %v558 = vpop.permute.xlu0 %557
  %559 = vrot.lane.b32.xlu0 %v547, 111
  %v560 = vpop.permute.xlu0 %559
  %561 = vrot.lane.b32.xlu0 %v548, 111
  %v562 = vpop.permute.xlu0 %561
  %563 = vrot.lane.b32.xlu0 %v549, 111
  %v564 = vpop.permute.xlu0 %563
  %v565 = vsel %vm86, %v556, %v558
  %v566 = vsel %vm86, %v558, %v560
  %v567 = vsel %vm86, %v560, %v562
  %v568 = vsel %vm86, %v562, %v564
  %573 = vst [vmem:[#allocation3 + $0x100] sm:$0xff] %v565
  %574 = vst [vmem:[#allocation3 + $0x108] sm:$0xff] %v566
  %575 = vst [vmem:[#allocation3 + $0x110] sm:$0xff] %v567
  %576 = vst [vmem:[#allocation3 + $0x118] sm:$0xff] %v568
  %v577 = vld [vmem:[%s1] sm:$0xff]
  %v578 = vld [vmem:[#allocation3] sm:$0xff]
  %v579 = vld [vmem:[#allocation3 + $0x8] sm:$0xff]
  %v580 = vld [vmem:[#allocation3 + $0x10] sm:$0xff]
  %v581 = vld [vmem:[#allocation3 + $0x18] sm:$0xff]
  %v582 = vld [vmem:[#allocation3 + $0x20] sm:$0xff]
  %v583 = vld [vmem:[#allocation3 + $0x28] sm:$0xff]
  %v584 = vld [vmem:[#allocation3 + $0x30] sm:$0xff]
  %v585 = vld [vmem:[#allocation3 + $0x38] sm:$0xff]
  %v586 = vld [vmem:[#allocation3 + $0x40] sm:$0xff]
  %v587 = vld [vmem:[#allocation3 + $0x48] sm:$0xff]
  %v588 = vld [vmem:[#allocation3 + $0x50] sm:$0xff]
  %v589 = vld [vmem:[#allocation3 + $0x58] sm:$0xff]
  %v590 = vld [vmem:[#allocation3 + $0x60] sm:$0xff]
  %v591 = vld [vmem:[#allocation3 + $0x68] sm:$0xff]
  %v592 = vld [vmem:[#allocation3 + $0x70] sm:$0xff]
  %v593 = vld [vmem:[#allocation3 + $0x78] sm:$0xff]
  %v594 = vld [vmem:[#allocation3 + $0x80] sm:$0xff]
  %v595 = vld [vmem:[#allocation3 + $0x88] sm:$0xff]
  %v596 = vld [vmem:[#allocation3 + $0x90] sm:$0xff]
  %v597 = vld [vmem:[#allocation3 + $0x98] sm:$0xff]
  %v598 = vld [vmem:[#allocation3 + $0xa0] sm:$0xff]
  %v599 = vld [vmem:[#allocation3 + $0xa8] sm:$0xff]
  %v600 = vld [vmem:[#allocation3 + $0xb0] sm:$0xff]
  %v601 = vld [vmem:[#allocation3 + $0xb8] sm:$0xff]
  %v602 = vld [vmem:[#allocation3 + $0xc0] sm:$0xff]
  %v603 = vld [vmem:[#allocation3 + $0xc8] sm:$0xff]
  %v604 = vld [vmem:[#allocation3 + $0xd0] sm:$0xff]
  %v605 = vld [vmem:[#allocation3 + $0xd8] sm:$0xff]
  %v606 = vld [vmem:[#allocation3 + $0xe0] sm:$0xff]
  %v607 = vld [vmem:[#allocation3 + $0xe8] sm:$0xff]
  %v608 = vld [vmem:[#allocation3 + $0xf0] sm:$0xff]
  %v609 = vld [vmem:[#allocation3 + $0xf8] sm:$0xff]
  %v610 = vld [vmem:[#allocation3 + $0x100] sm:$0xff]
  %v611 = vld [vmem:[#allocation3 + $0x108] sm:$0xff]
  %v612 = vld [vmem:[#allocation3 + $0x110] sm:$0xff]
  %v613 = vld [vmem:[#allocation3 + $0x118] sm:$0xff]
  %v614 = vld [vmem:[%s2] sm:$0xff]
  %616 = vset.pattern.permute.xlu0 0
  %617 = vperm.xlu0 %616, %v614
  %v618 = vpop.permute.xlu0 %617
  %vm620 = vcmask 588800
  %v622 = vsel %vm620, %v577, 0
  %624 = vmatpush.msra.mxu0 0.0
  %625 = vmatpush.msra.mxu0 0.0
  %626 = vmatpush.msra.mxu0 0.0
  %627 = vmatpush.msra.mxu0 0.0
  %628 = vmatpush.msra.mxu0 0.0
  %629 = vmatpush.msra.mxu0 0.0
  %630 = vmatpush.msra.mxu0 0.0
  %631 = vmatpush.msra.mxu0 %v610
  %632 = vmatpush.msra.mxu0 %v606
  %633 = vmatpush.msra.mxu0 %v602
  %634 = vmatpush.msra.mxu0 %v598
  %635 = vmatpush.msra.mxu0 %v594
  %636 = vmatpush.msra.mxu0 %v590
  %637 = vmatpush.msra.mxu0 %v586
  %638 = vmatpush.msra.mxu0 %v582
  %639 = vmatpush.msra.mxu0 %v578
  %640 = vmatmul.f32.gmra.mxu0 %v622
  %v641 = vpop.f32.mrf.mxu0
  %v642 = vadd.f32 %v618, %v641
  %643 = vdwg.mxu0
  %644 = vmatpush.msra.mxu0 0.0
  %645 = vmatpush.msra.mxu0 0.0
  %646 = vmatpush.msra.mxu0 0.0
  %647 = vmatpush.msra.mxu0 0.0
  %648 = vmatpush.msra.mxu0 0.0
  %649 = vmatpush.msra.mxu0 0.0
  %650 = vmatpush.msra.mxu0 0.0
  %651 = vmatpush.msra.mxu0 %v611
  %652 = vmatpush.msra.mxu0 %v607
  %653 = vmatpush.msra.mxu0 %v603
  %654 = vmatpush.msra.mxu0 %v599
  %655 = vmatpush.msra.mxu0 %v595
  %656 = vmatpush.msra.mxu0 %v591
  %657 = vmatpush.msra.mxu0 %v587
  %658 = vmatpush.msra.mxu0 %v583
  %659 = vmatpush.msra.mxu0 %v579
  %660 = vmatmul.f32.gmra.mxu0 %v622
  %v661 = vpop.f32.mrf.mxu0
  %v662 = vadd.f32 %v618, %v661
  %663 = vdwg.mxu0
  %664 = vmatpush.msra.mxu0 0.0
  %665 = vmatpush.msra.mxu0 0.0
  %666 = vmatpush.msra.mxu0 0.0
  %667 = vmatpush.msra.mxu0 0.0
  %668 = vmatpush.msra.mxu0 0.0
  %669 = vmatpush.msra.mxu0 0.0
  %670 = vmatpush.msra.mxu0 0.0
  %671 = vmatpush.msra.mxu0 %v612
  %672 = vmatpush.msra.mxu0 %v608
  %673 = vmatpush.msra.mxu0 %v604
  %674 = vmatpush.msra.mxu0 %v600
  %675 = vmatpush.msra.mxu0 %v596
  %676 = vmatpush.msra.mxu0 %v592
  %677 = vmatpush.msra.mxu0 %v588
  %678 = vmatpush.msra.mxu0 %v584
  %679 = vmatpush.msra.mxu0 %v580
  %680 = vmatmul.f32.gmra.mxu0 %v622
  %v681 = vpop.f32.mrf.mxu0
  %v682 = vadd.f32 %v618, %v681
  %683 = vdwg.mxu0
  %684 = vmatpush.msra.mxu0 0.0
  %685 = vmatpush.msra.mxu0 0.0
  %686 = vmatpush.msra.mxu0 0.0
  %687 = vmatpush.msra.mxu0 0.0
  %688 = vmatpush.msra.mxu0 0.0
  %689 = vmatpush.msra.mxu0 0.0
  %690 = vmatpush.msra.mxu0 0.0
  %691 = vmatpush.msra.mxu0 %v613
  %692 = vmatpush.msra.mxu0 %v609
  %693 = vmatpush.msra.mxu0 %v605
  %694 = vmatpush.msra.mxu0 %v601
  %695 = vmatpush.msra.mxu0 %v597
  %696 = vmatpush.msra.mxu0 %v593
  %697 = vmatpush.msra.mxu0 %v589
  %698 = vmatpush.msra.mxu0 %v585
  %699 = vmatpush.msra.mxu0 %v581
  %700 = vmatmul.f32.gmra.mxu0 %v622
  %v701 = vpop.f32.mrf.mxu0
  %v702 = vadd.f32 %v618, %v701
  %703 = vdwg.mxu0
  %v704 = vmax.f32 %v642, 0.0
  %v705 = vmax.f32 %v662, 0.0
  %v706 = vmax.f32 %v682, 0.0
  %v707 = vmax.f32 %v702, 0.0
  %708 = vst [vmem:[#allocation2 + $0x8] sm:$0xff] %v704
  %709 = vst [vmem:[#allocation2 + $0x10] sm:$0xff] %v705
  %710 = vst [vmem:[#allocation2 + $0x18] sm:$0xff] %v706
  %711 = vst [vmem:[#allocation2 + $0x20] sm:$0xff] %v707
  %v712 = vld [vmem:[#allocation2] sm:$0xff]
  %v713 = vld [vmem:[#allocation2 + $0x8] sm:$0xff]
  %v714 = vld [vmem:[#allocation2 + $0x10] sm:$0xff]
  %v715 = vld [vmem:[#allocation2 + $0x18] sm:$0xff]
  %v716 = vld [vmem:[#allocation2 + $0x20] sm:$0xff]
  %v717 = vld [vmem:[%s13] ss:$8 sm:$0xf]
  %v719 = vperm.slane %v717, 0
  %v720 = vperm.slane %v717, 1
  %v721 = vperm.slane %v717, 2
  %v722 = vperm.slane %v717, 3
  %723 = vrot.lane.b32.xlu0 %v719, 111
  %v724 = vpop.permute.xlu0 %723
  %725 = vrot.lane.b32.xlu0 %v720, 111
  %v726 = vpop.permute.xlu0 %725
  %727 = vrot.lane.b32.xlu0 %v721, 111
  %v728 = vpop.permute.xlu0 %727
  %729 = vrot.lane.b32.xlu0 %v722, 111
  %v730 = vpop.permute.xlu0 %729
  %v731 = vsel %vm86, %v724, %v726
  %v732 = vsel %vm86, %v726, %v728
  %v733 = vsel %vm86, %v728, %v730
  %v739 = vmul.f32 %v712, %v724
  %v740 = vmul.f32 %v713, %v731
  %v741 = vmul.f32 %v714, %v732
  %v742 = vmul.f32 %v715, %v733
  %v743 = vmul.f32 %v716, %v730
  %749 = vrot.lane.b32.xlu0 %v739, 17
  %v750 = vpop.permute.xlu0 %749
  %751 = vrot.lane.b32.xlu0 %v740, 17
  %v752 = vpop.permute.xlu0 %751
  %753 = vrot.lane.b32.xlu0 %v741, 17
  %v754 = vpop.permute.xlu0 %753
  %755 = vrot.lane.b32.xlu0 %v742, 17
  %v756 = vpop.permute.xlu0 %755
  %757 = vrot.lane.b32.xlu0 %v743, 17
  %v758 = vpop.permute.xlu0 %757
  %v759 = vsel %vm115, %v750, %v752
  %v760 = vsel %vm115, %v752, %v754
  %v761 = vsel %vm115, %v754, %v756
  %v762 = vsel %vm115, %v756, %v758
  %767 = vst [vmem:[#allocation3] sm:$0xff] %v759
  %768 = vst [vmem:[#allocation3 + $0x8] sm:$0xff] %v760
  %769 = vst [vmem:[#allocation3 + $0x10] sm:$0xff] %v761
  %770 = vst [vmem:[#allocation3 + $0x18] sm:$0xff] %v762
  %v771 = vld [vmem:[#allocation2] sm:$0xff]
  %v772 = vld [vmem:[#allocation2 + $0x8] sm:$0xff]
  %v773 = vld [vmem:[#allocation2 + $0x10] sm:$0xff]
  %v774 = vld [vmem:[#allocation2 + $0x18] sm:$0xff]
  %v775 = vld [vmem:[#allocation2 + $0x20] sm:$0xff]
  %v776 = vld [vmem:[%s133] ss:$8 sm:$0xf]
  %v778 = vperm.slane %v776, 0
  %v779 = vperm.slane %v776, 1
  %v780 = vperm.slane %v776, 2
  %v781 = vperm.slane %v776, 3
  %782 = vrot.lane.b32.xlu0 %v778, 112
  %v783 = vpop.permute.xlu0 %782
  %784 = vrot.lane.b32.xlu0 %v779, 112
  %v785 = vpop.permute.xlu0 %784
  %786 = vrot.lane.b32.xlu0 %v780, 112
  %v787 = vpop.permute.xlu0 %786
  %788 = vrot.lane.b32.xlu0 %v781, 112
  %v789 = vpop.permute.xlu0 %788
  %v790 = vsel %vm148, %v783, %v785
  %v791 = vsel %vm148, %v785, %v787
  %v792 = vsel %vm148, %v787, %v789
  %v798 = vmul.f32 %v771, %v783
  %v799 = vmul.f32 %v772, %v790
  %v800 = vmul.f32 %v773, %v791
  %v801 = vmul.f32 %v774, %v792
  %v802 = vmul.f32 %v775, %v789
  %808 = vrot.lane.b32.xlu0 %v798, 16
  %v809 = vpop.permute.xlu0 %808
  %810 = vrot.lane.b32.xlu0 %v799, 16
  %v811 = vpop.permute.xlu0 %810
  %812 = vrot.lane.b32.xlu0 %v800, 16
  %v813 = vpop.permute.xlu0 %812
  %814 = vrot.lane.b32.xlu0 %v801, 16
  %v815 = vpop.permute.xlu0 %814
  %816 = vrot.lane.b32.xlu0 %v802, 16
  %v817 = vpop.permute.xlu0 %816
  %v818 = vsel %vm177, %v809, %v811
  %v819 = vsel %vm177, %v811, %v813
  %v820 = vsel %vm177, %v813, %v815
  %v821 = vsel %vm177, %v815, %v817
  %826 = vst [vmem:[#allocation3 + $0x20] sm:$0xff] %v818
  %827 = vst [vmem:[#allocation3 + $0x28] sm:$0xff] %v819
  %828 = vst [vmem:[#allocation3 + $0x30] sm:$0xff] %v820
  %829 = vst [vmem:[#allocation3 + $0x38] sm:$0xff] %v821
  %v830 = vld [vmem:[#allocation2] sm:$0xff]
  %v831 = vld [vmem:[#allocation2 + $0x8] sm:$0xff]
  %v832 = vld [vmem:[#allocation2 + $0x10] sm:$0xff]
  %v833 = vld [vmem:[#allocation2 + $0x18] sm:$0xff]
  %v834 = vld [vmem:[#allocation2 + $0x20] sm:$0xff]
  %v835 = vld [vmem:[%s195] ss:$8 sm:$0xf]
  %v837 = vperm.slane %v835, 0
  %v838 = vperm.slane %v835, 1
  %v839 = vperm.slane %v835, 2
  %v840 = vperm.slane %v835, 3
  %841 = vrot.lane.b32.xlu0 %v837, 113
  %v842 = vpop.permute.xlu0 %841
  %843 = vrot.lane.b32.xlu0 %v838, 113
  %v844 = vpop.permute.xlu0 %843
  %845 = vrot.lane.b32.xlu0 %v839, 113
  %v846 = vpop.permute.xlu0 %845
  %847 = vrot.lane.b32.xlu0 %v840, 113
  %v848 = vpop.permute.xlu0 %847
  %v849 = vsel %vm210, %v842, %v844
  %v850 = vsel %vm210, %v844, %v846
  %v851 = vsel %vm210, %v846, %v848
  %v857 = vmul.f32 %v830, %v842
  %v858 = vmul.f32 %v831, %v849
  %v859 = vmul.f32 %v832, %v850
  %v860 = vmul.f32 %v833, %v851
  %v861 = vmul.f32 %v834, %v848
  %867 = vrot.lane.b32.xlu0 %v857, 15
  %v868 = vpop.permute.xlu0 %867
  %869 = vrot.lane.b32.xlu0 %v858, 15
  %v870 = vpop.permute.xlu0 %869
  %871 = vrot.lane.b32.xlu0 %v859, 15
  %v872 = vpop.permute.xlu0 %871
  %873 = vrot.lane.b32.xlu0 %v860, 15
  %v874 = vpop.permute.xlu0 %873
  %875 = vrot.lane.b32.xlu0 %v861, 15
  %v876 = vpop.permute.xlu0 %875
  %v877 = vsel %vm239, %v868, %v870
  %v878 = vsel %vm239, %v870, %v872
  %v879 = vsel %vm239, %v872, %v874
  %v880 = vsel %vm239, %v874, %v876
  %885 = vst [vmem:[#allocation3 + $0x40] sm:$0xff] %v877
  %886 = vst [vmem:[#allocation3 + $0x48] sm:$0xff] %v878
  %887 = vst [vmem:[#allocation3 + $0x50] sm:$0xff] %v879
  %888 = vst [vmem:[#allocation3 + $0x58] sm:$0xff] %v880
  %v889 = vld [vmem:[#allocation2] sm:$0xff]
  %v890 = vld [vmem:[#allocation2 + $0x8] sm:$0xff]
  %v891 = vld [vmem:[#allocation2 + $0x10] sm:$0xff]
  %v892 = vld [vmem:[#allocation2 + $0x18] sm:$0xff]
  %v893 = vld [vmem:[#allocation2 + $0x20] sm:$0xff]
  %v894 = vld [vmem:[%s257] ss:$8 sm:$0xf]
  %v896 = vperm.slane %v894, 0
  %v897 = vperm.slane %v894, 1
  %v898 = vperm.slane %v894, 2
  %v899 = vperm.slane %v894, 3
  %900 = vrot.lane.b32.xlu0 %v896, 127
  %v901 = vpop.permute.xlu0 %900
  %902 = vrot.lane.b32.xlu0 %v897, 127
  %v903 = vpop.permute.xlu0 %902
  %904 = vrot.lane.b32.xlu0 %v898, 127
  %v905 = vpop.permute.xlu0 %904
  %906 = vrot.lane.b32.xlu0 %v899, 127
  %v907 = vpop.permute.xlu0 %906
  %v908 = vsel %vm272, %v901, %v903
  %v909 = vsel %vm272, %v903, %v905
  %v910 = vsel %vm272, %v905, %v907
  %v916 = vmul.f32 %v889, %v901
  %v917 = vmul.f32 %v890, %v908
  %v918 = vmul.f32 %v891, %v909
  %v919 = vmul.f32 %v892, %v910
  %v920 = vmul.f32 %v893, %v907
  %926 = vrot.lane.b32.xlu0 %v916, 1
  %v927 = vpop.permute.xlu0 %926
  %928 = vrot.lane.b32.xlu0 %v917, 1
  %v929 = vpop.permute.xlu0 %928
  %930 = vrot.lane.b32.xlu0 %v918, 1
  %v931 = vpop.permute.xlu0 %930
  %932 = vrot.lane.b32.xlu0 %v919, 1
  %v933 = vpop.permute.xlu0 %932
  %934 = vrot.lane.b32.xlu0 %v920, 1
  %v935 = vpop.permute.xlu0 %934
  %v936 = vsel %vm301, %v927, %v929
  %v937 = vsel %vm301, %v929, %v931
  %v938 = vsel %vm301, %v931, %v933
  %v939 = vsel %vm301, %v933, %v935
  %944 = vst [vmem:[#allocation3 + $0x60] sm:$0xff] %v936
  %945 = vst [vmem:[#allocation3 + $0x68] sm:$0xff] %v937
  %946 = vst [vmem:[#allocation3 + $0x70] sm:$0xff] %v938
  %947 = vst [vmem:[#allocation3 + $0x78] sm:$0xff] %v939
  %v948 = vld [vmem:[#allocation2 + $0x8] sm:$0xff]
  %v949 = vld [vmem:[#allocation2 + $0x10] sm:$0xff]
  %v950 = vld [vmem:[#allocation2 + $0x18] sm:$0xff]
  %v951 = vld [vmem:[#allocation2 + $0x20] sm:$0xff]
  %v952 = vld [vmem:[%s318] ss:$8 sm:$0xf]
  %v954 = vperm.slane %v952, 0
  %v955 = vperm.slane %v952, 1
  %v956 = vperm.slane %v952, 2
  %v957 = vperm.slane %v952, 3
  %v962 = vmul.f32 %v948, %v954
  %v963 = vmul.f32 %v949, %v955
  %v964 = vmul.f32 %v950, %v956
  %v965 = vmul.f32 %v951, %v957
  %966 = vst [vmem:[#allocation3 + $0x80] sm:$0xff] %v962
  %967 = vst [vmem:[#allocation3 + $0x88] sm:$0xff] %v963
  %968 = vst [vmem:[#allocation3 + $0x90] sm:$0xff] %v964
  %969 = vst [vmem:[#allocation3 + $0x98] sm:$0xff] %v965
  %v970 = vld [vmem:[#allocation2 + $0x8] sm:$0xff]
  %v971 = vld [vmem:[#allocation2 + $0x10] sm:$0xff]
  %v972 = vld [vmem:[#allocation2 + $0x18] sm:$0xff]
  %v973 = vld [vmem:[#allocation2 + $0x20] sm:$0xff]
  %v974 = vld [vmem:[#allocation2 + $0x28] sm:$0xff]
  %v975 = vld [vmem:[%s342] ss:$8 sm:$0xf]
  %v977 = vperm.slane %v975, 0
  %v978 = vperm.slane %v975, 1
  %v979 = vperm.slane %v975, 2
  %v980 = vperm.slane %v975, 3
  %981 = vrot.lane.b32.xlu0 %v977, 1
  %v982 = vpop.permute.xlu0 %981
  %983 = vrot.lane.b32.xlu0 %v978, 1
  %v984 = vpop.permute.xlu0 %983
  %985 = vrot.lane.b32.xlu0 %v979, 1
  %v986 = vpop.permute.xlu0 %985
  %987 = vrot.lane.b32.xlu0 %v980, 1
  %v988 = vpop.permute.xlu0 %987
  %v989 = vsel %vm301, %v982, %v984
  %v990 = vsel %vm301, %v984, %v986
  %v991 = vsel %vm301, %v986, %v988
  %v997 = vmul.f32 %v970, %v982
  %v998 = vmul.f32 %v971, %v989
  %v999 = vmul.f32 %v972, %v990
  %v1000 = vmul.f32 %v973, %v991
  %v1001 = vmul.f32 %v974, %v988
  %1007 = vrot.lane.b32.xlu0 %v997, 127
  %v1008 = vpop.permute.xlu0 %1007
  %1009 = vrot.lane.b32.xlu0 %v998, 127
  %v1010 = vpop.permute.xlu0 %1009
  %1011 = vrot.lane.b32.xlu0 %v999, 127
  %v1012 = vpop.permute.xlu0 %1011
  %1013 = vrot.lane.b32.xlu0 %v1000, 127
  %v1014 = vpop.permute.xlu0 %1013
  %1015 = vrot.lane.b32.xlu0 %v1001, 127
  %v1016 = vpop.permute.xlu0 %1015
  %v1017 = vsel %vm272, %v1008, %v1010
  %v1018 = vsel %vm272, %v1010, %v1012
  %v1019 = vsel %vm272, %v1012, %v1014
  %v1020 = vsel %vm272, %v1014, %v1016
  %1025 = vst [vmem:[#allocation3 + $0xa0] sm:$0xff] %v1017
  %1026 = vst [vmem:[#allocation3 + $0xa8] sm:$0xff] %v1018
  %1027 = vst [vmem:[#allocation3 + $0xb0] sm:$0xff] %v1019
  %1028 = vst [vmem:[#allocation3 + $0xb8] sm:$0xff] %v1020
  %v1029 = vld [vmem:[#allocation2 + $0x8] sm:$0xff]
  %v1030 = vld [vmem:[#allocation2 + $0x10] sm:$0xff]
  %v1031 = vld [vmem:[#allocation2 + $0x18] sm:$0xff]
  %v1032 = vld [vmem:[#allocation2 + $0x20] sm:$0xff]
  %v1033 = vld [vmem:[#allocation2 + $0x28] sm:$0xff]
  %v1034 = vld [vmem:[%s402] ss:$8 sm:$0xf]
  %v1036 = vperm.slane %v1034, 0
  %v1037 = vperm.slane %v1034, 1
  %v1038 = vperm.slane %v1034, 2
  %v1039 = vperm.slane %v1034, 3
  %1040 = vrot.lane.b32.xlu0 %v1036, 15
  %v1041 = vpop.permute.xlu0 %1040
  %1042 = vrot.lane.b32.xlu0 %v1037, 15
  %v1043 = vpop.permute.xlu0 %1042
  %1044 = vrot.lane.b32.xlu0 %v1038, 15
  %v1045 = vpop.permute.xlu0 %1044
  %1046 = vrot.lane.b32.xlu0 %v1039, 15
  %v1047 = vpop.permute.xlu0 %1046
  %v1048 = vsel %vm239, %v1041, %v1043
  %v1049 = vsel %vm239, %v1043, %v1045
  %v1050 = vsel %vm239, %v1045, %v1047
  %v1056 = vmul.f32 %v1029, %v1041
  %v1057 = vmul.f32 %v1030, %v1048
  %v1058 = vmul.f32 %v1031, %v1049
  %v1059 = vmul.f32 %v1032, %v1050
  %v1060 = vmul.f32 %v1033, %v1047
  %1066 = vrot.lane.b32.xlu0 %v1056, 113
  %v1067 = vpop.permute.xlu0 %1066
  %1068 = vrot.lane.b32.xlu0 %v1057, 113
  %v1069 = vpop.permute.xlu0 %1068
  %1070 = vrot.lane.b32.xlu0 %v1058, 113
  %v1071 = vpop.permute.xlu0 %1070
  %1072 = vrot.lane.b32.xlu0 %v1059, 113
  %v1073 = vpop.permute.xlu0 %1072
  %1074 = vrot.lane.b32.xlu0 %v1060, 113
  %v1075 = vpop.permute.xlu0 %1074
  %v1076 = vsel %vm210, %v1067, %v1069
  %v1077 = vsel %vm210, %v1069, %v1071
  %v1078 = vsel %vm210, %v1071, %v1073
  %v1079 = vsel %vm210, %v1073, %v1075
  %1084 = vst [vmem:[#allocation3 + $0xc0] sm:$0xff] %v1076
  %1085 = vst [vmem:[#allocation3 + $0xc8] sm:$0xff] %v1077
  %1086 = vst [vmem:[#allocation3 + $0xd0] sm:$0xff] %v1078
  %1087 = vst [vmem:[#allocation3 + $0xd8] sm:$0xff] %v1079
  %v1088 = vld [vmem:[#allocation2 + $0x8] sm:$0xff]
  %v1089 = vld [vmem:[#allocation2 + $0x10] sm:$0xff]
  %v1090 = vld [vmem:[#allocation2 + $0x18] sm:$0xff]
  %v1091 = vld [vmem:[#allocation2 + $0x20] sm:$0xff]
  %v1092 = vld [vmem:[#allocation2 + $0x28] sm:$0xff]
  %v1093 = vld [vmem:[%s462] ss:$8 sm:$0xf]
  %v1095 = vperm.slane %v1093, 0
  %v1096 = vperm.slane %v1093, 1
  %v1097 = vperm.slane %v1093, 2
  %v1098 = vperm.slane %v1093, 3
  %1099 = vrot.lane.b32.xlu0 %v1095, 16
  %v1100 = vpop.permute.xlu0 %1099
  %1101 = vrot.lane.b32.xlu0 %v1096, 16
  %v1102 = vpop.permute.xlu0 %1101
  %1103 = vrot.lane.b32.xlu0 %v1097, 16
  %v1104 = vpop.permute.xlu0 %1103
  %1105 = vrot.lane.b32.xlu0 %v1098, 16
  %v1106 = vpop.permute.xlu0 %1105
  %v1107 = vsel %vm177, %v1100, %v1102
  %v1108 = vsel %vm177, %v1102, %v1104
  %v1109 = vsel %vm177, %v1104, %v1106
  %v1115 = vmul.f32 %v1088, %v1100
  %v1116 = vmul.f32 %v1089, %v1107
  %v1117 = vmul.f32 %v1090, %v1108
  %v1118 = vmul.f32 %v1091, %v1109
  %v1119 = vmul.f32 %v1092, %v1106
  %1125 = vrot.lane.b32.xlu0 %v1115, 112
  %v1126 = vpop.permute.xlu0 %1125
  %1127 = vrot.lane.b32.xlu0 %v1116, 112
  %v1128 = vpop.permute.xlu0 %1127
  %1129 = vrot.lane.b32.xlu0 %v1117, 112
  %v1130 = vpop.permute.xlu0 %1129
  %1131 = vrot.lane.b32.xlu0 %v1118, 112
  %v1132 = vpop.permute.xlu0 %1131
  %1133 = vrot.lane.b32.xlu0 %v1119, 112
  %v1134 = vpop.permute.xlu0 %1133
  %v1135 = vsel %vm148, %v1126, %v1128
  %v1136 = vsel %vm148, %v1128, %v1130
  %v1137 = vsel %vm148, %v1130, %v1132
  %v1138 = vsel %vm148, %v1132, %v1134
  %1143 = vst [vmem:[#allocation3 + $0xe0] sm:$0xff] %v1135
  %1144 = vst [vmem:[#allocation3 + $0xe8] sm:$0xff] %v1136
  %1145 = vst [vmem:[#allocation3 + $0xf0] sm:$0xff] %v1137
  %1146 = vst [vmem:[#allocation3 + $0xf8] sm:$0xff] %v1138
  %v1147 = vld [vmem:[#allocation2 + $0x8] sm:$0xff]
  %v1148 = vld [vmem:[#allocation2 + $0x10] sm:$0xff]
  %v1149 = vld [vmem:[#allocation2 + $0x18] sm:$0xff]
  %v1150 = vld [vmem:[#allocation2 + $0x20] sm:$0xff]
  %v1151 = vld [vmem:[#allocation2 + $0x28] sm:$0xff]
  %v1152 = vld [vmem:[%s522] ss:$8 sm:$0xf]
  %v1154 = vperm.slane %v1152, 0
  %v1155 = vperm.slane %v1152, 1
  %v1156 = vperm.slane %v1152, 2
  %v1157 = vperm.slane %v1152, 3
  %1158 = vrot.lane.b32.xlu0 %v1154, 17
  %v1159 = vpop.permute.xlu0 %1158
  %1160 = vrot.lane.b32.xlu0 %v1155, 17
  %v1161 = vpop.permute.xlu0 %1160
  %1162 = vrot.lane.b32.xlu0 %v1156, 17
  %v1163 = vpop.permute.xlu0 %1162
  %1164 = vrot.lane.b32.xlu0 %v1157, 17
  %v1165 = vpop.permute.xlu0 %1164
  %v1166 = vsel %vm115, %v1159, %v1161
  %v1167 = vsel %vm115, %v1161, %v1163
  %v1168 = vsel %vm115, %v1163, %v1165
  %v1174 = vmul.f32 %v1147, %v1159
  %v1175 = vmul.f32 %v1148, %v1166
  %v1176 = vmul.f32 %v1149, %v1167
  %v1177 = vmul.f32 %v1150, %v1168
  %v1178 = vmul.f32 %v1151, %v1165
  %1184 = vrot.lane.b32.xlu0 %v1174, 111
  %v1185 = vpop.permute.xlu0 %1184
  %1186 = vrot.lane.b32.xlu0 %v1175, 111
  %v1187 = vpop.permute.xlu0 %1186
  %1188 = vrot.lane.b32.xlu0 %v1176, 111
  %v1189 = vpop.permute.xlu0 %1188
  %1190 = vrot.lane.b32.xlu0 %v1177, 111
  %v1191 = vpop.permute.xlu0 %1190
  %1192 = vrot.lane.b32.xlu0 %v1178, 111
  %v1193 = vpop.permute.xlu0 %1192
  %v1194 = vsel %vm86, %v1185, %v1187
  %v1195 = vsel %vm86, %v1187, %v1189
  %v1196 = vsel %vm86, %v1189, %v1191
  %v1197 = vsel %vm86, %v1191, %v1193
  %1202 = vst [vmem:[#allocation3 + $0x100] sm:$0xff] %v1194
  %1203 = vst [vmem:[#allocation3 + $0x108] sm:$0xff] %v1195
  %1204 = vst [vmem:[#allocation3 + $0x110] sm:$0xff] %v1196
  %1205 = vst [vmem:[#allocation3 + $0x118] sm:$0xff] %v1197
  %v1206 = vld [vmem:[%s3] sm:$0xff]
  %v1207 = vld [vmem:[#allocation3] sm:$0xff]
  %v1208 = vld [vmem:[#allocation3 + $0x8] sm:$0xff]
  %v1209 = vld [vmem:[#allocation3 + $0x10] sm:$0xff]
  %v1210 = vld [vmem:[#allocation3 + $0x18] sm:$0xff]
  %v1211 = vld [vmem:[#allocation3 + $0x20] sm:$0xff]
  %v1212 = vld [vmem:[#allocation3 + $0x28] sm:$0xff]
  %v1213 = vld [vmem:[#allocation3 + $0x30] sm:$0xff]
  %v1214 = vld [vmem:[#allocation3 + $0x38] sm:$0xff]
  %v1215 = vld [vmem:[#allocation3 + $0x40] sm:$0xff]
  %v1216 = vld [vmem:[#allocation3 + $0x48] sm:$0xff]
  %v1217 = vld [vmem:[#allocation3 + $0x50] sm:$0xff]
  %v1218 = vld [vmem:[#allocation3 + $0x58] sm:$0xff]
  %v1219 = vld [vmem:[#allocation3 + $0x60] sm:$0xff]
  %v1220 = vld [vmem:[#allocation3 + $0x68] sm:$0xff]
  %v1221 = vld [vmem:[#allocation3 + $0x70] sm:$0xff]
  %v1222 = vld [vmem:[#allocation3 + $0x78] sm:$0xff]
  %v1223 = vld [vmem:[#allocation3 + $0x80] sm:$0xff]
  %v1224 = vld [vmem:[#allocation3 + $0x88] sm:$0xff]
  %v1225 = vld [vmem:[#allocation3 + $0x90] sm:$0xff]
  %v1226 = vld [vmem:[#allocation3 + $0x98] sm:$0xff]
  %v1227 = vld [vmem:[#allocation3 + $0xa0] sm:$0xff]
  %v1228 = vld [vmem:[#allocation3 + $0xa8] sm:$0xff]
  %v1229 = vld [vmem:[#allocation3 + $0xb0] sm:$0xff]
  %v1230 = vld [vmem:[#allocation3 + $0xb8] sm:$0xff]
  %v1231 = vld [vmem:[#allocation3 + $0xc0] sm:$0xff]
  %v1232 = vld [vmem:[#allocation3 + $0xc8] sm:$0xff]
  %v1233 = vld [vmem:[#allocation3 + $0xd0] sm:$0xff]
  %v1234 = vld [vmem:[#allocation3 + $0xd8] sm:$0xff]
  %v1235 = vld [vmem:[#allocation3 + $0xe0] sm:$0xff]
  %v1236 = vld [vmem:[#allocation3 + $0xe8] sm:$0xff]
  %v1237 = vld [vmem:[#allocation3 + $0xf0] sm:$0xff]
  %v1238 = vld [vmem:[#allocation3 + $0xf8] sm:$0xff]
  %v1239 = vld [vmem:[#allocation3 + $0x100] sm:$0xff]
  %v1240 = vld [vmem:[#allocation3 + $0x108] sm:$0xff]
  %v1241 = vld [vmem:[#allocation3 + $0x110] sm:$0xff]
  %v1242 = vld [vmem:[#allocation3 + $0x118] sm:$0xff]
  %v1243 = vld [vmem:[%s4] sm:$0xff]
  %1245 = vset.pattern.permute.xlu0 0
  %1246 = vperm.xlu0 %1245, %v1243
  %v1247 = vpop.permute.xlu0 %1246
  %v1250 = vsel %vm620, %v1206, 0
  %1252 = vmatpush.msra.mxu0 0.0
  %1253 = vmatpush.msra.mxu0 0.0
  %1254 = vmatpush.msra.mxu0 0.0
  %1255 = vmatpush.msra.mxu0 0.0
  %1256 = vmatpush.msra.mxu0 0.0
  %1257 = vmatpush.msra.mxu0 0.0
  %1258 = vmatpush.msra.mxu0 0.0
  %1259 = vmatpush.msra.mxu0 %v1239
  %1260 = vmatpush.msra.mxu0 %v1235
  %1261 = vmatpush.msra.mxu0 %v1231
  %1262 = vmatpush.msra.mxu0 %v1227
  %1263 = vmatpush.msra.mxu0 %v1223
  %1264 = vmatpush.msra.mxu0 %v1219
  %1265 = vmatpush.msra.mxu0 %v1215
  %1266 = vmatpush.msra.mxu0 %v1211
  %1267 = vmatpush.msra.mxu0 %v1207
  %1268 = vmatmul.f32.gmra.mxu0 %v1250
  %v1269 = vpop.f32.mrf.mxu0
  %v1270 = vadd.f32 %v1247, %v1269
  %1271 = vdwg.mxu0
  %1272 = vmatpush.msra.mxu0 0.0
  %1273 = vmatpush.msra.mxu0 0.0
  %1274 = vmatpush.msra.mxu0 0.0
  %1275 = vmatpush.msra.mxu0 0.0
  %1276 = vmatpush.msra.mxu0 0.0
  %1277 = vmatpush.msra.mxu0 0.0
  %1278 = vmatpush.msra.mxu0 0.0
  %1279 = vmatpush.msra.mxu0 %v1240
  %1280 = vmatpush.msra.mxu0 %v1236
  %1281 = vmatpush.msra.mxu0 %v1232
  %1282 = vmatpush.msra.mxu0 %v1228
  %1283 = vmatpush.msra.mxu0 %v1224
  %1284 = vmatpush.msra.mxu0 %v1220
  %1285 = vmatpush.msra.mxu0 %v1216
  %1286 = vmatpush.msra.mxu0 %v1212
  %1287 = vmatpush.msra.mxu0 %v1208
  %1288 = vmatmul.f32.gmra.mxu0 %v1250
  %v1289 = vpop.f32.mrf.mxu0
  %v1290 = vadd.f32 %v1247, %v1289
  %1291 = vdwg.mxu0
  %1292 = vmatpush.msra.mxu0 0.0
  %1293 = vmatpush.msra.mxu0 0.0
  %1294 = vmatpush.msra.mxu0 0.0
  %1295 = vmatpush.msra.mxu0 0.0
  %1296 = vmatpush.msra.mxu0 0.0
  %1297 = vmatpush.msra.mxu0 0.0
  %1298 = vmatpush.msra.mxu0 0.0
  %1299 = vmatpush.msra.mxu0 %v1241
  %1300 = vmatpush.msra.mxu0 %v1237
  %1301 = vmatpush.msra.mxu0 %v1233
  %1302 = vmatpush.msra.mxu0 %v1229
  %1303 = vmatpush.msra.mxu0 %v1225
  %1304 = vmatpush.msra.mxu0 %v1221
  %1305 = vmatpush.msra.mxu0 %v1217
  %1306 = vmatpush.msra.mxu0 %v1213
  %1307 = vmatpush.msra.mxu0 %v1209
  %1308 = vmatmul.f32.gmra.mxu0 %v1250
  %v1309 = vpop.f32.mrf.mxu0
  %v1310 = vadd.f32 %v1247, %v1309
  %1311 = vdwg.mxu0
  %1312 = vmatpush.msra.mxu0 0.0
  %1313 = vmatpush.msra.mxu0 0.0
  %1314 = vmatpush.msra.mxu0 0.0
  %1315 = vmatpush.msra.mxu0 0.0
  %1316 = vmatpush.msra.mxu0 0.0
  %1317 = vmatpush.msra.mxu0 0.0
  %1318 = vmatpush.msra.mxu0 0.0
  %1319 = vmatpush.msra.mxu0 %v1242
  %1320 = vmatpush.msra.mxu0 %v1238
  %1321 = vmatpush.msra.mxu0 %v1234
  %1322 = vmatpush.msra.mxu0 %v1230
  %1323 = vmatpush.msra.mxu0 %v1226
  %1324 = vmatpush.msra.mxu0 %v1222
  %1325 = vmatpush.msra.mxu0 %v1218
  %1326 = vmatpush.msra.mxu0 %v1214
  %1327 = vmatpush.msra.mxu0 %v1210
  %1328 = vmatmul.f32.gmra.mxu0 %v1250
  %v1329 = vpop.f32.mrf.mxu0
  %v1330 = vadd.f32 %v1247, %v1329
  %1331 = vdwg.mxu0
  %v1332 = vld [vmem:[%s5] sm:$0xff]
  %v1333 = vld [vmem:[%s6] sm:$0xff]
  %1335 = vset.pattern.permute.xlu0 0
  %1336 = vperm.xlu0 %1335, %v1333
  %v1337 = vpop.permute.xlu0 %1336
  %vm1339 = vcmask 64512
  %v1341 = vsel %vm1339, %v1332, 0
  %1343 = vmatpush.msra.mxu0 0.0
  %1344 = vmatpush.msra.mxu0 0.0
  %1345 = vmatpush.msra.mxu0 0.0
  %1346 = vmatpush.msra.mxu0 0.0
  %1347 = vmatpush.msra.mxu0 0.0
  %1348 = vmatpush.msra.mxu0 0.0
  %1349 = vmatpush.msra.mxu0 0.0
  %1350 = vmatpush.msra.mxu0 0.0
  %1351 = vmatpush.msra.mxu0 0.0
  %1352 = vmatpush.msra.mxu0 0.0
  %1353 = vmatpush.msra.mxu0 0.0
  %1354 = vmatpush.msra.mxu0 0.0
  %1355 = vmatpush.msra.mxu0 0.0
  %1356 = vmatpush.msra.mxu0 0.0
  %1357 = vmatpush.msra.mxu0 0.0
  %1358 = vmatpush.msra.mxu0 %v59
  %1359 = vmatmul.f32.gmra.mxu0 %v1341
  %v1360 = vpop.f32.mrf.mxu0
  %v1361 = vadd.f32 %v1337, %v1360
  %1362 = vdwg.mxu0
  %1363 = vmatpush.msra.mxu0 0.0
  %1364 = vmatpush.msra.mxu0 0.0
  %1365 = vmatpush.msra.mxu0 0.0
  %1366 = vmatpush.msra.mxu0 0.0
  %1367 = vmatpush.msra.mxu0 0.0
  %1368 = vmatpush.msra.mxu0 0.0
  %1369 = vmatpush.msra.mxu0 0.0
  %1370 = vmatpush.msra.mxu0 0.0
  %1371 = vmatpush.msra.mxu0 0.0
  %1372 = vmatpush.msra.mxu0 0.0
  %1373 = vmatpush.msra.mxu0 0.0
  %1374 = vmatpush.msra.mxu0 0.0
  %1375 = vmatpush.msra.mxu0 0.0
  %1376 = vmatpush.msra.mxu0 0.0
  %1377 = vmatpush.msra.mxu0 0.0
  %1378 = vmatpush.msra.mxu0 %v60
  %1379 = vmatmul.f32.gmra.mxu0 %v1341
  %v1380 = vpop.f32.mrf.mxu0
  %v1381 = vadd.f32 %v1337, %v1380
  %1382 = vdwg.mxu0
  %1383 = vmatpush.msra.mxu0 0.0
  %1384 = vmatpush.msra.mxu0 0.0
  %1385 = vmatpush.msra.mxu0 0.0
  %1386 = vmatpush.msra.mxu0 0.0
  %1387 = vmatpush.msra.mxu0 0.0
  %1388 = vmatpush.msra.mxu0 0.0
  %1389 = vmatpush.msra.mxu0 0.0
  %1390 = vmatpush.msra.mxu0 0.0
  %1391 = vmatpush.msra.mxu0 0.0
  %1392 = vmatpush.msra.mxu0 0.0
  %1393 = vmatpush.msra.mxu0 0.0
  %1394 = vmatpush.msra.mxu0 0.0
  %1395 = vmatpush.msra.mxu0 0.0
  %1396 = vmatpush.msra.mxu0 0.0
  %1397 = vmatpush.msra.mxu0 0.0
  %1398 = vmatpush.msra.mxu0 %v61
  %1399 = vmatmul.f32.gmra.mxu0 %v1341
  %v1400 = vpop.f32.mrf.mxu0
  %v1401 = vadd.f32 %v1337, %v1400
  %1402 = vdwg.mxu0
  %1403 = vmatpush.msra.mxu0 0.0
  %1404 = vmatpush.msra.mxu0 0.0
  %1405 = vmatpush.msra.mxu0 0.0
  %1406 = vmatpush.msra.mxu0 0.0
  %1407 = vmatpush.msra.mxu0 0.0
  %1408 = vmatpush.msra.mxu0 0.0
  %1409 = vmatpush.msra.mxu0 0.0
  %1410 = vmatpush.msra.mxu0 0.0
  %1411 = vmatpush.msra.mxu0 0.0
  %1412 = vmatpush.msra.mxu0 0.0
  %1413 = vmatpush.msra.mxu0 0.0
  %1414 = vmatpush.msra.mxu0 0.0
  %1415 = vmatpush.msra.mxu0 0.0
  %1416 = vmatpush.msra.mxu0 0.0
  %1417 = vmatpush.msra.mxu0 0.0
  %1418 = vmatpush.msra.mxu0 %v62
  %1419 = vmatmul.f32.gmra.mxu0 %v1341
  %v1420 = vpop.f32.mrf.mxu0
  %v1421 = vadd.f32 %v1337, %v1420
  %1422 = vdwg.mxu0
  %v1423 = vadd.f32 %v1270, %v1361
  %v1424 = vadd.f32 %v1290, %v1381
  %v1425 = vadd.f32 %v1310, %v1401
  %v1426 = vadd.f32 %v1330, %v1421
  %v1427 = vmax.f32 %v1423, 0.0
  %v1428 = vmax.f32 %v1424, 0.0
  %v1429 = vmax.f32 %v1425, 0.0
  %v1430 = vmax.f32 %v1426, 0.0
  %1431 = vst [vmem:[#allocation2 + $0x8] sm:$0xff] %v1427
  %1432 = vst [vmem:[#allocation2 + $0x10] sm:$0xff] %v1428
  %1433 = vst [vmem:[#allocation2 + $0x18] sm:$0xff] %v1429
  %1434 = vst [vmem:[#allocation2 + $0x20] sm:$0xff] %v1430
  %v1435 = vld [vmem:[#allocation2] sm:$0xff]
  %v1436 = vld [vmem:[#allocation2 + $0x8] sm:$0xff]
  %v1437 = vld [vmem:[#allocation2 + $0x10] sm:$0xff]
  %v1438 = vld [vmem:[#allocation2 + $0x18] sm:$0xff]
  %v1439 = vld [vmem:[#allocation2 + $0x20] sm:$0xff]
  %v1440 = vld [vmem:[%s13] ss:$8 sm:$0xf]
  %v1442 = vperm.slane %v1440, 0
  %v1443 = vperm.slane %v1440, 1
  %v1444 = vperm.slane %v1440, 2
  %v1445 = vperm.slane %v1440, 3
  %1446 = vrot.lane.b32.xlu0 %v1442, 111
  %v1447 = vpop.permute.xlu0 %1446
  %1448 = vrot.lane.b32.xlu0 %v1443, 111
  %v1449 = vpop.permute.xlu0 %1448
  %1450 = vrot.lane.b32.xlu0 %v1444, 111
  %v1451 = vpop.permute.xlu0 %1450
  %1452 = vrot.lane.b32.xlu0 %v1445, 111
  %v1453 = vpop.permute.xlu0 %1452
  %v1454 = vsel %vm86, %v1447, %v1449
  %v1455 = vsel %vm86, %v1449, %v1451
  %v1456 = vsel %vm86, %v1451, %v1453
  %v1462 = vmul.f32 %v1435, %v1447
  %v1463 = vmul.f32 %v1436, %v1454
  %v1464 = vmul.f32 %v1437, %v1455
  %v1465 = vmul.f32 %v1438, %v1456
  %v1466 = vmul.f32 %v1439, %v1453
  %1472 = vrot.lane.b32.xlu0 %v1462, 17
  %v1473 = vpop.permute.xlu0 %1472
  %1474 = vrot.lane.b32.xlu0 %v1463, 17
  %v1475 = vpop.permute.xlu0 %1474
  %1476 = vrot.lane.b32.xlu0 %v1464, 17
  %v1477 = vpop.permute.xlu0 %1476
  %1478 = vrot.lane.b32.xlu0 %v1465, 17
  %v1479 = vpop.permute.xlu0 %1478
  %1480 = vrot.lane.b32.xlu0 %v1466, 17
  %v1481 = vpop.permute.xlu0 %1480
  %v1482 = vsel %vm115, %v1473, %v1475
  %v1483 = vsel %vm115, %v1475, %v1477
  %v1484 = vsel %vm115, %v1477, %v1479
  %v1485 = vsel %vm115, %v1479, %v1481
  %1490 = vst [vmem:[#allocation3] sm:$0xff] %v1482
  %1491 = vst [vmem:[#allocation3 + $0x8] sm:$0xff] %v1483
  %1492 = vst [vmem:[#allocation3 + $0x10] sm:$0xff] %v1484
  %1493 = vst [vmem:[#allocation3 + $0x18] sm:$0xff] %v1485
  %v1494 = vld [vmem:[#allocation2] sm:$0xff]
  %v1495 = vld [vmem:[#allocation2 + $0x8] sm:$0xff]
  %v1496 = vld [vmem:[#allocation2 + $0x10] sm:$0xff]
  %v1497 = vld [vmem:[#allocation2 + $0x18] sm:$0xff]
  %v1498 = vld [vmem:[#allocation2 + $0x20] sm:$0xff]
  %v1499 = vld [vmem:[%s133] ss:$8 sm:$0xf]
  %v1501 = vperm.slane %v1499, 0
  %v1502 = vperm.slane %v1499, 1
  %v1503 = vperm.slane %v1499, 2
  %v1504 = vperm.slane %v1499, 3
  %1505 = vrot.lane.b32.xlu0 %v1501, 112
  %v1506 = vpop.permute.xlu0 %1505
  %1507 = vrot.lane.b32.xlu0 %v1502, 112
  %v1508 = vpop.permute.xlu0 %1507
  %1509 = vrot.lane.b32.xlu0 %v1503, 112
  %v1510 = vpop.permute.xlu0 %1509
  %1511 = vrot.lane.b32.xlu0 %v1504, 112
  %v1512 = vpop.permute.xlu0 %1511
  %v1513 = vsel %vm148, %v1506, %v1508
  %v1514 = vsel %vm148, %v1508, %v1510
  %v1515 = vsel %vm148, %v1510, %v1512
  %v1521 = vmul.f32 %v1494, %v1506
  %v1522 = vmul.f32 %v1495, %v1513
  %v1523 = vmul.f32 %v1496, %v1514
  %v1524 = vmul.f32 %v1497, %v1515
  %v1525 = vmul.f32 %v1498, %v1512
  %1531 = vrot.lane.b32.xlu0 %v1521, 16
  %v1532 = vpop.permute.xlu0 %1531
  %1533 = vrot.lane.b32.xlu0 %v1522, 16
  %v1534 = vpop.permute.xlu0 %1533
  %1535 = vrot.lane.b32.xlu0 %v1523, 16
  %v1536 = vpop.permute.xlu0 %1535
  %1537 = vrot.lane.b32.xlu0 %v1524, 16
  %v1538 = vpop.permute.xlu0 %1537
  %1539 = vrot.lane.b32.xlu0 %v1525, 16
  %v1540 = vpop.permute.xlu0 %1539
  %v1541 = vsel %vm177, %v1532, %v1534
  %v1542 = vsel %vm177, %v1534, %v1536
  %v1543 = vsel %vm177, %v1536, %v1538
  %v1544 = vsel %vm177, %v1538, %v1540
  %1549 = vst [vmem:[#allocation3 + $0x20] sm:$0xff] %v1541
  %1550 = vst [vmem:[#allocation3 + $0x28] sm:$0xff] %v1542
  %1551 = vst [vmem:[#allocation3 + $0x30] sm:$0xff] %v1543
  %1552 = vst [vmem:[#allocation3 + $0x38] sm:$0xff] %v1544
  %v1553 = vld [vmem:[#allocation2] sm:$0xff]
  %v1554 = vld [vmem:[#allocation2 + $0x8] sm:$0xff]
  %v1555 = vld [vmem:[#allocation2 + $0x10] sm:$0xff]
  %v1556 = vld [vmem:[#allocation2 + $0x18] sm:$0xff]
  %v1557 = vld [vmem:[#allocation2 + $0x20] sm:$0xff]
  %v1558 = vld [vmem:[%s195] ss:$8 sm:$0xf]
  %v1560 = vperm.slane %v1558, 0
  %v1561 = vperm.slane %v1558, 1
  %v1562 = vperm.slane %v1558, 2
  %v1563 = vperm.slane %v1558, 3
  %1564 = vrot.lane.b32.xlu0 %v1560, 113
  %v1565 = vpop.permute.xlu0 %1564
  %1566 = vrot.lane.b32.xlu0 %v1561, 113
  %v1567 = vpop.permute.xlu0 %1566
  %1568 = vrot.lane.b32.xlu0 %v1562, 113
  %v1569 = vpop.permute.xlu0 %1568
  %1570 = vrot.lane.b32.xlu0 %v1563, 113
  %v1571 = vpop.permute.xlu0 %1570
  %v1572 = vsel %vm210, %v1565, %v1567
  %v1573 = vsel %vm210, %v1567, %v1569
  %v1574 = vsel %vm210, %v1569, %v1571
  %v1580 = vmul.f32 %v1553, %v1565
  %v1581 = vmul.f32 %v1554, %v1572
  %v1582 = vmul.f32 %v1555, %v1573
  %v1583 = vmul.f32 %v1556, %v1574
  %v1584 = vmul.f32 %v1557, %v1571
  %1590 = vrot.lane.b32.xlu0 %v1580, 15
  %v1591 = vpop.permute.xlu0 %1590
  %1592 = vrot.lane.b32.xlu0 %v1581, 15
  %v1593 = vpop.permute.xlu0 %1592
  %1594 = vrot.lane.b32.xlu0 %v1582, 15
  %v1595 = vpop.permute.xlu0 %1594
  %1596 = vrot.lane.b32.xlu0 %v1583, 15
  %v1597 = vpop.permute.xlu0 %1596
  %1598 = vrot.lane.b32.xlu0 %v1584, 15
  %v1599 = vpop.permute.xlu0 %1598
  %v1600 = vsel %vm239, %v1591, %v1593
  %v1601 = vsel %vm239, %v1593, %v1595
  %v1602 = vsel %vm239, %v1595, %v1597
  %v1603 = vsel %vm239, %v1597, %v1599
  %1608 = vst [vmem:[#allocation3 + $0x40] sm:$0xff] %v1600
  %1609 = vst [vmem:[#allocation3 + $0x48] sm:$0xff] %v1601
  %1610 = vst [vmem:[#allocation3 + $0x50] sm:$0xff] %v1602
  %1611 = vst [vmem:[#allocation3 + $0x58] sm:$0xff] %v1603
  %v1612 = vld [vmem:[#allocation2] sm:$0xff]
  %v1613 = vld [vmem:[#allocation2 + $0x8] sm:$0xff]
  %v1614 = vld [vmem:[#allocation2 + $0x10] sm:$0xff]
  %v1615 = vld [vmem:[#allocation2 + $0x18] sm:$0xff]
  %v1616 = vld [vmem:[#allocation2 + $0x20] sm:$0xff]
  %v1617 = vld [vmem:[%s257] ss:$8 sm:$0xf]
  %v1619 = vperm.slane %v1617, 0
  %v1620 = vperm.slane %v1617, 1
  %v1621 = vperm.slane %v1617, 2
  %v1622 = vperm.slane %v1617, 3
  %1623 = vrot.lane.b32.xlu0 %v1619, 127
  %v1624 = vpop.permute.xlu0 %1623
  %1625 = vrot.lane.b32.xlu0 %v1620, 127
  %v1626 = vpop.permute.xlu0 %1625
  %1627 = vrot.lane.b32.xlu0 %v1621, 127
  %v1628 = vpop.permute.xlu0 %1627
  %1629 = vrot.lane.b32.xlu0 %v1622, 127
  %v1630 = vpop.permute.xlu0 %1629
  %v1631 = vsel %vm272, %v1624, %v1626
  %v1632 = vsel %vm272, %v1626, %v1628
  %v1633 = vsel %vm272, %v1628, %v1630
  %v1639 = vmul.f32 %v1612, %v1624
  %v1640 = vmul.f32 %v1613, %v1631
  %v1641 = vmul.f32 %v1614, %v1632
  %v1642 = vmul.f32 %v1615, %v1633
  %v1643 = vmul.f32 %v1616, %v1630
  %1649 = vrot.lane.b32.xlu0 %v1639, 1
  %v1650 = vpop.permute.xlu0 %1649
  %1651 = vrot.lane.b32.xlu0 %v1640, 1
  %v1652 = vpop.permute.xlu0 %1651
  %1653 = vrot.lane.b32.xlu0 %v1641, 1
  %v1654 = vpop.permute.xlu0 %1653
  %1655 = vrot.lane.b32.xlu0 %v1642, 1
  %v1656 = vpop.permute.xlu0 %1655
  %1657 = vrot.lane.b32.xlu0 %v1643, 1
  %v1658 = vpop.permute.xlu0 %1657
  %v1659 = vsel %vm301, %v1650, %v1652
  %v1660 = vsel %vm301, %v1652, %v1654
  %v1661 = vsel %vm301, %v1654, %v1656
  %v1662 = vsel %vm301, %v1656, %v1658
  %1667 = vst [vmem:[#allocation3 + $0x60] sm:$0xff] %v1659
  %1668 = vst [vmem:[#allocation3 + $0x68] sm:$0xff] %v1660
  %1669 = vst [vmem:[#allocation3 + $0x70] sm:$0xff] %v1661
  %1670 = vst [vmem:[#allocation3 + $0x78] sm:$0xff] %v1662
  %v1671 = vld [vmem:[#allocation2 + $0x8] sm:$0xff]
  %v1672 = vld [vmem:[#allocation2 + $0x10] sm:$0xff]
  %v1673 = vld [vmem:[#allocation2 + $0x18] sm:$0xff]
  %v1674 = vld [vmem:[#allocation2 + $0x20] sm:$0xff]
  %v1675 = vld [vmem:[%s318] ss:$8 sm:$0xf]
  %v1677 = vperm.slane %v1675, 0
  %v1678 = vperm.slane %v1675, 1
  %v1679 = vperm.slane %v1675, 2
  %v1680 = vperm.slane %v1675, 3
  %v1685 = vmul.f32 %v1671, %v1677
  %v1686 = vmul.f32 %v1672, %v1678
  %v1687 = vmul.f32 %v1673, %v1679
  %v1688 = vmul.f32 %v1674, %v1680
  %1689 = vst [vmem:[#allocation3 + $0x80] sm:$0xff] %v1685
  %1690 = vst [vmem:[#allocation3 + $0x88] sm:$0xff] %v1686
  %1691 = vst [vmem:[#allocation3 + $0x90] sm:$0xff] %v1687
  %1692 = vst [vmem:[#allocation3 + $0x98] sm:$0xff] %v1688
  %v1693 = vld [vmem:[#allocation2 + $0x8] sm:$0xff]
  %v1694 = vld [vmem:[#allocation2 + $0x10] sm:$0xff]
  %v1695 = vld [vmem:[#allocation2 + $0x18] sm:$0xff]
  %v1696 = vld [vmem:[#allocation2 + $0x20] sm:$0xff]
  %v1697 = vld [vmem:[#allocation2 + $0x28] sm:$0xff]
  %v1698 = vld [vmem:[%s342] ss:$8 sm:$0xf]
  %v1700 = vperm.slane %v1698, 0
  %v1701 = vperm.slane %v1698, 1
  %v1702 = vperm.slane %v1698, 2
  %v1703 = vperm.slane %v1698, 3
  %1704 = vrot.lane.b32.xlu0 %v1700, 1
  %v1705 = vpop.permute.xlu0 %1704
  %1706 = vrot.lane.b32.xlu0 %v1701, 1
  %v1707 = vpop.permute.xlu0 %1706
  %1708 = vrot.lane.b32.xlu0 %v1702, 1
  %v1709 = vpop.permute.xlu0 %1708
  %1710 = vrot.lane.b32.xlu0 %v1703, 1
  %v1711 = vpop.permute.xlu0 %1710
  %v1712 = vsel %vm301, %v1705, %v1707
  %v1713 = vsel %vm301, %v1707, %v1709
  %v1714 = vsel %vm301, %v1709, %v1711
  %v1720 = vmul.f32 %v1693, %v1705
  %v1721 = vmul.f32 %v1694, %v1712
  %v1722 = vmul.f32 %v1695, %v1713
  %v1723 = vmul.f32 %v1696, %v1714
  %v1724 = vmul.f32 %v1697, %v1711
  %1730 = vrot.lane.b32.xlu0 %v1720, 127
  %v1731 = vpop.permute.xlu0 %1730
  %1732 = vrot.lane.b32.xlu0 %v1721, 127
  %v1733 = vpop.permute.xlu0 %1732
  %1734 = vrot.lane.b32.xlu0 %v1722, 127
  %v1735 = vpop.permute.xlu0 %1734
  %1736 = vrot.lane.b32.xlu0 %v1723, 127
  %v1737 = vpop.permute.xlu0 %1736
  %1738 = vrot.lane.b32.xlu0 %v1724, 127
  %v1739 = vpop.permute.xlu0 %1738
  %v1740 = vsel %vm272, %v1731, %v1733
  %v1741 = vsel %vm272, %v1733, %v1735
  %v1742 = vsel %vm272, %v1735, %v1737
  %v1743 = vsel %vm272, %v1737, %v1739
  %1748 = vst [vmem:[#allocation3 + $0xa0] sm:$0xff] %v1740
  %1749 = vst [vmem:[#allocation3 + $0xa8] sm:$0xff] %v1741
  %1750 = vst [vmem:[#allocation3 + $0xb0] sm:$0xff] %v1742
  %1751 = vst [vmem:[#allocation3 + $0xb8] sm:$0xff] %v1743
  %v1752 = vld [vmem:[#allocation2 + $0x8] sm:$0xff]
  %v1753 = vld [vmem:[#allocation2 + $0x10] sm:$0xff]
  %v1754 = vld [vmem:[#allocation2 + $0x18] sm:$0xff]
  %v1755 = vld [vmem:[#allocation2 + $0x20] sm:$0xff]
  %v1756 = vld [vmem:[#allocation2 + $0x28] sm:$0xff]
  %v1757 = vld [vmem:[%s402] ss:$8 sm:$0xf]
  %v1759 = vperm.slane %v1757, 0
  %v1760 = vperm.slane %v1757, 1
  %v1761 = vperm.slane %v1757, 2
  %v1762 = vperm.slane %v1757, 3
  %1763 = vrot.lane.b32.xlu0 %v1759, 15
  %v1764 = vpop.permute.xlu0 %1763
  %1765 = vrot.lane.b32.xlu0 %v1760, 15
  %v1766 = vpop.permute.xlu0 %1765
  %1767 = vrot.lane.b32.xlu0 %v1761, 15
  %v1768 = vpop.permute.xlu0 %1767
  %1769 = vrot.lane.b32.xlu0 %v1762, 15
  %v1770 = vpop.permute.xlu0 %1769
  %v1771 = vsel %vm239, %v1764, %v1766
  %v1772 = vsel %vm239, %v1766, %v1768
  %v1773 = vsel %vm239, %v1768, %v1770
  %v1779 = vmul.f32 %v1752, %v1764
  %v1780 = vmul.f32 %v1753, %v1771
  %v1781 = vmul.f32 %v1754, %v1772
  %v1782 = vmul.f32 %v1755, %v1773
  %v1783 = vmul.f32 %v1756, %v1770
  %1789 = vrot.lane.b32.xlu0 %v1779, 113
  %v1790 = vpop.permute.xlu0 %1789
  %1791 = vrot.lane.b32.xlu0 %v1780, 113
  %v1792 = vpop.permute.xlu0 %1791
  %1793 = vrot.lane.b32.xlu0 %v1781, 113
  %v1794 = vpop.permute.xlu0 %1793
  %1795 = vrot.lane.b32.xlu0 %v1782, 113
  %v1796 = vpop.permute.xlu0 %1795
  %1797 = vrot.lane.b32.xlu0 %v1783, 113
  %v1798 = vpop.permute.xlu0 %1797
  %v1799 = vsel %vm210, %v1790, %v1792
  %v1800 = vsel %vm210, %v1792, %v1794
  %v1801 = vsel %vm210, %v1794, %v1796
  %v1802 = vsel %vm210, %v1796, %v1798
  %1807 = vst [vmem:[#allocation3 + $0xc0] sm:$0xff] %v1799
  %1808 = vst [vmem:[#allocation3 + $0xc8] sm:$0xff] %v1800
  %1809 = vst [vmem:[#allocation3 + $0xd0] sm:$0xff] %v1801
  %1810 = vst [vmem:[#allocation3 + $0xd8] sm:$0xff] %v1802
  %v1811 = vld [vmem:[#allocation2 + $0x8] sm:$0xff]
  %v1812 = vld [vmem:[#allocation2 + $0x10] sm:$0xff]
  %v1813 = vld [vmem:[#allocation2 + $0x18] sm:$0xff]
  %v1814 = vld [vmem:[#allocation2 + $0x20] sm:$0xff]
  %v1815 = vld [vmem:[#allocation2 + $0x28] sm:$0xff]
  %v1816 = vld [vmem:[%s462] ss:$8 sm:$0xf]
  %v1818 = vperm.slane %v1816, 0
  %v1819 = vperm.slane %v1816, 1
  %v1820 = vperm.slane %v1816, 2
  %v1821 = vperm.slane %v1816, 3
  %1822 = vrot.lane.b32.xlu0 %v1818, 16
  %v1823 = vpop.permute.xlu0 %1822
  %1824 = vrot.lane.b32.xlu0 %v1819, 16
  %v1825 = vpop.permute.xlu0 %1824
  %1826 = vrot.lane.b32.xlu0 %v1820, 16
  %v1827 = vpop.permute.xlu0 %1826
  %1828 = vrot.lane.b32.xlu0 %v1821, 16
  %v1829 = vpop.permute.xlu0 %1828
  %v1830 = vsel %vm177, %v1823, %v1825
  %v1831 = vsel %vm177, %v1825, %v1827
  %v1832 = vsel %vm177, %v1827, %v1829
  %v1838 = vmul.f32 %v1811, %v1823
  %v1839 = vmul.f32 %v1812, %v1830
  %v1840 = vmul.f32 %v1813, %v1831
  %v1841 = vmul.f32 %v1814, %v1832
  %v1842 = vmul.f32 %v1815, %v1829
  %1848 = vrot.lane.b32.xlu0 %v1838, 112
  %v1849 = vpop.permute.xlu0 %1848
  %1850 = vrot.lane.b32.xlu0 %v1839, 112
  %v1851 = vpop.permute.xlu0 %1850
  %1852 = vrot.lane.b32.xlu0 %v1840, 112
  %v1853 = vpop.permute.xlu0 %1852
  %1854 = vrot.lane.b32.xlu0 %v1841, 112
  %v1855 = vpop.permute.xlu0 %1854
  %1856 = vrot.lane.b32.xlu0 %v1842, 112
  %v1857 = vpop.permute.xlu0 %1856
  %v1858 = vsel %vm148, %v1849, %v1851
  %v1859 = vsel %vm148, %v1851, %v1853
  %v1860 = vsel %vm148, %v1853, %v1855
  %v1861 = vsel %vm148, %v1855, %v1857
  %1866 = vst [vmem:[#allocation3 + $0xe0] sm:$0xff] %v1858
  %1867 = vst [vmem:[#allocation3 + $0xe8] sm:$0xff] %v1859
  %1868 = vst [vmem:[#allocation3 + $0xf0] sm:$0xff] %v1860
  %1869 = vst [vmem:[#allocation3 + $0xf8] sm:$0xff] %v1861
  %v1870 = vld [vmem:[#allocation2 + $0x8] sm:$0xff]
  %v1871 = vld [vmem:[#allocation2 + $0x10] sm:$0xff]
  %v1872 = vld [vmem:[#allocation2 + $0x18] sm:$0xff]
  %v1873 = vld [vmem:[#allocation2 + $0x20] sm:$0xff]
  %v1874 = vld [vmem:[#allocation2 + $0x28] sm:$0xff]
  %v1875 = vld [vmem:[%s522] ss:$8 sm:$0xf]
  %v1877 = vperm.slane %v1875, 0
  %v1878 = vperm.slane %v1875, 1
  %v1879 = vperm.slane %v1875, 2
  %v1880 = vperm.slane %v1875, 3
  %1881 = vrot.lane.b32.xlu0 %v1877, 17
  %v1882 = vpop.permute.xlu0 %1881
  %1883 = vrot.lane.b32.xlu0 %v1878, 17
  %v1884 = vpop.permute.xlu0 %1883
  %1885 = vrot.lane.b32.xlu0 %v1879, 17
  %v1886 = vpop.permute.xlu0 %1885
  %1887 = vrot.lane.b32.xlu0 %v1880, 17
  %v1888 = vpop.permute.xlu0 %1887
  %v1889 = vsel %vm115, %v1882, %v1884
  %v1890 = vsel %vm115, %v1884, %v1886
  %v1891 = vsel %vm115, %v1886, %v1888
  %v1897 = vmul.f32 %v1870, %v1882
  %v1898 = vmul.f32 %v1871, %v1889
  %v1899 = vmul.f32 %v1872, %v1890
  %v1900 = vmul.f32 %v1873, %v1891
  %v1901 = vmul.f32 %v1874, %v1888
  %1907 = vrot.lane.b32.xlu0 %v1897, 111
  %v1908 = vpop.permute.xlu0 %1907
  %1909 = vrot.lane.b32.xlu0 %v1898, 111
  %v1910 = vpop.permute.xlu0 %1909
  %1911 = vrot.lane.b32.xlu0 %v1899, 111
  %v1912 = vpop.permute.xlu0 %1911
  %1913 = vrot.lane.b32.xlu0 %v1900, 111
  %v1914 = vpop.permute.xlu0 %1913
  %1915 = vrot.lane.b32.xlu0 %v1901, 111
  %v1916 = vpop.permute.xlu0 %1915
  %v1917 = vsel %vm86, %v1908, %v1910
  %v1918 = vsel %vm86, %v1910, %v1912
  %v1919 = vsel %vm86, %v1912, %v1914
  %v1920 = vsel %vm86, %v1914, %v1916
  %1925 = vst [vmem:[#allocation3 + $0x100] sm:$0xff] %v1917
  %1926 = vst [vmem:[#allocation3 + $0x108] sm:$0xff] %v1918
  %1927 = vst [vmem:[#allocation3 + $0x110] sm:$0xff] %v1919
  %1928 = vst [vmem:[#allocation3 + $0x118] sm:$0xff] %v1920
  %v1929 = vld [vmem:[%s7] sm:$0xff]
  %v1930 = vld [vmem:[#allocation3] sm:$0xff]
  %v1931 = vld [vmem:[#allocation3 + $0x8] sm:$0xff]
  %v1932 = vld [vmem:[#allocation3 + $0x10] sm:$0xff]
  %v1933 = vld [vmem:[#allocation3 + $0x18] sm:$0xff]
  %v1934 = vld [vmem:[#allocation3 + $0x20] sm:$0xff]
  %v1935 = vld [vmem:[#allocation3 + $0x28] sm:$0xff]
  %v1936 = vld [vmem:[#allocation3 + $0x30] sm:$0xff]
  %v1937 = vld [vmem:[#allocation3 + $0x38] sm:$0xff]
  %v1938 = vld [vmem:[#allocation3 + $0x40] sm:$0xff]
  %v1939 = vld [vmem:[#allocation3 + $0x48] sm:$0xff]
  %v1940 = vld [vmem:[#allocation3 + $0x50] sm:$0xff]
  %v1941 = vld [vmem:[#allocation3 + $0x58] sm:$0xff]
  %v1942 = vld [vmem:[#allocation3 + $0x60] sm:$0xff]
  %v1943 = vld [vmem:[#allocation3 + $0x68] sm:$0xff]
  %v1944 = vld [vmem:[#allocation3 + $0x70] sm:$0xff]
  %v1945 = vld [vmem:[#allocation3 + $0x78] sm:$0xff]
  %v1946 = vld [vmem:[#allocation3 + $0x80] sm:$0xff]
  %v1947 = vld [vmem:[#allocation3 + $0x88] sm:$0xff]
  %v1948 = vld [vmem:[#allocation3 + $0x90] sm:$0xff]
  %v1949 = vld [vmem:[#allocation3 + $0x98] sm:$0xff]
  %v1950 = vld [vmem:[#allocation3 + $0xa0] sm:$0xff]
  %v1951 = vld [vmem:[#allocation3 + $0xa8] sm:$0xff]
  %v1952 = vld [vmem:[#allocation3 + $0xb0] sm:$0xff]
  %v1953 = vld [vmem:[#allocation3 + $0xb8] sm:$0xff]
  %v1954 = vld [vmem:[#allocation3 + $0xc0] sm:$0xff]
  %v1955 = vld [vmem:[#allocation3 + $0xc8] sm:$0xff]
  %v1956 = vld [vmem:[#allocation3 + $0xd0] sm:$0xff]
  %v1957 = vld [vmem:[#allocation3 + $0xd8] sm:$0xff]
  %v1958 = vld [vmem:[#allocation3 + $0xe0] sm:$0xff]
  %v1959 = vld [vmem:[#allocation3 + $0xe8] sm:$0xff]
  %v1960 = vld [vmem:[#allocation3 + $0xf0] sm:$0xff]
  %v1961 = vld [vmem:[#allocation3 + $0xf8] sm:$0xff]
  %v1962 = vld [vmem:[#allocation3 + $0x100] sm:$0xff]
  %v1963 = vld [vmem:[#allocation3 + $0x108] sm:$0xff]
  %v1964 = vld [vmem:[#allocation3 + $0x110] sm:$0xff]
  %v1965 = vld [vmem:[#allocation3 + $0x118] sm:$0xff]
  %v1967 = vsel %vm620, %v1929, 0
  %1969 = vmatpush.msra.mxu0 0.0
  %1970 = vmatpush.msra.mxu0 0.0
  %1971 = vmatpush.msra.mxu0 0.0
  %1972 = vmatpush.msra.mxu0 0.0
  %1973 = vmatpush.msra.mxu0 0.0
  %1974 = vmatpush.msra.mxu0 0.0
  %1975 = vmatpush.msra.mxu0 0.0
  %1976 = vmatpush.msra.mxu0 %v1962
  %1977 = vmatpush.msra.mxu0 %v1958
  %1978 = vmatpush.msra.mxu0 %v1954
  %1979 = vmatpush.msra.mxu0 %v1950
  %1980 = vmatpush.msra.mxu0 %v1946
  %1981 = vmatpush.msra.mxu0 %v1942
  %1982 = vmatpush.msra.mxu0 %v1938
  %1983 = vmatpush.msra.mxu0 %v1934
  %1984 = vmatpush.msra.mxu0 %v1930
  %1985 = vmatmul.f32.gmra.mxu0 %v1967
  %v1986 = vpop.f32.mrf.mxu0
  %v1987 = vadd.f32 0.0, %v1986
  %1988 = vdwg.mxu0
  %1989 = vmatpush.msra.mxu0 0.0
  %1990 = vmatpush.msra.mxu0 0.0
  %1991 = vmatpush.msra.mxu0 0.0
  %1992 = vmatpush.msra.mxu0 0.0
  %1993 = vmatpush.msra.mxu0 0.0
  %1994 = vmatpush.msra.mxu0 0.0
  %1995 = vmatpush.msra.mxu0 0.0
  %1996 = vmatpush.msra.mxu0 %v1963
  %1997 = vmatpush.msra.mxu0 %v1959
  %1998 = vmatpush.msra.mxu0 %v1955
  %1999 = vmatpush.msra.mxu0 %v1951
  %2000 = vmatpush.msra.mxu0 %v1947
  %2001 = vmatpush.msra.mxu0 %v1943
  %2002 = vmatpush.msra.mxu0 %v1939
  %2003 = vmatpush.msra.mxu0 %v1935
  %2004 = vmatpush.msra.mxu0 %v1931
  %2005 = vmatmul.f32.gmra.mxu0 %v1967
  %v2006 = vpop.f32.mrf.mxu0
  %v2007 = vadd.f32 0.0, %v2006
  %2008 = vdwg.mxu0
  %2009 = vmatpush.msra.mxu0 0.0
  %2010 = vmatpush.msra.mxu0 0.0
  %2011 = vmatpush.msra.mxu0 0.0
  %2012 = vmatpush.msra.mxu0 0.0
  %2013 = vmatpush.msra.mxu0 0.0
  %2014 = vmatpush.msra.mxu0 0.0
  %2015 = vmatpush.msra.mxu0 0.0
  %2016 = vmatpush.msra.mxu0 %v1964
  %2017 = vmatpush.msra.mxu0 %v1960
  %2018 = vmatpush.msra.mxu0 %v1956
  %2019 = vmatpush.msra.mxu0 %v1952
  %2020 = vmatpush.msra.mxu0 %v1948
  %2021 = vmatpush.msra.mxu0 %v1944
  %2022 = vmatpush.msra.mxu0 %v1940
  %2023 = vmatpush.msra.mxu0 %v1936
  %2024 = vmatpush.msra.mxu0 %v1932
  %2025 = vmatmul.f32.gmra.mxu0 %v1967
  %v2026 = vpop.f32.mrf.mxu0
  %v2027 = vadd.f32 0.0, %v2026
  %2028 = vdwg.mxu0
  %2029 = vmatpush.msra.mxu0 0.0
  %2030 = vmatpush.msra.mxu0 0.0
  %2031 = vmatpush.msra.mxu0 0.0
  %2032 = vmatpush.msra.mxu0 0.0
  %2033 = vmatpush.msra.mxu0 0.0
  %2034 = vmatpush.msra.mxu0 0.0
  %2035 = vmatpush.msra.mxu0 0.0
  %2036 = vmatpush.msra.mxu0 %v1965
  %2037 = vmatpush.msra.mxu0 %v1961
  %2038 = vmatpush.msra.mxu0 %v1957
  %2039 = vmatpush.msra.mxu0 %v1953
  %2040 = vmatpush.msra.mxu0 %v1949
  %2041 = vmatpush.msra.mxu0 %v1945
  %2042 = vmatpush.msra.mxu0 %v1941
  %2043 = vmatpush.msra.mxu0 %v1937
  %2044 = vmatpush.msra.mxu0 %v1933
  %2045 = vmatmul.f32.gmra.mxu0 %v1967
  %v2046 = vpop.f32.mrf.mxu0
  %v2047 = vadd.f32 0.0, %v2046
  %2048 = vdwg.mxu0
  %v2049 = vld [vmem:[%s11] sm:$0xff]
  %v2051 = vsel %vm1339, %v2049, 0
  %2053 = vmatpush.msra.mxu0 0.0
  %2054 = vmatpush.msra.mxu0 0.0
  %2055 = vmatpush.msra.mxu0 0.0
  %2056 = vmatpush.msra.mxu0 0.0
  %2057 = vmatpush.msra.mxu0 0.0
  %2058 = vmatpush.msra.mxu0 0.0
  %2059 = vmatpush.msra.mxu0 0.0
  %2060 = vmatpush.msra.mxu0 0.0
  %2061 = vmatpush.msra.mxu0 0.0
  %2062 = vmatpush.msra.mxu0 0.0
  %2063 = vmatpush.msra.mxu0 0.0
  %2064 = vmatpush.msra.mxu0 0.0
  %2065 = vmatpush.msra.mxu0 0.0
  %2066 = vmatpush.msra.mxu0 0.0
  %2067 = vmatpush.msra.mxu0 0.0
  %2068 = vmatpush.msra.mxu0 %v1427
  %2069 = vmatmul.f32.gmra.mxu0 %v2051
  %v2070 = vpop.f32.mrf.mxu0
  %v2071 = vadd.f32 0.0, %v2070
  %2072 = vdwg.mxu0
  %2073 = vmatpush.msra.mxu0 0.0
  %2074 = vmatpush.msra.mxu0 0.0
  %2075 = vmatpush.msra.mxu0 0.0
  %2076 = vmatpush.msra.mxu0 0.0
  %2077 = vmatpush.msra.mxu0 0.0
  %2078 = vmatpush.msra.mxu0 0.0
  %2079 = vmatpush.msra.mxu0 0.0
  %2080 = vmatpush.msra.mxu0 0.0
  %2081 = vmatpush.msra.mxu0 0.0
  %2082 = vmatpush.msra.mxu0 0.0
  %2083 = vmatpush.msra.mxu0 0.0
  %2084 = vmatpush.msra.mxu0 0.0
  %2085 = vmatpush.msra.mxu0 0.0
  %2086 = vmatpush.msra.mxu0 0.0
  %2087 = vmatpush.msra.mxu0 0.0
  %2088 = vmatpush.msra.mxu0 %v1428
  %2089 = vmatmul.f32.gmra.mxu0 %v2051
  %v2090 = vpop.f32.mrf.mxu0
  %v2091 = vadd.f32 0.0, %v2090
  %2092 = vdwg.mxu0
  %2093 = vmatpush.msra.mxu0 0.0
  %2094 = vmatpush.msra.mxu0 0.0
  %2095 = vmatpush.msra.mxu0 0.0
  %2096 = vmatpush.msra.mxu0 0.0
  %2097 = vmatpush.msra.mxu0 0.0
  %2098 = vmatpush.msra.mxu0 0.0
  %2099 = vmatpush.msra.mxu0 0.0
  %2100 = vmatpush.msra.mxu0 0.0
  %2101 = vmatpush.msra.mxu0 0.0
  %2102 = vmatpush.msra.mxu0 0.0
  %2103 = vmatpush.msra.mxu0 0.0
  %2104 = vmatpush.msra.mxu0 0.0
  %2105 = vmatpush.msra.mxu0 0.0
  %2106 = vmatpush.msra.mxu0 0.0
  %2107 = vmatpush.msra.mxu0 0.0
  %2108 = vmatpush.msra.mxu0 %v1429
  %2109 = vmatmul.f32.gmra.mxu0 %v2051
  %v2110 = vpop.f32.mrf.mxu0
  %v2111 = vadd.f32 0.0, %v2110
  %2112 = vdwg.mxu0
  %2113 = vmatpush.msra.mxu0 0.0
  %2114 = vmatpush.msra.mxu0 0.0
  %2115 = vmatpush.msra.mxu0 0.0
  %2116 = vmatpush.msra.mxu0 0.0
  %2117 = vmatpush.msra.mxu0 0.0
  %2118 = vmatpush.msra.mxu0 0.0
  %2119 = vmatpush.msra.mxu0 0.0
  %2120 = vmatpush.msra.mxu0 0.0
  %2121 = vmatpush.msra.mxu0 0.0
  %2122 = vmatpush.msra.mxu0 0.0
  %2123 = vmatpush.msra.mxu0 0.0
  %2124 = vmatpush.msra.mxu0 0.0
  %2125 = vmatpush.msra.mxu0 0.0
  %2126 = vmatpush.msra.mxu0 0.0
  %2127 = vmatpush.msra.mxu0 0.0
  %2128 = vmatpush.msra.mxu0 %v1430
  %2129 = vmatmul.f32.gmra.mxu0 %v2051
  %v2130 = vpop.f32.mrf.mxu0
  %v2131 = vadd.f32 0.0, %v2130
  %2132 = vdwg.mxu0
  %2133 = vst [vmem:[#allocation5] sm:$0xff] %v1987
  %2134 = vst [vmem:[#allocation5 + $0x8] sm:$0xff] %v2007
  %2135 = vst [vmem:[#allocation5 + $0x10] sm:$0xff] %v2027
  %2136 = vst [vmem:[#allocation5 + $0x18] sm:$0xff] %v2047
  %2137 = vst [vmem:[#allocation5 + $0x20] sm:$0xff] %v2071
  %2138 = vst [vmem:[#allocation5 + $0x28] sm:$0xff] %v2091
  %2139 = vst [vmem:[#allocation5 + $0x30] sm:$0xff] %v2111
  %2140 = vst [vmem:[#allocation5 + $0x38] sm:$0xff] %v2131
  %v2141 = vld [vmem:[#allocation5] sm:$0xff]
  %v2142 = vld [vmem:[#allocation5 + $0x8] sm:$0xff]
  %v2143 = vld [vmem:[#allocation5 + $0x10] sm:$0xff]
  %v2144 = vld [vmem:[#allocation5 + $0x18] sm:$0xff]
  %v2145 = vld [vmem:[#allocation5 + $0x20] sm:$0xff]
  %v2146 = vld [vmem:[#allocation5 + $0x28] sm:$0xff]
  %v2147 = vld [vmem:[#allocation5 + $0x30] sm:$0xff]
  %v2148 = vld [vmem:[#allocation5 + $0x38] sm:$0xff]
  %v2149 = vld [vmem:[%s15] sm:$0xff]
  %v2150 = vld [vmem:[%s15 + $0x8] sm:$0xff]
  %v2151 = vld [vmem:[%s15 + $0x10] sm:$0xff]
  %v2152 = vld [vmem:[%s15 + $0x18] sm:$0xff]
  %v2153 = vld [vmem:[%s15 + $0x20] sm:$0xff]
  %v2154 = vld [vmem:[%s15 + $0x28] sm:$0xff]
  %v2155 = vld [vmem:[%s15 + $0x30] sm:$0xff]
  %v2156 = vld [vmem:[%s15 + $0x38] sm:$0xff]
  %v2157 = vld [vmem:[%s15 + $0x40] sm:$0xff]
  %v2158 = vld [vmem:[%s15 + $0x48] sm:$0xff]
  %v2159 = vld [vmem:[%s15 + $0x50] sm:$0xff]
  %v2160 = vld [vmem:[%s15 + $0x58] sm:$0xff]
  %v2161 = vld [vmem:[%s15 + $0x60] sm:$0xff]
  %v2162 = vld [vmem:[%s15 + $0x68] sm:$0xff]
  %v2163 = vld [vmem:[%s15 + $0x70] sm:$0xff]
  %v2164 = vld [vmem:[%s15 + $0x78] sm:$0xff]
  %v2165 = vld [vmem:[%s15 + $0x80] sm:$0xff]
  %v2166 = vld [vmem:[%s15 + $0x88] sm:$0xff]
  %v2167 = vld [vmem:[%s15 + $0x90] sm:$0xff]
  %v2168 = vld [vmem:[%s15 + $0x98] sm:$0xff]
  %v2169 = vld [vmem:[%s15 + $0xa0] sm:$0xff]
  %v2170 = vld [vmem:[%s15 + $0xa8] sm:$0xff]
  %v2171 = vld [vmem:[%s15 + $0xb0] sm:$0xff]
  %v2172 = vld [vmem:[%s15 + $0xb8] sm:$0xff]
  %v2173 = vld [vmem:[%s15 + $0xc0] sm:$0xff]
  %v2174 = vld [vmem:[%s15 + $0xc8] sm:$0xff]
  %v2175 = vld [vmem:[%s15 + $0xd0] sm:$0xff]
  %v2176 = vld [vmem:[%s15 + $0xd8] sm:$0xff]
  %v2177 = vld [vmem:[%s15 + $0xe0] sm:$0xff]
  %v2178 = vld [vmem:[%s15 + $0xe8] sm:$0xff]
  %v2179 = vld [vmem:[%s15 + $0xf0] sm:$0xff]
  %v2180 = vld [vmem:[%s15 + $0xf8] sm:$0xff]
  %v2181 = vld [vmem:[%s15 + $0x100] sm:$0xff]
  %v2182 = vld [vmem:[%s15 + $0x108] sm:$0xff]
  %v2183 = vld [vmem:[%s15 + $0x110] sm:$0xff]
  %v2184 = vld [vmem:[%s15 + $0x118] sm:$0xff]
  %v2185 = vld [vmem:[%s15 + $0x120] sm:$0xff]
  %v2186 = vld [vmem:[%s15 + $0x128] sm:$0xff]
  %v2187 = vld [vmem:[%s15 + $0x130] sm:$0xff]
  %v2188 = vld [vmem:[%s15 + $0x138] sm:$0xff]
  %v2189 = vld [vmem:[%s15 + $0x140] sm:$0xff]
  %v2190 = vld [vmem:[%s15 + $0x148] sm:$0xff]
  %v2191 = vld [vmem:[%s15 + $0x150] sm:$0xff]
  %v2192 = vld [vmem:[%s15 + $0x158] sm:$0xff]
  %v2193 = vld [vmem:[%s15 + $0x160] sm:$0xff]
  %v2194 = vld [vmem:[%s15 + $0x168] sm:$0xff]
  %v2195 = vld [vmem:[%s15 + $0x170] sm:$0xff]
  %v2196 = vld [vmem:[%s15 + $0x178] sm:$0xff]
  %v2197 = vld [vmem:[%s15 + $0x180] sm:$0xff]
  %v2198 = vld [vmem:[%s15 + $0x188] sm:$0xff]
  %v2199 = vld [vmem:[%s15 + $0x190] sm:$0xff]
  %v2200 = vld [vmem:[%s15 + $0x198] sm:$0xff]
  %v2201 = vld [vmem:[%s15 + $0x1a0] sm:$0xff]
  %v2202 = vld [vmem:[%s15 + $0x1a8] sm:$0xff]
  %v2203 = vld [vmem:[%s15 + $0x1b0] sm:$0xff]
  %v2204 = vld [vmem:[%s15 + $0x1b8] sm:$0xff]
  %v2205 = vld [vmem:[%s15 + $0x1c0] sm:$0xff]
  %v2206 = vld [vmem:[%s15 + $0x1c8] sm:$0xff]
  %v2207 = vld [vmem:[%s15 + $0x1d0] sm:$0xff]
  %v2208 = vld [vmem:[%s15 + $0x1d8] sm:$0xff]
  %v2209 = vld [vmem:[%s15 + $0x1e0] sm:$0xff]
  %v2210 = vld [vmem:[%s15 + $0x1e8] sm:$0xff]
  %v2211 = vld [vmem:[%s15 + $0x1f0] sm:$0xff]
  %v2212 = vld [vmem:[%s15 + $0x1f8] sm:$0xff]
  %2213 = vmatpush.msra.mxu0 %v2164
  %2214 = vmatpush.msra.mxu0 %v2163
  %2215 = vmatpush.msra.mxu0 %v2162
  %2216 = vmatpush.msra.mxu0 %v2161
  %2217 = vmatpush.msra.mxu0 %v2160
  %2218 = vmatpush.msra.mxu0 %v2159
  %2219 = vmatpush.msra.mxu0 %v2158
  %2220 = vmatpush.msra.mxu0 %v2157
  %2221 = vmatpush.msra.mxu0 %v2156
  %2222 = vmatpush.msra.mxu0 %v2155
  %2223 = vmatpush.msra.mxu0 %v2154
  %2224 = vmatpush.msra.mxu0 %v2153
  %2225 = vmatpush.msra.mxu0 %v2152
  %2226 = vmatpush.msra.mxu0 %v2151
  %2227 = vmatpush.msra.mxu0 %v2150
  %2228 = vmatpush.msra.mxu0 %v2149
  %2229 = vmatmul.f32.gmra.mxu0 %v2141
  %v2230 = vpop.f32.mrf.mxu0
  %v2231 = vadd.f32 0.0, %v2230
  %2232 = vmatmul.f32.gmra.mxu0 %v2145
  %v2233 = vpop.f32.mrf.mxu0
  %v2234 = vadd.f32 0.0, %v2233
  %2235 = vdwg.mxu0
  %2236 = vmatpush.msra.mxu0 %v2180
  %2237 = vmatpush.msra.mxu0 %v2179
  %2238 = vmatpush.msra.mxu0 %v2178
  %2239 = vmatpush.msra.mxu0 %v2177
  %2240 = vmatpush.msra.mxu0 %v2176
  %2241 = vmatpush.msra.mxu0 %v2175
  %2242 = vmatpush.msra.mxu0 %v2174
  %2243 = vmatpush.msra.mxu0 %v2173
  %2244 = vmatpush.msra.mxu0 %v2172
  %2245 = vmatpush.msra.mxu0 %v2171
  %2246 = vmatpush.msra.mxu0 %v2170
  %2247 = vmatpush.msra.mxu0 %v2169
  %2248 = vmatpush.msra.mxu0 %v2168
  %2249 = vmatpush.msra.mxu0 %v2167
  %2250 = vmatpush.msra.mxu0 %v2166
  %2251 = vmatpush.msra.mxu0 %v2165
  %2252 = vmatmul.f32.gmra.mxu0 %v2142
  %v2253 = vpop.f32.mrf.mxu0
  %v2254 = vadd.f32 %v2231, %v2253
  %2255 = vmatmul.f32.gmra.mxu0 %v2146
  %v2256 = vpop.f32.mrf.mxu0
  %v2257 = vadd.f32 %v2234, %v2256
  %2258 = vdwg.mxu0
  %2259 = vmatpush.msra.mxu0 %v2196
  %2260 = vmatpush.msra.mxu0 %v2195
  %2261 = vmatpush.msra.mxu0 %v2194
  %2262 = vmatpush.msra.mxu0 %v2193
  %2263 = vmatpush.msra.mxu0 %v2192
  %2264 = vmatpush.msra.mxu0 %v2191
  %2265 = vmatpush.msra.mxu0 %v2190
  %2266 = vmatpush.msra.mxu0 %v2189
  %2267 = vmatpush.msra.mxu0 %v2188
  %2268 = vmatpush.msra.mxu0 %v2187
  %2269 = vmatpush.msra.mxu0 %v2186
  %2270 = vmatpush.msra.mxu0 %v2185
  %2271 = vmatpush.msra.mxu0 %v2184
  %2272 = vmatpush.msra.mxu0 %v2183
  %2273 = vmatpush.msra.mxu0 %v2182
  %2274 = vmatpush.msra.mxu0 %v2181
  %2275 = vmatmul.f32.gmra.mxu0 %v2143
  %v2276 = vpop.f32.mrf.mxu0
  %v2277 = vadd.f32 %v2254, %v2276
  %2278 = vmatmul.f32.gmra.mxu0 %v2147
  %v2279 = vpop.f32.mrf.mxu0
  %v2280 = vadd.f32 %v2257, %v2279
  %2281 = vdwg.mxu0
  %2282 = vmatpush.msra.mxu0 %v2212
  %2283 = vmatpush.msra.mxu0 %v2211
  %2284 = vmatpush.msra.mxu0 %v2210
  %2285 = vmatpush.msra.mxu0 %v2209
  %2286 = vmatpush.msra.mxu0 %v2208
  %2287 = vmatpush.msra.mxu0 %v2207
  %2288 = vmatpush.msra.mxu0 %v2206
  %2289 = vmatpush.msra.mxu0 %v2205
  %2290 = vmatpush.msra.mxu0 %v2204
  %2291 = vmatpush.msra.mxu0 %v2203
  %2292 = vmatpush.msra.mxu0 %v2202
  %2293 = vmatpush.msra.mxu0 %v2201
  %2294 = vmatpush.msra.mxu0 %v2200
  %2295 = vmatpush.msra.mxu0 %v2199
  %2296 = vmatpush.msra.mxu0 %v2198
  %2297 = vmatpush.msra.mxu0 %v2197
  %2298 = vmatmul.f32.gmra.mxu0 %v2144
  %v2299 = vpop.f32.mrf.mxu0
  %v2300 = vadd.f32 %v2277, %v2299
  %2301 = vmatmul.f32.gmra.mxu0 %v2148
  %v2302 = vpop.f32.mrf.mxu0
  %v2303 = vadd.f32 %v2280, %v2302
  %2304 = vdwg.mxu0
  %v2305 = vld [vmem:[%s8] sm:$0xff]
  %2307 = vset.pattern.permute.xlu0 0
  %2308 = vperm.xlu0 %2307, %v2305
  %v2309 = vpop.permute.xlu0 %2308
  %v2311 = vadd.f32 %v2300, %v2309
  %v2312 = vmax.f32 %v2311, 0.0
  %v2313 = vld [vmem:[%s12] sm:$0xff]
  %2315 = vset.pattern.permute.xlu0 0
  %2316 = vperm.xlu0 %2315, %v2313
  %v2317 = vpop.permute.xlu0 %2316
  %v2319 = vadd.f32 %v2303, %v2317
  %2320 = vst [vmem:[#allocation2 + $0x8] sm:$0xff] %v2312
  %v2321 = vld [vmem:[#allocation2] sm:$0xff]
  %v2322 = vld [vmem:[#allocation2 + $0x8] sm:$0xff]
  %v2323 = vld [vmem:[%s14] sm:$0x1]
  %v2324 = vperm.slane %v2323, 0
  %2326 = vrot.lane.b32.xlu0 %v2324, 119
  %v2327 = vpop.permute.xlu0 %2326
  %v2329 = vmul.f32 %v2321, %v2327
  %v2330 = vmul.f32 %v2322, %v2327
  %2333 = vrot.lane.b32.xlu0 %v2329, 9
  %v2334 = vpop.permute.xlu0 %2333
  %2335 = vrot.lane.b32.xlu0 %v2330, 9
  %v2336 = vpop.permute.xlu0 %2335
  %vm2337 = vcmask 72704
  %v2338 = vsel %vm2337, %v2334, %v2336
  %2340 = vst [vmem:[#allocation4] sm:$0xff] %v2338
  %v2341 = vld [vmem:[#allocation2] sm:$0xff]
  %v2342 = vld [vmem:[#allocation2 + $0x8] sm:$0xff]
  %v2343 = vld [vmem:[%s14 + $0x1] sm:$0x1]
  %v2344 = vperm.slane %v2343, 0
  %2346 = vrot.lane.b32.xlu0 %v2344, 120
  %v2347 = vpop.permute.xlu0 %2346
  %v2349 = vmul.f32 %v2341, %v2347
  %v2350 = vmul.f32 %v2342, %v2347
  %2353 = vrot.lane.b32.xlu0 %v2349, 8
  %v2354 = vpop.permute.xlu0 %2353
  %2355 = vrot.lane.b32.xlu0 %v2350, 8
  %v2356 = vpop.permute.xlu0 %2355
  %v2357 = vsel %vm1339, %v2354, %v2356
  %2359 = vst [vmem:[#allocation4 + $0x8] sm:$0xff] %v2357
  %v2360 = vld [vmem:[#allocation2] sm:$0xff]
  %v2361 = vld [vmem:[#allocation2 + $0x8] sm:$0xff]
  %v2362 = vld [vmem:[%s14 + $0x2] sm:$0x1]
  %v2363 = vperm.slane %v2362, 0
  %2365 = vrot.lane.b32.xlu0 %v2363, 121
  %v2366 = vpop.permute.xlu0 %2365
  %v2368 = vmul.f32 %v2360, %v2366
  %v2369 = vmul.f32 %v2361, %v2366
  %2372 = vrot.lane.b32.xlu0 %v2368, 7
  %v2373 = vpop.permute.xlu0 %2372
  %2374 = vrot.lane.b32.xlu0 %v2369, 7
  %v2375 = vpop.permute.xlu0 %2374
  %vm2376 = vcmask 56320
  %v2377 = vsel %vm2376, %v2373, %v2375
  %2379 = vst [vmem:[#allocation4 + $0x10] sm:$0xff] %v2377
  %v2380 = vld [vmem:[#allocation2] sm:$0xff]
  %v2381 = vld [vmem:[#allocation2 + $0x8] sm:$0xff]
  %v2382 = vld [vmem:[%s14 + $0x3] sm:$0x1]
  %v2383 = vperm.slane %v2382, 0
  %2385 = vrot.lane.b32.xlu0 %v2383, 127
  %v2386 = vpop.permute.xlu0 %2385
  %v2388 = vmul.f32 %v2380, %v2386
  %v2389 = vmul.f32 %v2381, %v2386
  %2392 = vrot.lane.b32.xlu0 %v2388, 1
  %v2393 = vpop.permute.xlu0 %2392
  %2394 = vrot.lane.b32.xlu0 %v2389, 1
  %v2395 = vpop.permute.xlu0 %2394
  %v2396 = vsel %vm301, %v2393, %v2395
  %2398 = vst [vmem:[#allocation4 + $0x18] sm:$0xff] %v2396
  %v2399 = vld [vmem:[#allocation2 + $0x8] sm:$0xff]
  %v2400 = vld [vmem:[%s14 + $0x4] sm:$0x1]
  %v2401 = vperm.slane %v2400, 0
  %v2402 = vmul.f32 %v2399, %v2401
  %2403 = vst [vmem:[#allocation4 + $0x20] sm:$0xff] %v2402
  %v2404 = vld [vmem:[#allocation2 + $0x8] sm:$0xff]
  %v2405 = vld [vmem:[#allocation2 + $0x10] sm:$0xff]
  %v2406 = vld [vmem:[%s14 + $0x5] sm:$0x1]
  %v2407 = vperm.slane %v2406, 0
  %2409 = vrot.lane.b32.xlu0 %v2407, 1
  %v2410 = vpop.permute.xlu0 %2409
  %v2412 = vmul.f32 %v2404, %v2410
  %v2413 = vmul.f32 %v2405, %v2410
  %2416 = vrot.lane.b32.xlu0 %v2412, 127
  %v2417 = vpop.permute.xlu0 %2416
  %2418 = vrot.lane.b32.xlu0 %v2413, 127
  %v2419 = vpop.permute.xlu0 %2418
  %v2420 = vsel %vm272, %v2417, %v2419
  %2422 = vst [vmem:[#allocation4 + $0x28] sm:$0xff] %v2420
  %v2423 = vld [vmem:[#allocation2 + $0x8] sm:$0xff]
  %v2424 = vld [vmem:[#allocation2 + $0x10] sm:$0xff]
  %v2425 = vld [vmem:[%s14 + $0x6] sm:$0x1]
  %v2426 = vperm.slane %v2425, 0
  %2428 = vrot.lane.b32.xlu0 %v2426, 7
  %v2429 = vpop.permute.xlu0 %2428
  %v2431 = vmul.f32 %v2423, %v2429
  %v2432 = vmul.f32 %v2424, %v2429
  %2435 = vrot.lane.b32.xlu0 %v2431, 121
  %v2436 = vpop.permute.xlu0 %2435
  %2437 = vrot.lane.b32.xlu0 %v2432, 121
  %v2438 = vpop.permute.xlu0 %2437
  %vm2439 = vcmask 990208
  %v2440 = vsel %vm2439, %v2436, %v2438
  %2442 = vst [vmem:[#allocation4 + $0x30] sm:$0xff] %v2440
  %v2443 = vld [vmem:[#allocation2 + $0x8] sm:$0xff]
  %v2444 = vld [vmem:[#allocation2 + $0x10] sm:$0xff]
  %v2445 = vld [vmem:[%s14 + $0x7] sm:$0x1]
  %v2446 = vperm.slane %v2445, 0
  %2448 = vrot.lane.b32.xlu0 %v2446, 8
  %v2449 = vpop.permute.xlu0 %2448
  %v2451 = vmul.f32 %v2443, %v2449
  %v2452 = vmul.f32 %v2444, %v2449
  %2455 = vrot.lane.b32.xlu0 %v2451, 120
  %v2456 = vpop.permute.xlu0 %2455
  %2457 = vrot.lane.b32.xlu0 %v2452, 120
  %v2458 = vpop.permute.xlu0 %2457
  %vm2459 = vcmask 982016
  %v2460 = vsel %vm2459, %v2456, %v2458
  %2462 = vst [vmem:[#allocation4 + $0x38] sm:$0xff] %v2460
  %v2463 = vld [vmem:[#allocation2 + $0x8] sm:$0xff]
  %v2464 = vld [vmem:[#allocation2 + $0x10] sm:$0xff]
  %v2465 = vld [vmem:[%s14 + $0x8] sm:$0x1]
  %v2466 = vperm.slane %v2465, 0
  %2468 = vrot.lane.b32.xlu0 %v2466, 9
  %v2469 = vpop.permute.xlu0 %2468
  %v2471 = vmul.f32 %v2463, %v2469
  %v2472 = vmul.f32 %v2464, %v2469
  %2475 = vrot.lane.b32.xlu0 %v2471, 119
  %v2476 = vpop.permute.xlu0 %2475
  %2477 = vrot.lane.b32.xlu0 %v2472, 119
  %v2478 = vpop.permute.xlu0 %2477
  %vm2479 = vcmask 973824
  %v2480 = vsel %vm2479, %v2476, %v2478
  %2482 = vst [vmem:[#allocation4 + $0x40] sm:$0xff] %v2480
  %v2483 = vld [vmem:[%s9] sm:$0xff]
  %v2484 = vld [vmem:[#allocation4] sm:$0xff]
  %v2485 = vld [vmem:[#allocation4 + $0x8] sm:$0xff]
  %v2486 = vld [vmem:[#allocation4 + $0x10] sm:$0xff]
  %v2487 = vld [vmem:[#allocation4 + $0x18] sm:$0xff]
  %v2488 = vld [vmem:[#allocation4 + $0x20] sm:$0xff]
  %v2489 = vld [vmem:[#allocation4 + $0x28] sm:$0xff]
  %v2490 = vld [vmem:[#allocation4 + $0x30] sm:$0xff]
  %v2491 = vld [vmem:[#allocation4 + $0x38] sm:$0xff]
  %v2492 = vld [vmem:[#allocation4 + $0x40] sm:$0xff]
  %v2493 = vld [vmem:[%s10] sm:$0xff]
  %2495 = vset.pattern.permute.xlu0 0
  %2496 = vperm.xlu0 %2495, %v2493
  %v2497 = vpop.permute.xlu0 %2496
  %v2500 = vsel %vm620, %v2483, 0
  %2502 = vmatpush.msra.mxu0 0.0
  %2503 = vmatpush.msra.mxu0 0.0
  %2504 = vmatpush.msra.mxu0 0.0
  %2505 = vmatpush.msra.mxu0 0.0
  %2506 = vmatpush.msra.mxu0 0.0
  %2507 = vmatpush.msra.mxu0 0.0
  %2508 = vmatpush.msra.mxu0 0.0
  %2509 = vmatpush.msra.mxu0 %v2492
  %2510 = vmatpush.msra.mxu0 %v2491
  %2511 = vmatpush.msra.mxu0 %v2490
  %2512 = vmatpush.msra.mxu0 %v2489
  %2513 = vmatpush.msra.mxu0 %v2488
  %2514 = vmatpush.msra.mxu0 %v2487
  %2515 = vmatpush.msra.mxu0 %v2486
  %2516 = vmatpush.msra.mxu0 %v2485
  %2517 = vmatpush.msra.mxu0 %v2484
  %2518 = vmatmul.f32.gmra.mxu0 %v2500
  %v2519 = vpop.f32.mrf.mxu0
  %v2520 = vadd.f32 %v2497, %v2519
  %2521 = vdwg.mxu0
  %v2522 = vadd.f32 %v2520, %v2319
  %v2523 = vmax.f32 %v2522, 0.0
  %2524 = vst [vmem:[%s16] sm:$0xff] %v2523
  // Predicated region
  $region66: #{down_old_forward.1} parent=0 // pred_check
    _
  $region67: #{down_old_forward.1} parent=0 // pred_check_branch
    %2526 = sbr.rel (0) target = $region69
  $region68: #{down_old_forward.1} parent=0 // pred_region
    _
  $region69: #{down_old_forward.1} parent=0 // pred_fallthru
    _
  // Predicated region
  $region70: #{down_old_forward.1} parent=0 // pred_check
    _
  $region71: #{down_old_forward.1} parent=0 // pred_check_branch
    %2528 = sbr.rel (0) target = $region73
  $region72: #{down_old_forward.1} parent=0 // pred_region
    _
  $region73: #{down_old_forward.1} parent=0 // pred_fallthru
    _

</llo_original>
